<compile_context>
chip_gen: v7x
topology: tpu7x:2x2x1
jax: 0.10.0
libtpu: 0.0.40
codegen_flags: <defaults>
</compile_context>

<pallas_src>
import math

import jax
import jax.numpy as jnp
from jax.experimental import pallas as pl
from jax.experimental.pallas import tpu as pltpu

# ----------------------- model hyper-parameters (small) -----------------------
D_MODEL = 32
NHEAD = 4
DIM_FF = 64
L_TGT = 8      # target sequence length
S_MEM = 16     # memory sequence length
BATCH = 2
LN_EPS = 1e-5
HEAD_DIM = D_MODEL // NHEAD
LANES = 4 * D_MODEL            # packed slab lane width = 128 (one full vreg row)

# Matmul operand dtype.  Kept f32 to match PyTorch f32 numerics at these toy
# shapes (kernel is DMA/overhead bound here).  At production d_model on v6e/v7x
# flip to jnp.bfloat16 AND store the packed weight slab as bf16 — accumulation
# stays f32 via preferred_element_type; LN/softmax/elementwise math stays f32
# (v5e has no bf16 VPU/EUP).
MATMUL_DTYPE = jnp.float32

# ---------------- packed-parameter layout (all weights pre-transposed) --------
# Weight slab (rows x 128 lanes):
_W_SA = 0                      # self-attn  [WqT*scale | WkT | WvT | WoT]  (E rows)
_W_CA = D_MODEL                # cross-attn [WqT*scale | WkT | WvT | WoT]  (E rows)
_W_FF = 2 * D_MODEL            # FFN block (F rows): lanes [0:F)=W1T (E rows used),
                               #                     lanes [F:F+E)=W2T (F rows)
_W_ROWS = 2 * D_MODEL + DIM_FF             # = 128
# Bias slab rows (each row is 128 lanes):
_B_SA = 0                      # [bq*scale | bk | bv | bo]  (self)
_B_CA = 1                      # [bq*scale | bk | bv | bo]  (cross)
_B_LN12 = 2                    # [n1_w | n1_b | n2_w | n2_b]
_B_FF = 3                      # [b1 (F) | b2 (E) | 0]
_B_LN3 = 4                     # [n3_w | n3_b | 0]
_B_ROWS = 8                    # padded to a sublane multiple


# ------------------------------- Pallas kernel --------------------------------
def _decoder_layer_kernel(x_ref, m_ref, w_ref, b_ref, out_ref):
    E, H, Dh, F = D_MODEL, NHEAD, HEAD_DIM, DIM_FF

    x_in = x_ref[...]            # (L, 2E): lanes [0:E)=tgt, [E:2E)=query_pos
    m_in = m_ref[...]            # (S, 2E): lanes [0:E)=memory, [E:2E)=pos
    biases = b_ref[...]          # (_B_ROWS, 128)

    tgt, qpos = x_in[:, 0:E], x_in[:, E:2 * E]
    mem, pos = m_in[:, 0:E], m_in[:, E:2 * E]

    def dot(a, b):
        return jnp.dot(a.astype(MATMUL_DTYPE), b.astype(MATMUL_DTYPE),
                       preferred_element_type=jnp.float32)

    def ln(v, row, off):
        w = biases[row:row + 1, off:off + E]
        b = biases[row:row + 1, off + E:off + 2 * E]
        mu = jnp.mean(v, axis=-1, keepdims=True)
        var = jnp.mean((v - mu) ** 2, axis=-1, keepdims=True)
        return (v - mu) * jax.lax.rsqrt(var + LN_EPS) * w + b

    def attention(qp, kp, vp, wo, bo):
        # qp (Lq, E) is pre-scaled (1/sqrt(Dh) folded into Wq/bq at pack time).
        # Structural batching: scores are the true per-batch (Lq, Lk) matrices,
        # no additive cross-batch mask needed.
        # TODO(synk): at production L/S, switch the static head loop to
        # lax.fori_loop(..., unroll=True) (or a grid axis) to bound live ranges.
        ctx = []
        for h in range(H):
            lo = h * Dh
            s = jax.lax.dot_general(
                qp[:, lo:lo + Dh].astype(MATMUL_DTYPE),
                kp[:, lo:lo + Dh].astype(MATMUL_DTYPE),
                dimension_numbers=(((1,), (1,)), ((), ())),
                preferred_element_type=jnp.float32)                 # (Lq, Lk)
            s = s - jnp.max(s, axis=-1, keepdims=True)
            p = jnp.exp(s)
            # EUP approximate reciprocal (keeps the VALU free); exact softmax
            # parity would use a plain divide — tolerance below covers this.
            p = p * pl.reciprocal(jnp.sum(p, axis=-1, keepdims=True), approx=True)
            ctx.append(dot(p, vp[:, lo:lo + Dh]))                   # (Lq, Dh)
        # Lane-concatenate head contexts and do ONE full-width (K=E) out-proj
        # matmul instead of H accumulating K=Dh matmuls.
        return dot(jnp.concatenate(ctx, axis=-1), wo) + bo

    # --- self-attention block (q = k = tgt + query_pos, v = tgt) ---
    w_sa = w_ref[_W_SA:_W_SA + E, :]                                # (E, 4E)
    b_sa = biases[_B_SA:_B_SA + 1, :]                               # (1, 4E)
    qk_in = tgt + qpos
    qk = dot(qk_in, w_sa[:, 0:2 * E]) + b_sa[:, 0:2 * E]            # fused Q|K proj
    vp = dot(tgt, w_sa[:, 2 * E:3 * E]) + b_sa[:, 2 * E:3 * E]
    t2 = attention(qk[:, 0:E], qk[:, E:2 * E], vp,
                   w_sa[:, 3 * E:4 * E], b_sa[:, 3 * E:4 * E])
    x = ln(tgt + t2, _B_LN12, 0)                                    # norm1

    # --- cross-attention block (q = x + qpos, k = mem + pos, v = mem) ---
    # Q/K/V inputs all differ, so the projections cannot be fused into one dot.
    w_ca = w_ref[_W_CA:_W_CA + E, :]
    b_ca = biases[_B_CA:_B_CA + 1, :]
    qp = dot(x + qpos, w_ca[:, 0:E]) + b_ca[:, 0:E]
    kp = dot(mem + pos, w_ca[:, E:2 * E]) + b_ca[:, E:2 * E]
    vp = dot(mem, w_ca[:, 2 * E:3 * E]) + b_ca[:, 2 * E:3 * E]
    t2 = attention(qp, kp, vp, w_ca[:, 3 * E:4 * E], b_ca[:, 3 * E:4 * E])
    x = ln(x + t2, _B_LN12, 2 * E)                                  # norm2

    # --- feed-forward block (relu) ---
    w_ff = w_ref[_W_FF:_W_FF + F, :]                                # (F, 4E)
    b_ff = biases[_B_FF:_B_FF + 1, :]
    hid = jnp.maximum(dot(x, w_ff[0:E, 0:F]) + b_ff[:, 0:F], 0.0)   # (L, F)
    t2 = dot(hid, w_ff[:, F:F + E]) + b_ff[:, F:F + E]              # (L, E)
    out_ref[...] = ln(x + t2, _B_LN3, 0).astype(out_ref.dtype)      # norm3


# --------------------------- host-side weight packing --------------------------
def pack_params(params):
    """Pre-transpose all weights once and pack them into two 128-lane slabs."""
    E, F, Dh = D_MODEL, DIM_FF, HEAD_DIM
    scale = 1.0 / math.sqrt(Dh)

    def attn_w(in_w, out_w):
        wq, wk, wv = in_w[:E], in_w[E:2 * E], in_w[2 * E:]
        return jnp.concatenate([(wq * scale).T, wk.T, wv.T, out_w.T], axis=1)  # (E, 4E)

    def attn_b(in_b, out_b):
        return jnp.concatenate([in_b[:E] * scale, in_b[E:2 * E], in_b[2 * E:], out_b])

    w1t = params["l1_w"].T                                        # (E, F)
    w2t = params["l2_w"].T                                        # (F, E)
    ff = jnp.concatenate(
        [jnp.concatenate([w1t, jnp.zeros((F - E, F), jnp.float32)], axis=0),  # (F, F)
         w2t,                                                                  # (F, E)
         jnp.zeros((F, LANES - F - E), jnp.float32)], axis=1)                  # (F, 4E)
    w_pack = jnp.concatenate(
        [attn_w(params["sa_in_w"], params["sa_out_w"]),
         attn_w(params["ca_in_w"], params["ca_out_w"]),
         ff], axis=0).astype(jnp.float32)                          # (_W_ROWS, 128)

    zrow = jnp.zeros((LANES,), jnp.float32)
    b_rows = [
        attn_b(params["sa_in_b"], params["sa_out_b"]),
        attn_b(params["ca_in_b"], params["ca_out_b"]),
        jnp.concatenate([params["n1_w"], params["n1_b"], params["n2_w"], params["n2_b"]]),
        jnp.concatenate([params["l1_b"], params["l2_b"],
                         jnp.zeros((LANES - F - E,), jnp.float32)]),
        jnp.concatenate([params["n3_w"], params["n3_b"],
                         jnp.zeros((LANES - 2 * E,), jnp.float32)]),
    ] + [zrow] * (_B_ROWS - 5)
    b_pack = jnp.stack(b_rows, axis=0).astype(jnp.float32)          # (_B_ROWS, 128)
    return w_pack, b_pack


# ------------------------------- wrapper ---------------------------------------
@jax.jit
def transformer_decoder_layer(tgt, memory, query_pos, pos, w_pack, b_pack):
    """tgt/query_pos: (L, N, E); memory/pos: (S, N, E).  Returns (L, N, E)."""
    L, N, E = tgt.shape
    S = memory.shape[0]
    H, Dh, F = NHEAD, HEAD_DIM, DIM_FF

    # Batch-major, lane-concatenated activation slabs: 2 activation DMAs with
    # 64-lane-wide rows instead of 4 DMAs of 32-lane slabs.
    x_nb = jnp.concatenate([tgt, query_pos], axis=-1).transpose(1, 0, 2)   # (N, L, 2E)
    m_nb = jnp.concatenate([memory, pos], axis=-1).transpose(1, 0, 2)      # (N, S, 2E)

    # Advisory cost estimate so XLA schedules this tiny, overhead-dominated call.
    macs = (L * E * 2 * E + L * E * E + L * E * E          # self QK / V / out-proj
            + H * 2 * L * L * Dh                            # self scores + ctx
            + L * E * E + 2 * S * E * E + L * E * E         # cross q / k / v / out
            + H * 2 * L * S * Dh                            # cross scores + ctx
            + 2 * L * E * F)                                 # FFN
    flops = 2 * N * macs
    transcendentals = N * (H * L * (L + S) + 3 * L)          # exp + rsqrt
    bytes_accessed = 4 * (x_nb.size + m_nb.size + w_pack.size + b_pack.size + N * L * E)

    # Batch on a "parallel" grid axis: structural batching (no cross-batch mask)
    # and a megacore-shardable axis on v7x.  Weights/biases are resident blocks.
    # TODO(synk): at production d_model/seq, tile the L/S row dims with BlockSpecs
    # sized for v7x's 64 MiB VMEM (set vmem_limit_bytes) and flip MATMUL_DTYPE /
    # the packed weight slab to bf16 on v6e/v7x.
    out_nb = pl.pallas_call(
        _decoder_layer_kernel,
        out_shape=jax.ShapeDtypeStruct((N, L, E), jnp.float32),
        grid=(N,),
        in_specs=[
            pl.BlockSpec((None, L, 2 * E), lambda b: (b, 0, 0)),   # tgt|query_pos
            pl.BlockSpec((None, S, 2 * E), lambda b: (b, 0, 0)),   # memory|pos
            pl.BlockSpec((_W_ROWS, LANES), lambda b: (0, 0)),      # packed weights
            pl.BlockSpec((_B_ROWS, LANES), lambda b: (0, 0)),      # packed biases
        ],
        out_specs=pl.BlockSpec((None, L, E), lambda b: (b, 0, 0)),
        compiler_params=pltpu.CompilerParams(
            dimension_semantics=("parallel",)),
        cost_estimate=pl.CostEstimate(flops=flops,
                                      transcendentals=transcendentals,
                                      bytes_accessed=bytes_accessed),
    )(x_nb, m_nb, w_pack, b_pack)

    return out_nb.transpose(1, 0, 2)                                # (L, N, E)


# --------------------------- pure-JAX reference ---------------------------------
def _ref_forward(tgt, memory, query_pos, pos, params):
    E, H = D_MODEL, NHEAD
    Dh = E // H
    scale = 1.0 / math.sqrt(Dh)

    def layernorm(x, w, b):
        mu = jnp.mean(x, axis=-1, keepdims=True)
        var = jnp.mean((x - mu) ** 2, axis=-1, keepdims=True)
        return (x - mu) / jnp.sqrt(var + LN_EPS) * w + b

    def mha(q_in, k_in, v_in, in_w, in_b, out_w, out_b):
        wq, wk, wv = in_w[:E], in_w[E:2 * E], in_w[2 * E:]
        bq, bk, bv = in_b[:E], in_b[E:2 * E], in_b[2 * E:]
        qp = q_in @ wq.T + bq
        kp = k_in @ wk.T + bk
        vp = v_in @ wv.T + bv
        Lq, Lk = qp.shape[0], kp.shape[0]
        qh = qp.reshape(Lq, H, Dh).transpose(1, 0, 2) * scale
        kh = kp.reshape(Lk, H, Dh).transpose(1, 0, 2)
        vh = vp.reshape(Lk, H, Dh).transpose(1, 0, 2)
        s = jnp.einsum("hld,hmd->hlm", qh, kh)
        p = jax.nn.softmax(s, axis=-1)
        o = jnp.einsum("hlm,hmd->hld", p, vh).transpose(1, 0, 2).reshape(Lq, E)
        return o @ out_w.T + out_b

    def single(tgt_i, mem_i, qpos_i, pos_i):
        qk = tgt_i + qpos_i
        t2 = mha(qk, qk, tgt_i, params["sa_in_w"], params["sa_in_b"],
                 params["sa_out_w"], params["sa_out_b"])
        x = layernorm(tgt_i + t2, params["n1_w"], params["n1_b"])
        t2 = mha(x + qpos_i, mem_i + pos_i, mem_i, params["ca_in_w"],
                 params["ca_in_b"], params["ca_out_w"], params["ca_out_b"])
        x = layernorm(x + t2, params["n2_w"], params["n2_b"])
        h = jax.nn.relu(x @ params["l1_w"].T + params["l1_b"])
        t2 = h @ params["l2_w"].T + params["l2_b"]
        return layernorm(x + t2, params["n3_w"], params["n3_b"])

    return jax.vmap(single, in_axes=(1, 1, 1, 1), out_axes=1)(
        tgt, memory, query_pos, pos)


# ------------------------------------ main --------------------------------------
if __name__ == "__main__":
    key = jax.random.PRNGKey(0)
    keys = jax.random.split(key, 16)

    E, F = D_MODEL, DIM_FF
    params = {
        "sa_in_w": 0.05 * jax.random.normal(keys[0], (3 * E, E), jnp.float32),
        "sa_in_b": 0.01 * jax.random.normal(keys[1], (3 * E,), jnp.float32),
        "sa_out_w": 0.05 * jax.random.normal(keys[2], (E, E), jnp.float32),
        "sa_out_b": 0.01 * jax.random.normal(keys[3], (E,), jnp.float32),
        "ca_in_w": 0.05 * jax.random.normal(keys[4], (3 * E, E), jnp.float32),
        "ca_in_b": 0.01 * jax.random.normal(keys[5], (3 * E,), jnp.float32),
        "ca_out_w": 0.05 * jax.random.normal(keys[6], (E, E), jnp.float32),
        "ca_out_b": 0.01 * jax.random.normal(keys[7], (E,), jnp.float32),
        "l1_w": 0.05 * jax.random.normal(keys[8], (F, E), jnp.float32),
        "l1_b": 0.01 * jax.random.normal(keys[9], (F,), jnp.float32),
        "l2_w": 0.05 * jax.random.normal(keys[10], (E, F), jnp.float32),
        "l2_b": 0.01 * jax.random.normal(keys[11], (E,), jnp.float32),
        "n1_w": jnp.ones((E,), jnp.float32),
        "n1_b": jnp.zeros((E,), jnp.float32),
        "n2_w": jnp.ones((E,), jnp.float32),
        "n2_b": jnp.zeros((E,), jnp.float32),
        "n3_w": jnp.ones((E,), jnp.float32),
        "n3_b": jnp.zeros((E,), jnp.float32),
    }

    tgt = jax.random.normal(keys[12], (L_TGT, BATCH, E), jnp.float32)
    memory = jax.random.normal(keys[13], (S_MEM, BATCH, E), jnp.float32)
    query_pos = jax.random.normal(keys[14], (L_TGT, BATCH, E), jnp.float32)
    pos = jax.random.normal(keys[15], (S_MEM, BATCH, E), jnp.float32)

    # One-time host-side packing (pre-transposed weights, q-scale folded in).
    w_pack, b_pack = pack_params(params)
    assert w_pack.shape == (_W_ROWS, LANES) and b_pack.shape == (_B_ROWS, LANES)

    out = transformer_decoder_layer(tgt, memory, query_pos, pos, w_pack, b_pack)
    out = jax.block_until_ready(out)

    ref = _ref_forward(tgt, memory, query_pos, pos, params)
    assert out.shape == (L_TGT, BATCH, E)
    # Tolerance accounts for the EUP approximate reciprocal in the softmax denom.
    assert jnp.allclose(out, ref, rtol=5e-3, atol=5e-3), "mismatch vs JAX reference"

    print("KERNEL_OK")
</pallas_src>

<mosaic_0001>
module attributes {stable_mosaic.version = 11 : i64} {
  func.func @_decoder_layer_kernel(%arg0: i32, %arg1: memref<1x8x64xf32, #tpu.memory_space<vmem>>, %arg2: memref<1x16x64xf32, #tpu.memory_space<vmem>>, %arg3: memref<128x128xf32, #tpu.memory_space<vmem>>, %arg4: memref<8x128xf32, #tpu.memory_space<vmem>>, %arg5: memref<1x8x32xf32, #tpu.memory_space<vmem>>) attributes {dimension_semantics = [#tpu.dimension_semantics<parallel>], iteration_bounds = array<i64: 2>, scalar_prefetch = 0 : i64, scratch_operands = 0 : i64, tpu.core_type = #tpu.core_type<tc>, window_params = [{transform_indices = @transform_0, window_bounds = array<i64: 1, 8, 64>}, {transform_indices = @transform_1, window_bounds = array<i64: 1, 16, 64>}, {pipeline_mode = #tpu.pipeline_mode<synchronous>, transform_indices = @transform_2, window_bounds = array<i64: 128, 128>}, {pipeline_mode = #tpu.pipeline_mode<synchronous>, transform_indices = @transform_3, window_bounds = array<i64: 8, 128>}, {transform_indices = @transform_4, window_bounds = array<i64: 1, 8, 32>}]} {
    %c0 = arith.constant 0 : index
    %c0_0 = arith.constant 0 : index
    %c0_1 = arith.constant 0 : index
    %0 = vector.load %arg1[%c0, %c0_0, %c0_1] : memref<1x8x64xf32, #tpu.memory_space<vmem>>, vector<1x8x64xf32>
    %1 = vector.shape_cast %0 : vector<1x8x64xf32> to vector<8x64xf32>
    %c0_2 = arith.constant 0 : index
    %c0_3 = arith.constant 0 : index
    %c0_4 = arith.constant 0 : index
    %2 = vector.load %arg2[%c0_2, %c0_3, %c0_4] : memref<1x16x64xf32, #tpu.memory_space<vmem>>, vector<1x16x64xf32>
    %3 = vector.shape_cast %2 : vector<1x16x64xf32> to vector<16x64xf32>
    %c0_5 = arith.constant 0 : index
    %c0_6 = arith.constant 0 : index
    %4 = vector.load %arg4[%c0_5, %c0_6] : memref<8x128xf32, #tpu.memory_space<vmem>>, vector<8x128xf32>
    %5 = vector.extract_strided_slice %1 {offsets = [0, 0], sizes = [8, 32], strides = [1, 1]} : vector<8x64xf32> to vector<8x32xf32>
    %6 = vector.extract_strided_slice %1 {offsets = [0, 32], sizes = [8, 32], strides = [1, 1]} : vector<8x64xf32> to vector<8x32xf32>
    %7 = vector.extract_strided_slice %3 {offsets = [0, 0], sizes = [16, 32], strides = [1, 1]} : vector<16x64xf32> to vector<16x32xf32>
    %8 = vector.extract_strided_slice %3 {offsets = [0, 32], sizes = [16, 32], strides = [1, 1]} : vector<16x64xf32> to vector<16x32xf32>
    %c0_7 = arith.constant 0 : index
    %c0_8 = arith.constant 0 : index
    %9 = vector.load %arg3[%c0_7, %c0_8] : memref<128x128xf32, #tpu.memory_space<vmem>>, vector<32x128xf32>
    %10 = vector.extract_strided_slice %4 {offsets = [0, 0], sizes = [1, 128], strides = [1, 1]} : vector<8x128xf32> to vector<1x128xf32>
    %11 = arith.addf %5, %6 : vector<8x32xf32>
    %12 = vector.extract_strided_slice %9 {offsets = [0, 0], sizes = [32, 64], strides = [1, 1]} : vector<32x128xf32> to vector<32x64xf32>
    %cst = arith.constant dense<0.000000e+00> : vector<8x64xf32>
    %13 = tpu.matmul %11, %12, %cst {dimension_numbers = #tpu.dot_dimension_numbers<[1], [0], [0], [1], [0, 0, 1, 1], [], []>} : vector<8x32xf32>, vector<32x64xf32>, vector<8x64xf32> -> vector<8x64xf32>
    %14 = vector.extract_strided_slice %10 {offsets = [0, 0], sizes = [1, 64], strides = [1, 1]} : vector<1x128xf32> to vector<1x64xf32>
    %15 = vector.broadcast %14 : vector<1x64xf32> to vector<8x64xf32>
    %16 = arith.addf %13, %15 : vector<8x64xf32>
    %17 = vector.extract_strided_slice %9 {offsets = [0, 64], sizes = [32, 32], strides = [1, 1]} : vector<32x128xf32> to vector<32x32xf32>
    %cst_9 = arith.constant dense<0.000000e+00> : vector<8x32xf32>
    %18 = tpu.matmul %5, %17, %cst_9 {dimension_numbers = #tpu.dot_dimension_numbers<[1], [0], [0], [1], [0, 0, 1, 1], [], []>} : vector<8x32xf32>, vector<32x32xf32>, vector<8x32xf32> -> vector<8x32xf32>
    %19 = vector.extract_strided_slice %10 {offsets = [0, 64], sizes = [1, 32], strides = [1, 1]} : vector<1x128xf32> to vector<1x32xf32>
    %20 = vector.broadcast %19 : vector<1x32xf32> to vector<8x32xf32>
    %21 = arith.addf %18, %20 : vector<8x32xf32>
    %22 = vector.extract_strided_slice %16 {offsets = [0, 0], sizes = [8, 32], strides = [1, 1]} : vector<8x64xf32> to vector<8x32xf32>
    %23 = vector.extract_strided_slice %16 {offsets = [0, 32], sizes = [8, 32], strides = [1, 1]} : vector<8x64xf32> to vector<8x32xf32>
    %24 = vector.extract_strided_slice %9 {offsets = [0, 96], sizes = [32, 32], strides = [1, 1]} : vector<32x128xf32> to vector<32x32xf32>
    %25 = vector.extract_strided_slice %10 {offsets = [0, 96], sizes = [1, 32], strides = [1, 1]} : vector<1x128xf32> to vector<1x32xf32>
    %26 = vector.extract_strided_slice %22 {offsets = [0, 0], sizes = [8, 8], strides = [1, 1]} : vector<8x32xf32> to vector<8x8xf32>
    %27 = vector.extract_strided_slice %23 {offsets = [0, 0], sizes = [8, 8], strides = [1, 1]} : vector<8x32xf32> to vector<8x8xf32>
    %cst_10 = arith.constant dense<0.000000e+00> : vector<8x8xf32>
    %28 = tpu.matmul %26, %27, %cst_10 {dimension_numbers = #tpu.dot_dimension_numbers<[1], [1], [0], [0], [0, 0, 1, 0], [], []>} : vector<8x8xf32>, vector<8x8xf32>, vector<8x8xf32> -> vector<8x8xf32>
    %cst_11 = arith.constant dense<0xFF800000> : vector<8xf32>
    %29 = vector.multi_reduction <maximumf>, %28, %cst_11 [1] : vector<8x8xf32> to vector<8xf32>
    %30 = vector.shape_cast %29 : vector<8xf32> to vector<8x1xf32>
    %31 = vector.broadcast %30 : vector<8x1xf32> to vector<8x8xf32>
    %32 = arith.subf %28, %31 : vector<8x8xf32>
    %33 = math.exp %32 : vector<8x8xf32>
    %cst_12 = arith.constant dense<0.000000e+00> : vector<8xf32>
    %34 = vector.multi_reduction <add>, %33, %cst_12 [1] : vector<8x8xf32> to vector<8xf32>
    %35 = vector.shape_cast %34 : vector<8xf32> to vector<8x1xf32>
    %36 = tpu.reciprocal %35 {approx = true} : vector<8x1xf32> -> vector<8x1xf32>
    %37 = vector.broadcast %36 : vector<8x1xf32> to vector<8x8xf32>
    %38 = arith.mulf %33, %37 : vector<8x8xf32>
    %39 = vector.extract_strided_slice %21 {offsets = [0, 0], sizes = [8, 8], strides = [1, 1]} : vector<8x32xf32> to vector<8x8xf32>
    %cst_13 = arith.constant dense<0.000000e+00> : vector<8x8xf32>
    %40 = tpu.matmul %38, %39, %cst_13 {dimension_numbers = #tpu.dot_dimension_numbers<[1], [0], [0], [1], [0, 0, 1, 1], [], []>} : vector<8x8xf32>, vector<8x8xf32>, vector<8x8xf32> -> vector<8x8xf32>
    %41 = vector.extract_strided_slice %22 {offsets = [0, 8], sizes = [8, 8], strides = [1, 1]} : vector<8x32xf32> to vector<8x8xf32>
    %42 = vector.extract_strided_slice %23 {offsets = [0, 8], sizes = [8, 8], strides = [1, 1]} : vector<8x32xf32> to vector<8x8xf32>
    %cst_14 = arith.constant dense<0.000000e+00> : vector<8x8xf32>
    %43 = tpu.matmul %41, %42, %cst_14 {dimension_numbers = #tpu.dot_dimension_numbers<[1], [1], [0], [0], [0, 0, 1, 0], [], []>} : vector<8x8xf32>, vector<8x8xf32>, vector<8x8xf32> -> vector<8x8xf32>
    %cst_15 = arith.constant dense<0xFF800000> : vector<8xf32>
    %44 = vector.multi_reduction <maximumf>, %43, %cst_15 [1] : vector<8x8xf32> to vector<8xf32>
    %45 = vector.shape_cast %44 : vector<8xf32> to vector<8x1xf32>
    %46 = vector.broadcast %45 : vector<8x1xf32> to vector<8x8xf32>
    %47 = arith.subf %43, %46 : vector<8x8xf32>
    %48 = math.exp %47 : vector<8x8xf32>
    %cst_16 = arith.constant dense<0.000000e+00> : vector<8xf32>
    %49 = vector.multi_reduction <add>, %48, %cst_16 [1] : vector<8x8xf32> to vector<8xf32>
    %50 = vector.shape_cast %49 : vector<8xf32> to vector<8x1xf32>
    %51 = tpu.reciprocal %50 {approx = true} : vector<8x1xf32> -> vector<8x1xf32>
    %52 = vector.broadcast %51 : vector<8x1xf32> to vector<8x8xf32>
    %53 = arith.mulf %48, %52 : vector<8x8xf32>
    %54 = vector.extract_strided_slice %21 {offsets = [0, 8], sizes = [8, 8], strides = [1, 1]} : vector<8x32xf32> to vector<8x8xf32>
    %cst_17 = arith.constant dense<0.000000e+00> : vector<8x8xf32>
    %55 = tpu.matmul %53, %54, %cst_17 {dimension_numbers = #tpu.dot_dimension_numbers<[1], [0], [0], [1], [0, 0, 1, 1], [], []>} : vector<8x8xf32>, vector<8x8xf32>, vector<8x8xf32> -> vector<8x8xf32>
    %56 = vector.extract_strided_slice %22 {offsets = [0, 16], sizes = [8, 8], strides = [1, 1]} : vector<8x32xf32> to vector<8x8xf32>
    %57 = vector.extract_strided_slice %23 {offsets = [0, 16], sizes = [8, 8], strides = [1, 1]} : vector<8x32xf32> to vector<8x8xf32>
    %cst_18 = arith.constant dense<0.000000e+00> : vector<8x8xf32>
    %58 = tpu.matmul %56, %57, %cst_18 {dimension_numbers = #tpu.dot_dimension_numbers<[1], [1], [0], [0], [0, 0, 1, 0], [], []>} : vector<8x8xf32>, vector<8x8xf32>, vector<8x8xf32> -> vector<8x8xf32>
    %cst_19 = arith.constant dense<0xFF800000> : vector<8xf32>
    %59 = vector.multi_reduction <maximumf>, %58, %cst_19 [1] : vector<8x8xf32> to vector<8xf32>
    %60 = vector.shape_cast %59 : vector<8xf32> to vector<8x1xf32>
    %61 = vector.broadcast %60 : vector<8x1xf32> to vector<8x8xf32>
    %62 = arith.subf %58, %61 : vector<8x8xf32>
    %63 = math.exp %62 : vector<8x8xf32>
    %cst_20 = arith.constant dense<0.000000e+00> : vector<8xf32>
    %64 = vector.multi_reduction <add>, %63, %cst_20 [1] : vector<8x8xf32> to vector<8xf32>
    %65 = vector.shape_cast %64 : vector<8xf32> to vector<8x1xf32>
    %66 = tpu.reciprocal %65 {approx = true} : vector<8x1xf32> -> vector<8x1xf32>
    %67 = vector.broadcast %66 : vector<8x1xf32> to vector<8x8xf32>
    %68 = arith.mulf %63, %67 : vector<8x8xf32>
    %69 = vector.extract_strided_slice %21 {offsets = [0, 16], sizes = [8, 8], strides = [1, 1]} : vector<8x32xf32> to vector<8x8xf32>
    %cst_21 = arith.constant dense<0.000000e+00> : vector<8x8xf32>
    %70 = tpu.matmul %68, %69, %cst_21 {dimension_numbers = #tpu.dot_dimension_numbers<[1], [0], [0], [1], [0, 0, 1, 1], [], []>} : vector<8x8xf32>, vector<8x8xf32>, vector<8x8xf32> -> vector<8x8xf32>
    %71 = vector.extract_strided_slice %22 {offsets = [0, 24], sizes = [8, 8], strides = [1, 1]} : vector<8x32xf32> to vector<8x8xf32>
    %72 = vector.extract_strided_slice %23 {offsets = [0, 24], sizes = [8, 8], strides = [1, 1]} : vector<8x32xf32> to vector<8x8xf32>
    %cst_22 = arith.constant dense<0.000000e+00> : vector<8x8xf32>
    %73 = tpu.matmul %71, %72, %cst_22 {dimension_numbers = #tpu.dot_dimension_numbers<[1], [1], [0], [0], [0, 0, 1, 0], [], []>} : vector<8x8xf32>, vector<8x8xf32>, vector<8x8xf32> -> vector<8x8xf32>
    %cst_23 = arith.constant dense<0xFF800000> : vector<8xf32>
    %74 = vector.multi_reduction <maximumf>, %73, %cst_23 [1] : vector<8x8xf32> to vector<8xf32>
    %75 = vector.shape_cast %74 : vector<8xf32> to vector<8x1xf32>
    %76 = vector.broadcast %75 : vector<8x1xf32> to vector<8x8xf32>
    %77 = arith.subf %73, %76 : vector<8x8xf32>
    %78 = math.exp %77 : vector<8x8xf32>
    %cst_24 = arith.constant dense<0.000000e+00> : vector<8xf32>
    %79 = vector.multi_reduction <add>, %78, %cst_24 [1] : vector<8x8xf32> to vector<8xf32>
    %80 = vector.shape_cast %79 : vector<8xf32> to vector<8x1xf32>
    %81 = tpu.reciprocal %80 {approx = true} : vector<8x1xf32> -> vector<8x1xf32>
    %82 = vector.broadcast %81 : vector<8x1xf32> to vector<8x8xf32>
    %83 = arith.mulf %78, %82 : vector<8x8xf32>
    %84 = vector.extract_strided_slice %21 {offsets = [0, 24], sizes = [8, 8], strides = [1, 1]} : vector<8x32xf32> to vector<8x8xf32>
    %cst_25 = arith.constant dense<0.000000e+00> : vector<8x8xf32>
    %85 = tpu.matmul %83, %84, %cst_25 {dimension_numbers = #tpu.dot_dimension_numbers<[1], [0], [0], [1], [0, 0, 1, 1], [], []>} : vector<8x8xf32>, vector<8x8xf32>, vector<8x8xf32> -> vector<8x8xf32>
    %86 = tpu.concatenate %40, %55, %70, %85 in 1 : vector<8x8xf32>, vector<8x8xf32>, vector<8x8xf32>, vector<8x8xf32> -> vector<8x32xf32>
    %cst_26 = arith.constant dense<0.000000e+00> : vector<8x32xf32>
    %87 = tpu.matmul %86, %24, %cst_26 {dimension_numbers = #tpu.dot_dimension_numbers<[1], [0], [0], [1], [0, 0, 1, 1], [], []>} : vector<8x32xf32>, vector<32x32xf32>, vector<8x32xf32> -> vector<8x32xf32>
    %88 = vector.broadcast %25 : vector<1x32xf32> to vector<8x32xf32>
    %89 = arith.addf %87, %88 : vector<8x32xf32>
    %90 = arith.addf %5, %89 : vector<8x32xf32>
    %91 = vector.extract_strided_slice %4 {offsets = [2, 0], sizes = [1, 32], strides = [1, 1]} : vector<8x128xf32> to vector<1x32xf32>
    %92 = vector.extract_strided_slice %4 {offsets = [2, 32], sizes = [1, 32], strides = [1, 1]} : vector<8x128xf32> to vector<1x32xf32>
    %cst_27 = arith.constant dense<0.000000e+00> : vector<8xf32>
    %93 = vector.multi_reduction <add>, %90, %cst_27 [1] : vector<8x32xf32> to vector<8xf32>
    %94 = vector.shape_cast %93 : vector<8xf32> to vector<8x1xf32>
    %cst_28 = arith.constant 3.200000e+01 : f32
    %95 = vector.broadcast %cst_28 : f32 to vector<8x1xf32>
    %96 = arith.divf %94, %95 : vector<8x1xf32>
    %97 = vector.broadcast %96 : vector<8x1xf32> to vector<8x32xf32>
    %98 = arith.subf %90, %97 : vector<8x32xf32>
    %99 = arith.mulf %98, %98 : vector<8x32xf32>
    %cst_29 = arith.constant dense<0.000000e+00> : vector<8xf32>
    %100 = vector.multi_reduction <add>, %99, %cst_29 [1] : vector<8x32xf32> to vector<8xf32>
    %101 = vector.shape_cast %100 : vector<8xf32> to vector<8x1xf32>
    %cst_30 = arith.constant 3.200000e+01 : f32
    %102 = vector.broadcast %cst_30 : f32 to vector<8x1xf32>
    %103 = arith.divf %101, %102 : vector<8x1xf32>
    %104 = vector.broadcast %96 : vector<8x1xf32> to vector<8x32xf32>
    %105 = arith.subf %90, %104 : vector<8x32xf32>
    %cst_31 = arith.constant 9.99999974E-6 : f32
    %106 = vector.broadcast %cst_31 : f32 to vector<8x1xf32>
    %107 = arith.addf %103, %106 : vector<8x1xf32>
    %108 = math.rsqrt %107 : vector<8x1xf32>
    %109 = vector.broadcast %108 : vector<8x1xf32> to vector<8x32xf32>
    %110 = arith.mulf %105, %109 : vector<8x32xf32>
    %111 = vector.broadcast %91 : vector<1x32xf32> to vector<8x32xf32>
    %112 = arith.mulf %110, %111 : vector<8x32xf32>
    %113 = vector.broadcast %92 : vector<1x32xf32> to vector<8x32xf32>
    %114 = arith.addf %112, %113 : vector<8x32xf32>
    %c32 = arith.constant 32 : index
    %c0_32 = arith.constant 0 : index
    %115 = vector.load %arg3[%c32, %c0_32] : memref<128x128xf32, #tpu.memory_space<vmem>>, vector<32x128xf32>
    %116 = vector.extract_strided_slice %4 {offsets = [1, 0], sizes = [1, 128], strides = [1, 1]} : vector<8x128xf32> to vector<1x128xf32>
    %117 = arith.addf %114, %6 : vector<8x32xf32>
    %118 = vector.extract_strided_slice %115 {offsets = [0, 0], sizes = [32, 32], strides = [1, 1]} : vector<32x128xf32> to vector<32x32xf32>
    %cst_33 = arith.constant dense<0.000000e+00> : vector<8x32xf32>
    %119 = tpu.matmul %117, %118, %cst_33 {dimension_numbers = #tpu.dot_dimension_numbers<[1], [0], [0], [1], [0, 0, 1, 1], [], []>} : vector<8x32xf32>, vector<32x32xf32>, vector<8x32xf32> -> vector<8x32xf32>
    %120 = vector.extract_strided_slice %116 {offsets = [0, 0], sizes = [1, 32], strides = [1, 1]} : vector<1x128xf32> to vector<1x32xf32>
    %121 = vector.broadcast %120 : vector<1x32xf32> to vector<8x32xf32>
    %122 = arith.addf %119, %121 : vector<8x32xf32>
    %123 = arith.addf %7, %8 : vector<16x32xf32>
    %124 = vector.extract_strided_slice %115 {offsets = [0, 32], sizes = [32, 32], strides = [1, 1]} : vector<32x128xf32> to vector<32x32xf32>
    %cst_34 = arith.constant dense<0.000000e+00> : vector<16x32xf32>
    %125 = tpu.matmul %123, %124, %cst_34 {dimension_numbers = #tpu.dot_dimension_numbers<[1], [0], [0], [1], [0, 0, 1, 1], [], []>} : vector<16x32xf32>, vector<32x32xf32>, vector<16x32xf32> -> vector<16x32xf32>
    %126 = vector.extract_strided_slice %116 {offsets = [0, 32], sizes = [1, 32], strides = [1, 1]} : vector<1x128xf32> to vector<1x32xf32>
    %127 = vector.broadcast %126 : vector<1x32xf32> to vector<16x32xf32>
    %128 = arith.addf %125, %127 : vector<16x32xf32>
    %129 = vector.extract_strided_slice %115 {offsets = [0, 64], sizes = [32, 32], strides = [1, 1]} : vector<32x128xf32> to vector<32x32xf32>
    %cst_35 = arith.constant dense<0.000000e+00> : vector<16x32xf32>
    %130 = tpu.matmul %7, %129, %cst_35 {dimension_numbers = #tpu.dot_dimension_numbers<[1], [0], [0], [1], [0, 0, 1, 1], [], []>} : vector<16x32xf32>, vector<32x32xf32>, vector<16x32xf32> -> vector<16x32xf32>
    %131 = vector.extract_strided_slice %116 {offsets = [0, 64], sizes = [1, 32], strides = [1, 1]} : vector<1x128xf32> to vector<1x32xf32>
    %132 = vector.broadcast %131 : vector<1x32xf32> to vector<16x32xf32>
    %133 = arith.addf %130, %132 : vector<16x32xf32>
    %134 = vector.extract_strided_slice %115 {offsets = [0, 96], sizes = [32, 32], strides = [1, 1]} : vector<32x128xf32> to vector<32x32xf32>
    %135 = vector.extract_strided_slice %116 {offsets = [0, 96], sizes = [1, 32], strides = [1, 1]} : vector<1x128xf32> to vector<1x32xf32>
    %136 = vector.extract_strided_slice %122 {offsets = [0, 0], sizes = [8, 8], strides = [1, 1]} : vector<8x32xf32> to vector<8x8xf32>
    %137 = vector.extract_strided_slice %128 {offsets = [0, 0], sizes = [16, 8], strides = [1, 1]} : vector<16x32xf32> to vector<16x8xf32>
    %cst_36 = arith.constant dense<0.000000e+00> : vector<8x16xf32>
    %138 = tpu.matmul %136, %137, %cst_36 {dimension_numbers = #tpu.dot_dimension_numbers<[1], [1], [0], [0], [0, 0, 1, 0], [], []>} : vector<8x8xf32>, vector<16x8xf32>, vector<8x16xf32> -> vector<8x16xf32>
    %cst_37 = arith.constant dense<0xFF800000> : vector<8xf32>
    %139 = vector.multi_reduction <maximumf>, %138, %cst_37 [1] : vector<8x16xf32> to vector<8xf32>
    %140 = vector.shape_cast %139 : vector<8xf32> to vector<8x1xf32>
    %141 = vector.broadcast %140 : vector<8x1xf32> to vector<8x16xf32>
    %142 = arith.subf %138, %141 : vector<8x16xf32>
    %143 = math.exp %142 : vector<8x16xf32>
    %cst_38 = arith.constant dense<0.000000e+00> : vector<8xf32>
    %144 = vector.multi_reduction <add>, %143, %cst_38 [1] : vector<8x16xf32> to vector<8xf32>
    %145 = vector.shape_cast %144 : vector<8xf32> to vector<8x1xf32>
    %146 = tpu.reciprocal %145 {approx = true} : vector<8x1xf32> -> vector<8x1xf32>
    %147 = vector.broadcast %146 : vector<8x1xf32> to vector<8x16xf32>
    %148 = arith.mulf %143, %147 : vector<8x16xf32>
    %149 = vector.extract_strided_slice %133 {offsets = [0, 0], sizes = [16, 8], strides = [1, 1]} : vector<16x32xf32> to vector<16x8xf32>
    %cst_39 = arith.constant dense<0.000000e+00> : vector<8x8xf32>
    %150 = tpu.matmul %148, %149, %cst_39 {dimension_numbers = #tpu.dot_dimension_numbers<[1], [0], [0], [1], [0, 0, 1, 1], [], []>} : vector<8x16xf32>, vector<16x8xf32>, vector<8x8xf32> -> vector<8x8xf32>
    %151 = vector.extract_strided_slice %122 {offsets = [0, 8], sizes = [8, 8], strides = [1, 1]} : vector<8x32xf32> to vector<8x8xf32>
    %152 = vector.extract_strided_slice %128 {offsets = [0, 8], sizes = [16, 8], strides = [1, 1]} : vector<16x32xf32> to vector<16x8xf32>
    %cst_40 = arith.constant dense<0.000000e+00> : vector<8x16xf32>
    %153 = tpu.matmul %151, %152, %cst_40 {dimension_numbers = #tpu.dot_dimension_numbers<[1], [1], [0], [0], [0, 0, 1, 0], [], []>} : vector<8x8xf32>, vector<16x8xf32>, vector<8x16xf32> -> vector<8x16xf32>
    %cst_41 = arith.constant dense<0xFF800000> : vector<8xf32>
    %154 = vector.multi_reduction <maximumf>, %153, %cst_41 [1] : vector<8x16xf32> to vector<8xf32>
    %155 = vector.shape_cast %154 : vector<8xf32> to vector<8x1xf32>
    %156 = vector.broadcast %155 : vector<8x1xf32> to vector<8x16xf32>
    %157 = arith.subf %153, %156 : vector<8x16xf32>
    %158 = math.exp %157 : vector<8x16xf32>
    %cst_42 = arith.constant dense<0.000000e+00> : vector<8xf32>
    %159 = vector.multi_reduction <add>, %158, %cst_42 [1] : vector<8x16xf32> to vector<8xf32>
    %160 = vector.shape_cast %159 : vector<8xf32> to vector<8x1xf32>
    %161 = tpu.reciprocal %160 {approx = true} : vector<8x1xf32> -> vector<8x1xf32>
    %162 = vector.broadcast %161 : vector<8x1xf32> to vector<8x16xf32>
    %163 = arith.mulf %158, %162 : vector<8x16xf32>
    %164 = vector.extract_strided_slice %133 {offsets = [0, 8], sizes = [16, 8], strides = [1, 1]} : vector<16x32xf32> to vector<16x8xf32>
    %cst_43 = arith.constant dense<0.000000e+00> : vector<8x8xf32>
    %165 = tpu.matmul %163, %164, %cst_43 {dimension_numbers = #tpu.dot_dimension_numbers<[1], [0], [0], [1], [0, 0, 1, 1], [], []>} : vector<8x16xf32>, vector<16x8xf32>, vector<8x8xf32> -> vector<8x8xf32>
    %166 = vector.extract_strided_slice %122 {offsets = [0, 16], sizes = [8, 8], strides = [1, 1]} : vector<8x32xf32> to vector<8x8xf32>
    %167 = vector.extract_strided_slice %128 {offsets = [0, 16], sizes = [16, 8], strides = [1, 1]} : vector<16x32xf32> to vector<16x8xf32>
    %cst_44 = arith.constant dense<0.000000e+00> : vector<8x16xf32>
    %168 = tpu.matmul %166, %167, %cst_44 {dimension_numbers = #tpu.dot_dimension_numbers<[1], [1], [0], [0], [0, 0, 1, 0], [], []>} : vector<8x8xf32>, vector<16x8xf32>, vector<8x16xf32> -> vector<8x16xf32>
    %cst_45 = arith.constant dense<0xFF800000> : vector<8xf32>
    %169 = vector.multi_reduction <maximumf>, %168, %cst_45 [1] : vector<8x16xf32> to vector<8xf32>
    %170 = vector.shape_cast %169 : vector<8xf32> to vector<8x1xf32>
    %171 = vector.broadcast %170 : vector<8x1xf32> to vector<8x16xf32>
    %172 = arith.subf %168, %171 : vector<8x16xf32>
    %173 = math.exp %172 : vector<8x16xf32>
    %cst_46 = arith.constant dense<0.000000e+00> : vector<8xf32>
    %174 = vector.multi_reduction <add>, %173, %cst_46 [1] : vector<8x16xf32> to vector<8xf32>
    %175 = vector.shape_cast %174 : vector<8xf32> to vector<8x1xf32>
    %176 = tpu.reciprocal %175 {approx = true} : vector<8x1xf32> -> vector<8x1xf32>
    %177 = vector.broadcast %176 : vector<8x1xf32> to vector<8x16xf32>
    %178 = arith.mulf %173, %177 : vector<8x16xf32>
    %179 = vector.extract_strided_slice %133 {offsets = [0, 16], sizes = [16, 8], strides = [1, 1]} : vector<16x32xf32> to vector<16x8xf32>
    %cst_47 = arith.constant dense<0.000000e+00> : vector<8x8xf32>
    %180 = tpu.matmul %178, %179, %cst_47 {dimension_numbers = #tpu.dot_dimension_numbers<[1], [0], [0], [1], [0, 0, 1, 1], [], []>} : vector<8x16xf32>, vector<16x8xf32>, vector<8x8xf32> -> vector<8x8xf32>
    %181 = vector.extract_strided_slice %122 {offsets = [0, 24], sizes = [8, 8], strides = [1, 1]} : vector<8x32xf32> to vector<8x8xf32>
    %182 = vector.extract_strided_slice %128 {offsets = [0, 24], sizes = [16, 8], strides = [1, 1]} : vector<16x32xf32> to vector<16x8xf32>
    %cst_48 = arith.constant dense<0.000000e+00> : vector<8x16xf32>
    %183 = tpu.matmul %181, %182, %cst_48 {dimension_numbers = #tpu.dot_dimension_numbers<[1], [1], [0], [0], [0, 0, 1, 0], [], []>} : vector<8x8xf32>, vector<16x8xf32>, vector<8x16xf32> -> vector<8x16xf32>
    %cst_49 = arith.constant dense<0xFF800000> : vector<8xf32>
    %184 = vector.multi_reduction <maximumf>, %183, %cst_49 [1] : vector<8x16xf32> to vector<8xf32>
    %185 = vector.shape_cast %184 : vector<8xf32> to vector<8x1xf32>
    %186 = vector.broadcast %185 : vector<8x1xf32> to vector<8x16xf32>
    %187 = arith.subf %183, %186 : vector<8x16xf32>
    %188 = math.exp %187 : vector<8x16xf32>
    %cst_50 = arith.constant dense<0.000000e+00> : vector<8xf32>
    %189 = vector.multi_reduction <add>, %188, %cst_50 [1] : vector<8x16xf32> to vector<8xf32>
    %190 = vector.shape_cast %189 : vector<8xf32> to vector<8x1xf32>
    %191 = tpu.reciprocal %190 {approx = true} : vector<8x1xf32> -> vector<8x1xf32>
    %192 = vector.broadcast %191 : vector<8x1xf32> to vector<8x16xf32>
    %193 = arith.mulf %188, %192 : vector<8x16xf32>
    %194 = vector.extract_strided_slice %133 {offsets = [0, 24], sizes = [16, 8], strides = [1, 1]} : vector<16x32xf32> to vector<16x8xf32>
    %cst_51 = arith.constant dense<0.000000e+00> : vector<8x8xf32>
    %195 = tpu.matmul %193, %194, %cst_51 {dimension_numbers = #tpu.dot_dimension_numbers<[1], [0], [0], [1], [0, 0, 1, 1], [], []>} : vector<8x16xf32>, vector<16x8xf32>, vector<8x8xf32> -> vector<8x8xf32>
    %196 = tpu.concatenate %150, %165, %180, %195 in 1 : vector<8x8xf32>, vector<8x8xf32>, vector<8x8xf32>, vector<8x8xf32> -> vector<8x32xf32>
    %cst_52 = arith.constant dense<0.000000e+00> : vector<8x32xf32>
    %197 = tpu.matmul %196, %134, %cst_52 {dimension_numbers = #tpu.dot_dimension_numbers<[1], [0], [0], [1], [0, 0, 1, 1], [], []>} : vector<8x32xf32>, vector<32x32xf32>, vector<8x32xf32> -> vector<8x32xf32>
    %198 = vector.broadcast %135 : vector<1x32xf32> to vector<8x32xf32>
    %199 = arith.addf %197, %198 : vector<8x32xf32>
    %200 = arith.addf %114, %199 : vector<8x32xf32>
    %201 = vector.extract_strided_slice %4 {offsets = [2, 64], sizes = [1, 32], strides = [1, 1]} : vector<8x128xf32> to vector<1x32xf32>
    %202 = vector.extract_strided_slice %4 {offsets = [2, 96], sizes = [1, 32], strides = [1, 1]} : vector<8x128xf32> to vector<1x32xf32>
    %cst_53 = arith.constant dense<0.000000e+00> : vector<8xf32>
    %203 = vector.multi_reduction <add>, %200, %cst_53 [1] : vector<8x32xf32> to vector<8xf32>
    %204 = vector.shape_cast %203 : vector<8xf32> to vector<8x1xf32>
    %cst_54 = arith.constant 3.200000e+01 : f32
    %205 = vector.broadcast %cst_54 : f32 to vector<8x1xf32>
    %206 = arith.divf %204, %205 : vector<8x1xf32>
    %207 = vector.broadcast %206 : vector<8x1xf32> to vector<8x32xf32>
    %208 = arith.subf %200, %207 : vector<8x32xf32>
    %209 = arith.mulf %208, %208 : vector<8x32xf32>
    %cst_55 = arith.constant dense<0.000000e+00> : vector<8xf32>
    %210 = vector.multi_reduction <add>, %209, %cst_55 [1] : vector<8x32xf32> to vector<8xf32>
    %211 = vector.shape_cast %210 : vector<8xf32> to vector<8x1xf32>
    %cst_56 = arith.constant 3.200000e+01 : f32
    %212 = vector.broadcast %cst_56 : f32 to vector<8x1xf32>
    %213 = arith.divf %211, %212 : vector<8x1xf32>
    %214 = vector.broadcast %206 : vector<8x1xf32> to vector<8x32xf32>
    %215 = arith.subf %200, %214 : vector<8x32xf32>
    %cst_57 = arith.constant 9.99999974E-6 : f32
    %216 = vector.broadcast %cst_57 : f32 to vector<8x1xf32>
    %217 = arith.addf %213, %216 : vector<8x1xf32>
    %218 = math.rsqrt %217 : vector<8x1xf32>
    %219 = vector.broadcast %218 : vector<8x1xf32> to vector<8x32xf32>
    %220 = arith.mulf %215, %219 : vector<8x32xf32>
    %221 = vector.broadcast %201 : vector<1x32xf32> to vector<8x32xf32>
    %222 = arith.mulf %220, %221 : vector<8x32xf32>
    %223 = vector.broadcast %202 : vector<1x32xf32> to vector<8x32xf32>
    %224 = arith.addf %222, %223 : vector<8x32xf32>
    %c64 = arith.constant 64 : index
    %c0_58 = arith.constant 0 : index
    %225 = vector.load %arg3[%c64, %c0_58] : memref<128x128xf32, #tpu.memory_space<vmem>>, vector<64x128xf32>
    %226 = vector.extract_strided_slice %4 {offsets = [3, 0], sizes = [1, 128], strides = [1, 1]} : vector<8x128xf32> to vector<1x128xf32>
    %227 = vector.extract_strided_slice %225 {offsets = [0, 0], sizes = [32, 64], strides = [1, 1]} : vector<64x128xf32> to vector<32x64xf32>
    %cst_59 = arith.constant dense<0.000000e+00> : vector<8x64xf32>
    %228 = tpu.matmul %224, %227, %cst_59 {dimension_numbers = #tpu.dot_dimension_numbers<[1], [0], [0], [1], [0, 0, 1, 1], [], []>} : vector<8x32xf32>, vector<32x64xf32>, vector<8x64xf32> -> vector<8x64xf32>
    %229 = vector.extract_strided_slice %226 {offsets = [0, 0], sizes = [1, 64], strides = [1, 1]} : vector<1x128xf32> to vector<1x64xf32>
    %230 = vector.broadcast %229 : vector<1x64xf32> to vector<8x64xf32>
    %231 = arith.addf %228, %230 : vector<8x64xf32>
    %cst_60 = arith.constant 0.000000e+00 : f32
    %232 = vector.broadcast %cst_60 : f32 to vector<8x64xf32>
    %233 = arith.maximumf %231, %232 : vector<8x64xf32>
    %234 = vector.extract_strided_slice %225 {offsets = [0, 64], sizes = [64, 32], strides = [1, 1]} : vector<64x128xf32> to vector<64x32xf32>
    %cst_61 = arith.constant dense<0.000000e+00> : vector<8x32xf32>
    %235 = tpu.matmul %233, %234, %cst_61 {dimension_numbers = #tpu.dot_dimension_numbers<[1], [0], [0], [1], [0, 0, 1, 1], [], []>} : vector<8x64xf32>, vector<64x32xf32>, vector<8x32xf32> -> vector<8x32xf32>
    %236 = vector.extract_strided_slice %226 {offsets = [0, 64], sizes = [1, 32], strides = [1, 1]} : vector<1x128xf32> to vector<1x32xf32>
    %237 = vector.broadcast %236 : vector<1x32xf32> to vector<8x32xf32>
    %238 = arith.addf %235, %237 : vector<8x32xf32>
    %239 = arith.addf %224, %238 : vector<8x32xf32>
    %240 = vector.extract_strided_slice %4 {offsets = [4, 0], sizes = [1, 32], strides = [1, 1]} : vector<8x128xf32> to vector<1x32xf32>
    %241 = vector.extract_strided_slice %4 {offsets = [4, 32], sizes = [1, 32], strides = [1, 1]} : vector<8x128xf32> to vector<1x32xf32>
    %cst_62 = arith.constant dense<0.000000e+00> : vector<8xf32>
    %242 = vector.multi_reduction <add>, %239, %cst_62 [1] : vector<8x32xf32> to vector<8xf32>
    %243 = vector.shape_cast %242 : vector<8xf32> to vector<8x1xf32>
    %cst_63 = arith.constant 3.200000e+01 : f32
    %244 = vector.broadcast %cst_63 : f32 to vector<8x1xf32>
    %245 = arith.divf %243, %244 : vector<8x1xf32>
    %246 = vector.broadcast %245 : vector<8x1xf32> to vector<8x32xf32>
    %247 = arith.subf %239, %246 : vector<8x32xf32>
    %248 = arith.mulf %247, %247 : vector<8x32xf32>
    %cst_64 = arith.constant dense<0.000000e+00> : vector<8xf32>
    %249 = vector.multi_reduction <add>, %248, %cst_64 [1] : vector<8x32xf32> to vector<8xf32>
    %250 = vector.shape_cast %249 : vector<8xf32> to vector<8x1xf32>
    %cst_65 = arith.constant 3.200000e+01 : f32
    %251 = vector.broadcast %cst_65 : f32 to vector<8x1xf32>
    %252 = arith.divf %250, %251 : vector<8x1xf32>
    %253 = vector.broadcast %245 : vector<8x1xf32> to vector<8x32xf32>
    %254 = arith.subf %239, %253 : vector<8x32xf32>
    %cst_66 = arith.constant 9.99999974E-6 : f32
    %255 = vector.broadcast %cst_66 : f32 to vector<8x1xf32>
    %256 = arith.addf %252, %255 : vector<8x1xf32>
    %257 = math.rsqrt %256 : vector<8x1xf32>
    %258 = vector.broadcast %257 : vector<8x1xf32> to vector<8x32xf32>
    %259 = arith.mulf %254, %258 : vector<8x32xf32>
    %260 = vector.broadcast %240 : vector<1x32xf32> to vector<8x32xf32>
    %261 = arith.mulf %259, %260 : vector<8x32xf32>
    %262 = vector.broadcast %241 : vector<1x32xf32> to vector<8x32xf32>
    %263 = arith.addf %261, %262 : vector<8x32xf32>
    %c0_67 = arith.constant 0 : index
    %c0_68 = arith.constant 0 : index
    %c0_69 = arith.constant 0 : index
    %264 = vector.load %arg5[%c0_67, %c0_68, %c0_69] : memref<1x8x32xf32, #tpu.memory_space<vmem>>, vector<1x8x32xf32>
    %265 = vector.shape_cast %264 : vector<1x8x32xf32> to vector<8x32xf32>
    %266 = vector.shape_cast %263 : vector<8x32xf32> to vector<1x8x32xf32>
    tpu.vector_store %arg5[%c0_67, %c0_68, %c0_69], %266 {strides = array<i32>} : memref<1x8x32xf32, #tpu.memory_space<vmem>>, vector<1x8x32xf32>,
    return
  }
  func.func @transform_0(%arg0: i32) -> (i32, i32, i32) {
    %c0_i32 = arith.constant 0 : i32
    %c0_i32_0 = arith.constant 0 : i32
    %c0_i32_1 = arith.constant 0 : i32
    return %arg0, %c0_i32, %c0_i32_0 : i32, i32, i32
  }
  func.func @transform_1(%arg0: i32) -> (i32, i32, i32) {
    %c0_i32 = arith.constant 0 : i32
    %c0_i32_0 = arith.constant 0 : i32
    %c0_i32_1 = arith.constant 0 : i32
    return %arg0, %c0_i32, %c0_i32_0 : i32, i32, i32
  }
  func.func @transform_2(%arg0: i32) -> (i32, i32) {
    %c0_i32 = arith.constant 0 : i32
    %c0_i32_0 = arith.constant 0 : i32
    %c0_i32_1 = arith.constant 0 : i32
    return %c0_i32, %c0_i32_0 : i32, i32
  }
  func.func @transform_3(%arg0: i32) -> (i32, i32) {
    %c0_i32 = arith.constant 0 : i32
    %c0_i32_0 = arith.constant 0 : i32
    %c0_i32_1 = arith.constant 0 : i32
    return %c0_i32, %c0_i32_0 : i32, i32
  }
  func.func @transform_4(%arg0: i32) -> (i32, i32, i32) {
    %c0_i32 = arith.constant 0 : i32
    %c0_i32_0 = arith.constant 0 : i32
    %c0_i32_1 = arith.constant 0 : i32
    return %arg0, %c0_i32, %c0_i32_0 : i32, i32, i32
  }
}

</mosaic_0001>

<llo_original>
// kernel: transformer_decoder_layer.1
$region0: #{transformer_decoder_layer.1}
  #allocation0 [shape = 'u32[]', space=smem, size = 0x4, offset = 0x4, fixed_abs, tag = 'smem constant byte address 0x4 - core index']
  #allocation1 [shape = 'u32[144,128]{1,0:T(1,128)}', space=vmem, size = 0x12000, scoped, tag = 'internal scratch']
  %s0 = inlined_call_operand.vmem [shape: f32[2,8,64], index: 0, kind: input, shape index: {}]
  %s1 = inlined_call_operand.vmem [shape: f32[2,16,64], index: 1, kind: input, shape index: {}]
  %s2 = inlined_call_operand.vmem [shape: f32[128,128], index: 2, kind: input, shape index: {}]
  %s3 = inlined_call_operand.vmem [shape: f32[8,128], index: 3, kind: input, shape index: {}]
  %s4 = inlined_call_operand.vmem [shape: f32[2,8,32], index: 4, kind: output, shape index: {}]
  %s5 = sld [smem:[#allocation0]]
  $region49: #{transformer_decoder_layer.1} parent=0
    _
  %s7 = ssub.s32 1, %s5
  %s8 = scalar_select 0, %s7, %s5
  loop: start=0, step=1, limit=4
  $region2: #{transformer_decoder_layer.1} parent=0 // loop_pre_header
    _
  $region3: #{transformer_decoder_layer.1} parent=0 // loop_header
    %s10 = sphi 0, %s14
    %p11 = scmp.ge.s32.totalorder %s10, 4
    %s20 = sphi 0, %s22
    %s23 = sphi 0, %s20
    %s24 = sphi 0, %s23
    %s40 = sphi 0, %s24
    %s46 = sphi 0, %s48
    %s49 = sphi 0, %s46
    %s50 = sphi 0, %s49
    %s66 = sphi 0, %s50
    %s70 = sphi 0, %s70
    %s72 = sphi 0, %s70
    %s73 = sphi 0, %s72
    %s87 = sphi 0, %s73
    %s91 = sphi 0, %s91
    %s93 = sphi 0, %s91
    %s94 = sphi 0, %s93
    %s108 = sphi 0, %s94
    %s114 = sphi 0, %s116
    %s117 = sphi 0, %s114
    %s118 = sphi 0, %s117
    %s134 = sphi 0, %s118
  $region4: #{transformer_decoder_layer.1} parent=0 // loop_header_branch
    %13 = sbr.rel (%p11) target = $region8
  $region5: #{transformer_decoder_layer.1} parent=0 // loop_body
    %s15 = ssub.s32 %s10, 1
    %s16 = ssub.s32 %s10, 2
    %s17 = sadd.s32 %s10, 1
    %s18 = ssub.s32 %s10, %s17
    %p19 = scmp.eq.s32.totalorder %s18, 0
    %s21 = sadd.s32 %s20, 1
    %s22 = scalar_select %p19, %s20, %s21
    %p25 = pneg %p19
    %p26 = scmp.eq.s32.totalorder %s10, 1
    %p27 = por %p25, %p26
    %p28 = scmp.ne.s32.totalorder %s20, %s23
    %p29 = scmp.eq.s32.totalorder %s10, 0
    %p30 = por %p28, %p29
    %p31 = scmp.ne.s32.totalorder %s20, %s23
    %p32 = scmp.eq.s32.totalorder %s15, 1
    %p33 = por %p31, %p32
    %p34 = scmp.ne.s32.totalorder %s23, %s24
    %p35 = scmp.eq.s32.totalorder %s15, 0
    %p36 = por %p34, %p35
    %p37 = scmp.ne.s32.totalorder %s23, %s24
    %p38 = scmp.eq.s32.totalorder %s16, 1
    %p39 = por %p37, %p38
    %p41 = scmp.ne.s32.totalorder %s24, %s40
    %p42 = scmp.eq.s32.totalorder %s16, 0
    %p43 = por %p41, %p42
    %s44 = ssub.s32 %s10, %s17
    %p45 = scmp.eq.s32.totalorder %s44, 0
    %s47 = sadd.s32 %s46, 1
    %s48 = scalar_select %p45, %s46, %s47
    %p51 = pneg %p45
    %p52 = scmp.eq.s32.totalorder %s10, 1
    %p53 = por %p51, %p52
    %p54 = scmp.ne.s32.totalorder %s46, %s49
    %p55 = scmp.eq.s32.totalorder %s10, 0
    %p56 = por %p54, %p55
    %p57 = scmp.ne.s32.totalorder %s46, %s49
    %p58 = scmp.eq.s32.totalorder %s15, 1
    %p59 = por %p57, %p58
    %p60 = scmp.ne.s32.totalorder %s49, %s50
    %p61 = scmp.eq.s32.totalorder %s15, 0
    %p62 = por %p60, %p61
    %p63 = scmp.ne.s32.totalorder %s49, %s50
    %p64 = scmp.eq.s32.totalorder %s16, 1
    %p65 = por %p63, %p64
    %p67 = scmp.ne.s32.totalorder %s50, %s66
    %p68 = scmp.eq.s32.totalorder %s16, 0
    %p69 = por %p67, %p68
    %s71 = sadd.s32 %s70, 1
    %p74 = scmp.eq.s32.totalorder %s10, 1
    %p75 = scmp.ne.s32.totalorder %s70, %s72
    %p76 = scmp.eq.s32.totalorder %s10, 0
    %p77 = por %p75, %p76
    %p78 = scmp.ne.s32.totalorder %s70, %s72
    %p79 = scmp.eq.s32.totalorder %s15, 1
    %p80 = por %p78, %p79
    %p81 = scmp.ne.s32.totalorder %s72, %s73
    %p82 = scmp.eq.s32.totalorder %s15, 0
    %p83 = por %p81, %p82
    %p84 = scmp.ne.s32.totalorder %s72, %s73
    %p85 = scmp.eq.s32.totalorder %s16, 1
    %p86 = por %p84, %p85
    %p88 = scmp.ne.s32.totalorder %s73, %s87
    %p89 = scmp.eq.s32.totalorder %s16, 0
    %p90 = por %p88, %p89
    %s92 = sadd.s32 %s91, 1
    %p95 = scmp.eq.s32.totalorder %s10, 1
    %p96 = scmp.ne.s32.totalorder %s91, %s93
    %p97 = scmp.eq.s32.totalorder %s10, 0
    %p98 = por %p96, %p97
    %p99 = scmp.ne.s32.totalorder %s91, %s93
    %p100 = scmp.eq.s32.totalorder %s15, 1
    %p101 = por %p99, %p100
    %p102 = scmp.ne.s32.totalorder %s93, %s94
    %p103 = scmp.eq.s32.totalorder %s15, 0
    %p104 = por %p102, %p103
    %p105 = scmp.ne.s32.totalorder %s93, %s94
    %p106 = scmp.eq.s32.totalorder %s16, 1
    %p107 = por %p105, %p106
    %p109 = scmp.ne.s32.totalorder %s94, %s108
    %p110 = scmp.eq.s32.totalorder %s16, 0
    %p111 = por %p109, %p110
    %s112 = ssub.s32 %s10, %s17
    %p113 = scmp.eq.s32.totalorder %s112, 0
    %s115 = sadd.s32 %s114, 1
    %s116 = scalar_select %p113, %s114, %s115
    %p119 = pneg %p113
    %p120 = scmp.eq.s32.totalorder %s10, 1
    %p121 = por %p119, %p120
    %p122 = scmp.ne.s32.totalorder %s114, %s117
    %p123 = scmp.eq.s32.totalorder %s10, 0
    %p124 = por %p122, %p123
    %p125 = scmp.ne.s32.totalorder %s114, %s117
    %p126 = scmp.eq.s32.totalorder %s15, 1
    %p127 = por %p125, %p126
    %p128 = scmp.ne.s32.totalorder %s117, %s118
    %p129 = scmp.eq.s32.totalorder %s15, 0
    %p130 = por %p128, %p129
    %p131 = scmp.ne.s32.totalorder %s117, %s118
    %p132 = scmp.eq.s32.totalorder %s16, 1
    %p133 = por %p131, %p132
    %p135 = scmp.ne.s32.totalorder %s118, %s134
    %p136 = scmp.eq.s32.totalorder %s16, 0
    %p137 = por %p135, %p136
    %p138 = scmp.le.s32.totalorder 1, %s10
    %p139 = scmp.lt.s32.totalorder %s10, 3
    %p140 = pnand %p138, %p139
    %p141 = pneg %p140
    // Predicated region
    $region9: #{transformer_decoder_layer.1} parent=5 // pred_check
      _
    $region10: #{transformer_decoder_layer.1} parent=5 // pred_check_branch
      %143 = sbr.rel (%p140) target = $region12
    $region11: #{transformer_decoder_layer.1} parent=5 // pred_region
      %s144 = ssub.s32 %s10, 1
      // Predicated region
      $region13: #{transformer_decoder_layer.1} parent=11 // pred_check
        %p145 = pneg %p83
      $region14: #{transformer_decoder_layer.1} parent=11 // pred_check_branch
        %147 = sbr.rel (%p145) target = $region16
      $region15: #{transformer_decoder_layer.1} parent=11 // pred_region
        _
      $region16: #{transformer_decoder_layer.1} parent=11 // pred_fallthru
        _
      // Predicated region
      $region17: #{transformer_decoder_layer.1} parent=11 // pred_check
        %p148 = pneg %p104
      $region18: #{transformer_decoder_layer.1} parent=11 // pred_check_branch
        %150 = sbr.rel (%p148) target = $region20
      $region19: #{transformer_decoder_layer.1} parent=11 // pred_region
        _
      $region20: #{transformer_decoder_layer.1} parent=11 // pred_fallthru
        _
    $region12: #{transformer_decoder_layer.1} parent=5 // pred_fallthru
      _
    %p151 = scmp.lt.s32.totalorder %s10, 2
    // Predicated region
    $region21: #{transformer_decoder_layer.1} parent=5 // pred_check
      %p152 = pneg %p151
    $region22: #{transformer_decoder_layer.1} parent=5 // pred_check_branch
      %154 = sbr.rel (%p152) target = $region24
    $region23: #{transformer_decoder_layer.1} parent=5 // pred_region
      // Predicated region
      $region25: #{transformer_decoder_layer.1} parent=23 // pred_check
        %p155 = pneg %p30
      $region26: #{transformer_decoder_layer.1} parent=23 // pred_check_branch
        %157 = sbr.rel (%p155) target = $region28
      $region27: #{transformer_decoder_layer.1} parent=23 // pred_region
        %p158 = scmp.lt.s32.totalorder %s10, 1
        %s159 = scalar_select %p158, %s10, 1
        %s160 = smul.addr %s159, 8
        %s161 = scalar_lea.vmem %s0, %s160
      $region28: #{transformer_decoder_layer.1} parent=23 // pred_fallthru
        _
      // Predicated region
      $region29: #{transformer_decoder_layer.1} parent=23 // pred_check
        %p162 = pneg %p56
      $region30: #{transformer_decoder_layer.1} parent=23 // pred_check_branch
        %164 = sbr.rel (%p162) target = $region32
      $region31: #{transformer_decoder_layer.1} parent=23 // pred_region
        %p165 = scmp.lt.s32.totalorder %s10, 1
        %s166 = scalar_select %p165, %s10, 1
        %s167 = smul.addr %s166, 2
        %s168 = smul.addr %s167, 8
        %s169 = scalar_lea.vmem %s1, %s168
      $region32: #{transformer_decoder_layer.1} parent=23 // pred_fallthru
        _
    $region24: #{transformer_decoder_layer.1} parent=5 // pred_fallthru
      _
    %p170 = scmp.le.s32.totalorder 1, %s10
    %p171 = scmp.lt.s32.totalorder %s10, 3
    %p172 = pnand %p170, %p171
    %p173 = pneg %p172
    // Predicated region
    $region33: #{transformer_decoder_layer.1} parent=5 // pred_check
      _
    $region34: #{transformer_decoder_layer.1} parent=5 // pred_check_branch
      %175 = sbr.rel (%p172) target = $region36
    $region35: #{transformer_decoder_layer.1} parent=5 // pred_region
      %s176 = ssub.s32 %s10, 1
      %p177 = scmp.lt.s32.totalorder %s15, 1
      %s178 = scalar_select %p177, %s15, 1
      %s179 = smul.addr %s178, 8
      %s180 = scalar_lea.vmem %s0, %s179
      %p181 = pneg %p36
      %p182 = pneg %p33
      %p183 = scmp.lt.s32.totalorder %s15, 1
      %s184 = scalar_select %p183, %s15, 1
      %s185 = smul.addr %s184, 2
      %s186 = smul.addr %s185, 8
      %s187 = scalar_lea.vmem %s1, %s186
      %p188 = pneg %p62
      %p189 = pneg %p59
      %p190 = pneg %p83
      %p191 = pneg %p80
      %p192 = pneg %p104
      %p193 = pneg %p101
      %p194 = pneg %p130
      %p195 = pneg %p127
      %p196 = scmp.lt.s32.totalorder %s15, 1
      %s197 = scalar_select %p196, %s15, 1
      %s198 = smul.addr %s197, 8
      %s199 = scalar_lea.vmem %s4, %s198
      %p200 = scmp.lt.s32.totalorder %s15, 1
      %s201 = scalar_select %p200, %s15, 1
      %s202 = smul.addr %s201, 8
      %s203 = scalar_lea.vmem %s0, %s202
      %p204 = scmp.lt.s32.totalorder %s15, 1
      %s205 = scalar_select %p204, %s15, 1
      %s206 = smul.addr %s205, 2
      %s207 = smul.addr %s206, 8
      %s208 = scalar_lea.vmem %s1, %s207
      %p209 = scmp.lt.s32.totalorder %s15, 1
      %s210 = scalar_select %p209, %s15, 1
      %s211 = smul.addr %s210, 8
      %s212 = scalar_lea.vmem %s4, %s211
      %v213 = vld [vmem:[%s203] sm:$0xff]
      %v214 = vld [vmem:[%s208] sm:$0xff]
      %v215 = vld [vmem:[%s208 + $0x8] sm:$0xff]
      %v216 = vld [vmem:[%s3] sm:$0xff]
      %v217 = vld [vmem:[%s2] sm:$0xff]
      %v218 = vld [vmem:[%s2 + $0x8] sm:$0xff]
      %v219 = vld [vmem:[%s2 + $0x10] sm:$0xff]
      %v220 = vld [vmem:[%s2 + $0x18] sm:$0xff]
      %222 = vrot.lane.b32.xlu0 %v213, 96
      %v223 = vpop.permute.xlu0 %222
      %v225 = vadd.f32 %v213, %v223
      %v226 = vlaneseq
      %v227 = vshrl.u32 %v226, 7
      %v228 = vsub.s32 0, %v227
      %v229 = vrot.slane %v216, %v228
      %vm230 = vcmask 261120
      %v232 = vsel %vm230, %v225, 0
      %234 = vmatprep.subr.mxu0 0.0
      %235 = vmatpush1.msra.mxu0 %v217
      %236 = vmatprep.subr.mxu0 0.0
      %237 = vmatpush1.msra.mxu0 %v218
      %238 = vmatprep.subr.mxu0 0.0
      %239 = vmatpush1.msra.mxu0 %v219
      %240 = vmatprep.subr.mxu0 0.0
      %241 = vmatpush1.msra.mxu0 %v220
      %242 = vmatprep.subr.mxu0 0.0
      %243 = vmatpush1.msra.mxu0 0.0
      %244 = vmatprep.subr.mxu0 0.0
      %245 = vmatpush1.msra.mxu0 0.0
      %246 = vmatprep.subr.mxu0 0.0
      %247 = vmatpush1.msra.mxu0 0.0
      %248 = vmatprep.subr.mxu0 0.0
      %249 = vmatpush1.msra.mxu0 0.0
      %250 = vmatprep.subr.mxu0 0.0
      %251 = vmatpush1.msra.mxu0 0.0
      %252 = vmatprep.subr.mxu0 0.0
      %253 = vmatpush1.msra.mxu0 0.0
      %254 = vmatprep.subr.mxu0 0.0
      %255 = vmatpush1.msra.mxu0 0.0
      %256 = vmatprep.subr.mxu0 0.0
      %257 = vmatpush1.msra.mxu0 0.0
      %258 = vmatprep.subr.mxu0 0.0
      %259 = vmatpush1.msra.mxu0 0.0
      %260 = vmatprep.subr.mxu0 0.0
      %261 = vmatpush1.msra.mxu0 0.0
      %262 = vmatprep.subr.mxu0 0.0
      %263 = vmatpush1.msra.mxu0 0.0
      %264 = vmatprep.subr.mxu0 0.0
      %265 = vmatpush1.msra.mxu0 0.0
      %266 = vmatprep.subr.mxu0 0.0
      %267 = vmatpush1.msra.mxu0 0.0
      %268 = vmatprep.subr.mxu0 0.0
      %269 = vmatpush1.msra.mxu0 0.0
      %270 = vmatprep.subr.mxu0 0.0
      %271 = vmatpush1.msra.mxu0 0.0
      %272 = vmatprep.subr.mxu0 0.0
      %273 = vmatpush1.msra.mxu0 0.0
      %274 = vmatprep.subr.mxu0 0.0
      %275 = vmatpush1.msra.mxu0 0.0
      %276 = vmatprep.subr.mxu0 0.0
      %277 = vmatpush1.msra.mxu0 0.0
      %278 = vmatprep.subr.mxu0 0.0
      %279 = vmatpush1.msra.mxu0 0.0
      %280 = vmatprep.subr.mxu0 0.0
      %281 = vmatpush1.msra.mxu0 0.0
      %282 = vmatprep.subr.mxu0 0.0
      %283 = vmatpush1.msra.mxu0 0.0
      %284 = vmatprep.subr.mxu0 0.0
      %285 = vmatpush1.msra.mxu0 0.0
      %286 = vmatprep.subr.mxu0 0.0
      %287 = vmatpush1.msra.mxu0 0.0
      %288 = vmatprep.subr.mxu0 0.0
      %289 = vmatpush1.msra.mxu0 0.0
      %290 = vmatprep.subr.mxu0 0.0
      %291 = vmatpush1.msra.mxu0 0.0
      %292 = vmatprep.subr.mxu0 0.0
      %293 = vmatpush1.msra.mxu0 0.0
      %294 = vmatprep.subr.mxu0 0.0
      %295 = vmatpush1.msra.mxu0 0.0
      %296 = vmatprep.subr.mxu0 0.0
      %297 = vmatpush1.msra.mxu0 0.0
      %298 = vmatprep.mubr.f32.mxu0 0.0
      %299 = vmatmul.mubr.f32.gmra.mrb[0].mxu0 %v232
      %v300 = vpop.f32.mrb[0].mxu0
      %v301 = vadd.f32 %v229, %v300
      %v302 = vpop.f32.mrb[0].mxu0
      %303 = vdwg.mxu0
      %308 = vrot.lane.b32.xlu0 %v217, 64
      %v309 = vpop.permute.xlu0 %308
      %310 = vrot.lane.b32.xlu0 %v218, 64
      %v311 = vpop.permute.xlu0 %310
      %312 = vrot.lane.b32.xlu0 %v219, 64
      %v313 = vpop.permute.xlu0 %312
      %314 = vrot.lane.b32.xlu0 %v220, 64
      %v315 = vpop.permute.xlu0 %314
      %321 = vrot.lane.b32.xlu0 %v229, 64
      %v322 = vpop.permute.xlu0 %321
      %v324 = vsel %vm230, %v213, 0
      %326 = vmatprep.subr.mxu0 0.0
      %327 = vmatpush1.msra.mxu0 %v309
      %328 = vmatprep.subr.mxu0 0.0
      %329 = vmatpush1.msra.mxu0 %v311
      %330 = vmatprep.subr.mxu0 0.0
      %331 = vmatpush1.msra.mxu0 %v313
      %332 = vmatprep.subr.mxu0 0.0
      %333 = vmatpush1.msra.mxu0 %v315
      %334 = vmatprep.subr.mxu0 0.0
      %335 = vmatpush1.msra.mxu0 0.0
      %336 = vmatprep.subr.mxu0 0.0
      %337 = vmatpush1.msra.mxu0 0.0
      %338 = vmatprep.subr.mxu0 0.0
      %339 = vmatpush1.msra.mxu0 0.0
      %340 = vmatprep.subr.mxu0 0.0
      %341 = vmatpush1.msra.mxu0 0.0
      %342 = vmatprep.subr.mxu0 0.0
      %343 = vmatpush1.msra.mxu0 0.0
      %344 = vmatprep.subr.mxu0 0.0
      %345 = vmatpush1.msra.mxu0 0.0
      %346 = vmatprep.subr.mxu0 0.0
      %347 = vmatpush1.msra.mxu0 0.0
      %348 = vmatprep.subr.mxu0 0.0
      %349 = vmatpush1.msra.mxu0 0.0
      %350 = vmatprep.subr.mxu0 0.0
      %351 = vmatpush1.msra.mxu0 0.0
      %352 = vmatprep.subr.mxu0 0.0
      %353 = vmatpush1.msra.mxu0 0.0
      %354 = vmatprep.subr.mxu0 0.0
      %355 = vmatpush1.msra.mxu0 0.0
      %356 = vmatprep.subr.mxu0 0.0
      %357 = vmatpush1.msra.mxu0 0.0
      %358 = vmatprep.subr.mxu0 0.0
      %359 = vmatpush1.msra.mxu0 0.0
      %360 = vmatprep.subr.mxu0 0.0
      %361 = vmatpush1.msra.mxu0 0.0
      %362 = vmatprep.subr.mxu0 0.0
      %363 = vmatpush1.msra.mxu0 0.0
      %364 = vmatprep.subr.mxu0 0.0
      %365 = vmatpush1.msra.mxu0 0.0
      %366 = vmatprep.subr.mxu0 0.0
      %367 = vmatpush1.msra.mxu0 0.0
      %368 = vmatprep.subr.mxu0 0.0
      %369 = vmatpush1.msra.mxu0 0.0
      %370 = vmatprep.subr.mxu0 0.0
      %371 = vmatpush1.msra.mxu0 0.0
      %372 = vmatprep.subr.mxu0 0.0
      %373 = vmatpush1.msra.mxu0 0.0
      %374 = vmatprep.subr.mxu0 0.0
      %375 = vmatpush1.msra.mxu0 0.0
      %376 = vmatprep.subr.mxu0 0.0
      %377 = vmatpush1.msra.mxu0 0.0
      %378 = vmatprep.subr.mxu0 0.0
      %379 = vmatpush1.msra.mxu0 0.0
      %380 = vmatprep.subr.mxu0 0.0
      %381 = vmatpush1.msra.mxu0 0.0
      %382 = vmatprep.subr.mxu0 0.0
      %383 = vmatpush1.msra.mxu0 0.0
      %384 = vmatprep.subr.mxu0 0.0
      %385 = vmatpush1.msra.mxu0 0.0
      %386 = vmatprep.subr.mxu0 0.0
      %387 = vmatpush1.msra.mxu0 0.0
      %388 = vmatprep.subr.mxu0 0.0
      %389 = vmatpush1.msra.mxu0 0.0
      %390 = vmatprep.mubr.f32.mxu0 0.0
      %391 = vmatmul.mubr.f32.gmra.mrb[0].mxu0 %v324
      %v392 = vpop.f32.mrb[0].mxu0
      %v393 = vadd.f32 %v322, %v392
      %v394 = vpop.f32.mrb[0].mxu0
      %395 = vdwg.mxu0
      %397 = vrot.lane.b32.xlu0 %v301, 96
      %v398 = vpop.permute.xlu0 %397
      %vm399 = vcmask 64512
      %v400 = vsel %vm399, %v301, 0
      %v402 = vsel %vm399, %v398, 0
      %404 = vmatprep.subr.mxu0 0.0
      %405 = vmatpush1.xpose.msra.mxu0 %v402
      %406 = vmatprep.subr.mxu0 0.0
      %407 = vmatpush1.xpose.msra.mxu0 0.0
      %408 = vmatprep.subr.mxu0 0.0
      %409 = vmatpush1.xpose.msra.mxu0 0.0
      %410 = vmatprep.subr.mxu0 0.0
      %411 = vmatpush1.xpose.msra.mxu0 0.0
      %412 = vmatprep.subr.mxu0 0.0
      %413 = vmatpush1.xpose.msra.mxu0 0.0
      %414 = vmatprep.subr.mxu0 0.0
      %415 = vmatpush1.xpose.msra.mxu0 0.0
      %416 = vmatprep.subr.mxu0 0.0
      %417 = vmatpush1.xpose.msra.mxu0 0.0
      %418 = vmatprep.subr.mxu0 0.0
      %419 = vmatpush1.xpose.msra.mxu0 0.0
      %420 = vmatprep.subr.mxu0 0.0
      %421 = vmatpush1.xpose.msra.mxu0 0.0
      %422 = vmatprep.subr.mxu0 0.0
      %423 = vmatpush1.xpose.msra.mxu0 0.0
      %424 = vmatprep.subr.mxu0 0.0
      %425 = vmatpush1.xpose.msra.mxu0 0.0
      %426 = vmatprep.subr.mxu0 0.0
      %427 = vmatpush1.xpose.msra.mxu0 0.0
      %428 = vmatprep.subr.mxu0 0.0
      %429 = vmatpush1.xpose.msra.mxu0 0.0
      %430 = vmatprep.subr.mxu0 0.0
      %431 = vmatpush1.xpose.msra.mxu0 0.0
      %432 = vmatprep.subr.mxu0 0.0
      %433 = vmatpush1.xpose.msra.mxu0 0.0
      %434 = vmatprep.subr.mxu0 0.0
      %435 = vmatpush1.xpose.msra.mxu0 0.0
      %436 = vmatprep.subr.mxu0 0.0
      %437 = vmatpush1.xpose.msra.mxu0 0.0
      %438 = vmatprep.subr.mxu0 0.0
      %439 = vmatpush1.xpose.msra.mxu0 0.0
      %440 = vmatprep.subr.mxu0 0.0
      %441 = vmatpush1.xpose.msra.mxu0 0.0
      %442 = vmatprep.subr.mxu0 0.0
      %443 = vmatpush1.xpose.msra.mxu0 0.0
      %444 = vmatprep.subr.mxu0 0.0
      %445 = vmatpush1.xpose.msra.mxu0 0.0
      %446 = vmatprep.subr.mxu0 0.0
      %447 = vmatpush1.xpose.msra.mxu0 0.0
      %448 = vmatprep.subr.mxu0 0.0
      %449 = vmatpush1.xpose.msra.mxu0 0.0
      %450 = vmatprep.subr.mxu0 0.0
      %451 = vmatpush1.xpose.msra.mxu0 0.0
      %452 = vmatprep.subr.mxu0 0.0
      %453 = vmatpush1.xpose.msra.mxu0 0.0
      %454 = vmatprep.subr.mxu0 0.0
      %455 = vmatpush1.xpose.msra.mxu0 0.0
      %456 = vmatprep.subr.mxu0 0.0
      %457 = vmatpush1.xpose.msra.mxu0 0.0
      %458 = vmatprep.subr.mxu0 0.0
      %459 = vmatpush1.xpose.msra.mxu0 0.0
      %460 = vmatprep.subr.mxu0 0.0
      %461 = vmatpush1.xpose.msra.mxu0 0.0
      %462 = vmatprep.subr.mxu0 0.0
      %463 = vmatpush1.xpose.msra.mxu0 0.0
      %464 = vmatprep.subr.mxu0 0.0
      %465 = vmatpush1.xpose.msra.mxu0 0.0
      %466 = vmatprep.subr.mxu0 0.0
      %467 = vmatpush1.xpose.msra.mxu0 0.0
      %468 = vmatprep.mubr.f32.mxu0 0.0
      %469 = vmatmul.mubr.f32.gmra.mrb[0].mxu0 %v400
      %v470 = vpop.f32.mrb[0].mxu0
      %v471 = vadd.f32 0.0, %v470
      %v472 = vpop.f32.mrb[0].mxu0
      %473 = vdwg.mxu0
      %v474 = vsel %vm399, %v471, -inf
      %475 = vmax.xlane.f32.xlu0 %v474
      %v476 = vpop.xlane.xlu0 %475
      %v477 = vsub.f32 %v471, %v476
      %v478 = vmul.f32 %v477, 1.442695
      %v479 = vpow.pop %v478
      %v480 = vsel %vm399, %v479, 0.0
      %481 = vadd.xlane.f32.xlu0 %v480
      %v482 = vpop.xlane.xlu0 %481
      %v483 = vrcp.pop %v482
      %v484 = vmul.f32 %v479, %v483
      %v486 = vsel %vm399, %v484, 0
      %488 = vmatprep.subr.mxu0 0.0
      %489 = vmatpush1.msra.mxu0 %v393
      %490 = vmatprep.subr.mxu0 0.0
      %491 = vmatpush1.msra.mxu0 0.0
      %492 = vmatprep.subr.mxu0 0.0
      %493 = vmatpush1.msra.mxu0 0.0
      %494 = vmatprep.subr.mxu0 0.0
      %495 = vmatpush1.msra.mxu0 0.0
      %496 = vmatprep.subr.mxu0 0.0
      %497 = vmatpush1.msra.mxu0 0.0
      %498 = vmatprep.subr.mxu0 0.0
      %499 = vmatpush1.msra.mxu0 0.0
      %500 = vmatprep.subr.mxu0 0.0
      %501 = vmatpush1.msra.mxu0 0.0
      %502 = vmatprep.subr.mxu0 0.0
      %503 = vmatpush1.msra.mxu0 0.0
      %504 = vmatprep.subr.mxu0 0.0
      %505 = vmatpush1.msra.mxu0 0.0
      %506 = vmatprep.subr.mxu0 0.0
      %507 = vmatpush1.msra.mxu0 0.0
      %508 = vmatprep.subr.mxu0 0.0
      %509 = vmatpush1.msra.mxu0 0.0
      %510 = vmatprep.subr.mxu0 0.0
      %511 = vmatpush1.msra.mxu0 0.0
      %512 = vmatprep.subr.mxu0 0.0
      %513 = vmatpush1.msra.mxu0 0.0
      %514 = vmatprep.subr.mxu0 0.0
      %515 = vmatpush1.msra.mxu0 0.0
      %516 = vmatprep.subr.mxu0 0.0
      %517 = vmatpush1.msra.mxu0 0.0
      %518 = vmatprep.subr.mxu0 0.0
      %519 = vmatpush1.msra.mxu0 0.0
      %520 = vmatprep.subr.mxu0 0.0
      %521 = vmatpush1.msra.mxu0 0.0
      %522 = vmatprep.subr.mxu0 0.0
      %523 = vmatpush1.msra.mxu0 0.0
      %524 = vmatprep.subr.mxu0 0.0
      %525 = vmatpush1.msra.mxu0 0.0
      %526 = vmatprep.subr.mxu0 0.0
      %527 = vmatpush1.msra.mxu0 0.0
      %528 = vmatprep.subr.mxu0 0.0
      %529 = vmatpush1.msra.mxu0 0.0
      %530 = vmatprep.subr.mxu0 0.0
      %531 = vmatpush1.msra.mxu0 0.0
      %532 = vmatprep.subr.mxu0 0.0
      %533 = vmatpush1.msra.mxu0 0.0
      %534 = vmatprep.subr.mxu0 0.0
      %535 = vmatpush1.msra.mxu0 0.0
      %536 = vmatprep.subr.mxu0 0.0
      %537 = vmatpush1.msra.mxu0 0.0
      %538 = vmatprep.subr.mxu0 0.0
      %539 = vmatpush1.msra.mxu0 0.0
      %540 = vmatprep.subr.mxu0 0.0
      %541 = vmatpush1.msra.mxu0 0.0
      %542 = vmatprep.subr.mxu0 0.0
      %543 = vmatpush1.msra.mxu0 0.0
      %544 = vmatprep.subr.mxu0 0.0
      %545 = vmatpush1.msra.mxu0 0.0
      %546 = vmatprep.subr.mxu0 0.0
      %547 = vmatpush1.msra.mxu0 0.0
      %548 = vmatprep.subr.mxu0 0.0
      %549 = vmatpush1.msra.mxu0 0.0
      %550 = vmatprep.subr.mxu0 0.0
      %551 = vmatpush1.msra.mxu0 0.0
      %552 = vmatprep.mubr.f32.mxu0 0.0
      %553 = vmatmul.mubr.f32.gmra.mrb[0].mxu0 %v486
      %v554 = vpop.f32.mrb[0].mxu0
      %v555 = vadd.f32 0.0, %v554
      %v556 = vpop.f32.mrb[0].mxu0
      %557 = vdwg.mxu0
      %558 = vrot.lane.b32.xlu0 %v301, 120
      %v559 = vpop.permute.xlu0 %558
      %560 = vrot.lane.b32.xlu0 %v301, 88
      %v561 = vpop.permute.xlu0 %560
      %v562 = vsel %vm399, %v559, 0
      %v564 = vsel %vm399, %v561, 0
      %566 = vmatprep.subr.mxu0 0.0
      %567 = vmatpush1.xpose.msra.mxu0 %v564
      %568 = vmatprep.subr.mxu0 0.0
      %569 = vmatpush1.xpose.msra.mxu0 0.0
      %570 = vmatprep.subr.mxu0 0.0
      %571 = vmatpush1.xpose.msra.mxu0 0.0
      %572 = vmatprep.subr.mxu0 0.0
      %573 = vmatpush1.xpose.msra.mxu0 0.0
      %574 = vmatprep.subr.mxu0 0.0
      %575 = vmatpush1.xpose.msra.mxu0 0.0
      %576 = vmatprep.subr.mxu0 0.0
      %577 = vmatpush1.xpose.msra.mxu0 0.0
      %578 = vmatprep.subr.mxu0 0.0
      %579 = vmatpush1.xpose.msra.mxu0 0.0
      %580 = vmatprep.subr.mxu0 0.0
      %581 = vmatpush1.xpose.msra.mxu0 0.0
      %582 = vmatprep.subr.mxu0 0.0
      %583 = vmatpush1.xpose.msra.mxu0 0.0
      %584 = vmatprep.subr.mxu0 0.0
      %585 = vmatpush1.xpose.msra.mxu0 0.0
      %586 = vmatprep.subr.mxu0 0.0
      %587 = vmatpush1.xpose.msra.mxu0 0.0
      %588 = vmatprep.subr.mxu0 0.0
      %589 = vmatpush1.xpose.msra.mxu0 0.0
      %590 = vmatprep.subr.mxu0 0.0
      %591 = vmatpush1.xpose.msra.mxu0 0.0
      %592 = vmatprep.subr.mxu0 0.0
      %593 = vmatpush1.xpose.msra.mxu0 0.0
      %594 = vmatprep.subr.mxu0 0.0
      %595 = vmatpush1.xpose.msra.mxu0 0.0
      %596 = vmatprep.subr.mxu0 0.0
      %597 = vmatpush1.xpose.msra.mxu0 0.0
      %598 = vmatprep.subr.mxu0 0.0
      %599 = vmatpush1.xpose.msra.mxu0 0.0
      %600 = vmatprep.subr.mxu0 0.0
      %601 = vmatpush1.xpose.msra.mxu0 0.0
      %602 = vmatprep.subr.mxu0 0.0
      %603 = vmatpush1.xpose.msra.mxu0 0.0
      %604 = vmatprep.subr.mxu0 0.0
      %605 = vmatpush1.xpose.msra.mxu0 0.0
      %606 = vmatprep.subr.mxu0 0.0
      %607 = vmatpush1.xpose.msra.mxu0 0.0
      %608 = vmatprep.subr.mxu0 0.0
      %609 = vmatpush1.xpose.msra.mxu0 0.0
      %610 = vmatprep.subr.mxu0 0.0
      %611 = vmatpush1.xpose.msra.mxu0 0.0
      %612 = vmatprep.subr.mxu0 0.0
      %613 = vmatpush1.xpose.msra.mxu0 0.0
      %614 = vmatprep.subr.mxu0 0.0
      %615 = vmatpush1.xpose.msra.mxu0 0.0
      %616 = vmatprep.subr.mxu0 0.0
      %617 = vmatpush1.xpose.msra.mxu0 0.0
      %618 = vmatprep.subr.mxu0 0.0
      %619 = vmatpush1.xpose.msra.mxu0 0.0
      %620 = vmatprep.subr.mxu0 0.0
      %621 = vmatpush1.xpose.msra.mxu0 0.0
      %622 = vmatprep.subr.mxu0 0.0
      %623 = vmatpush1.xpose.msra.mxu0 0.0
      %624 = vmatprep.subr.mxu0 0.0
      %625 = vmatpush1.xpose.msra.mxu0 0.0
      %626 = vmatprep.subr.mxu0 0.0
      %627 = vmatpush1.xpose.msra.mxu0 0.0
      %628 = vmatprep.subr.mxu0 0.0
      %629 = vmatpush1.xpose.msra.mxu0 0.0
      %630 = vmatprep.mubr.f32.mxu0 0.0
      %631 = vmatmul.mubr.f32.gmra.mrb[0].mxu0 %v562
      %v632 = vpop.f32.mrb[0].mxu0
      %v633 = vadd.f32 0.0, %v632
      %v634 = vpop.f32.mrb[0].mxu0
      %635 = vdwg.mxu0
      %v636 = vsel %vm399, %v633, -inf
      %637 = vmax.xlane.f32.xlu0 %v636
      %v638 = vpop.xlane.xlu0 %637
      %v639 = vsub.f32 %v633, %v638
      %v640 = vmul.f32 %v639, 1.442695
      %v641 = vpow.pop %v640
      %v642 = vsel %vm399, %v641, 0.0
      %643 = vadd.xlane.f32.xlu0 %v642
      %v644 = vpop.xlane.xlu0 %643
      %v645 = vrcp.pop %v644
      %v646 = vmul.f32 %v641, %v645
      %648 = vrot.lane.b32.xlu0 %v393, 120
      %v649 = vpop.permute.xlu0 %648
      %v652 = vsel %vm399, %v646, 0
      %654 = vmatprep.subr.mxu0 0.0
      %655 = vmatpush1.msra.mxu0 %v649
      %656 = vmatprep.subr.mxu0 0.0
      %657 = vmatpush1.msra.mxu0 0.0
      %658 = vmatprep.subr.mxu0 0.0
      %659 = vmatpush1.msra.mxu0 0.0
      %660 = vmatprep.subr.mxu0 0.0
      %661 = vmatpush1.msra.mxu0 0.0
      %662 = vmatprep.subr.mxu0 0.0
      %663 = vmatpush1.msra.mxu0 0.0
      %664 = vmatprep.subr.mxu0 0.0
      %665 = vmatpush1.msra.mxu0 0.0
      %666 = vmatprep.subr.mxu0 0.0
      %667 = vmatpush1.msra.mxu0 0.0
      %668 = vmatprep.subr.mxu0 0.0
      %669 = vmatpush1.msra.mxu0 0.0
      %670 = vmatprep.subr.mxu0 0.0
      %671 = vmatpush1.msra.mxu0 0.0
      %672 = vmatprep.subr.mxu0 0.0
      %673 = vmatpush1.msra.mxu0 0.0
      %674 = vmatprep.subr.mxu0 0.0
      %675 = vmatpush1.msra.mxu0 0.0
      %676 = vmatprep.subr.mxu0 0.0
      %677 = vmatpush1.msra.mxu0 0.0
      %678 = vmatprep.subr.mxu0 0.0
      %679 = vmatpush1.msra.mxu0 0.0
      %680 = vmatprep.subr.mxu0 0.0
      %681 = vmatpush1.msra.mxu0 0.0
      %682 = vmatprep.subr.mxu0 0.0
      %683 = vmatpush1.msra.mxu0 0.0
      %684 = vmatprep.subr.mxu0 0.0
      %685 = vmatpush1.msra.mxu0 0.0
      %686 = vmatprep.subr.mxu0 0.0
      %687 = vmatpush1.msra.mxu0 0.0
      %688 = vmatprep.subr.mxu0 0.0
      %689 = vmatpush1.msra.mxu0 0.0
      %690 = vmatprep.subr.mxu0 0.0
      %691 = vmatpush1.msra.mxu0 0.0
      %692 = vmatprep.subr.mxu0 0.0
      %693 = vmatpush1.msra.mxu0 0.0
      %694 = vmatprep.subr.mxu0 0.0
      %695 = vmatpush1.msra.mxu0 0.0
      %696 = vmatprep.subr.mxu0 0.0
      %697 = vmatpush1.msra.mxu0 0.0
      %698 = vmatprep.subr.mxu0 0.0
      %699 = vmatpush1.msra.mxu0 0.0
      %700 = vmatprep.subr.mxu0 0.0
      %701 = vmatpush1.msra.mxu0 0.0
      %702 = vmatprep.subr.mxu0 0.0
      %703 = vmatpush1.msra.mxu0 0.0
      %704 = vmatprep.subr.mxu0 0.0
      %705 = vmatpush1.msra.mxu0 0.0
      %706 = vmatprep.subr.mxu0 0.0
      %707 = vmatpush1.msra.mxu0 0.0
      %708 = vmatprep.subr.mxu0 0.0
      %709 = vmatpush1.msra.mxu0 0.0
      %710 = vmatprep.subr.mxu0 0.0
      %711 = vmatpush1.msra.mxu0 0.0
      %712 = vmatprep.subr.mxu0 0.0
      %713 = vmatpush1.msra.mxu0 0.0
      %714 = vmatprep.subr.mxu0 0.0
      %715 = vmatpush1.msra.mxu0 0.0
      %716 = vmatprep.subr.mxu0 0.0
      %717 = vmatpush1.msra.mxu0 0.0
      %718 = vmatprep.mubr.f32.mxu0 0.0
      %719 = vmatmul.mubr.f32.gmra.mrb[0].mxu0 %v652
      %v720 = vpop.f32.mrb[0].mxu0
      %v721 = vadd.f32 0.0, %v720
      %v722 = vpop.f32.mrb[0].mxu0
      %723 = vdwg.mxu0
      %724 = vrot.lane.b32.xlu0 %v301, 112
      %v725 = vpop.permute.xlu0 %724
      %726 = vrot.lane.b32.xlu0 %v301, 80
      %v727 = vpop.permute.xlu0 %726
      %v728 = vsel %vm399, %v725, 0
      %v730 = vsel %vm399, %v727, 0
      %732 = vmatprep.subr.mxu0 0.0
      %733 = vmatpush1.xpose.msra.mxu0 %v730
      %734 = vmatprep.subr.mxu0 0.0
      %735 = vmatpush1.xpose.msra.mxu0 0.0
      %736 = vmatprep.subr.mxu0 0.0
      %737 = vmatpush1.xpose.msra.mxu0 0.0
      %738 = vmatprep.subr.mxu0 0.0
      %739 = vmatpush1.xpose.msra.mxu0 0.0
      %740 = vmatprep.subr.mxu0 0.0
      %741 = vmatpush1.xpose.msra.mxu0 0.0
      %742 = vmatprep.subr.mxu0 0.0
      %743 = vmatpush1.xpose.msra.mxu0 0.0
      %744 = vmatprep.subr.mxu0 0.0
      %745 = vmatpush1.xpose.msra.mxu0 0.0
      %746 = vmatprep.subr.mxu0 0.0
      %747 = vmatpush1.xpose.msra.mxu0 0.0
      %748 = vmatprep.subr.mxu0 0.0
      %749 = vmatpush1.xpose.msra.mxu0 0.0
      %750 = vmatprep.subr.mxu0 0.0
      %751 = vmatpush1.xpose.msra.mxu0 0.0
      %752 = vmatprep.subr.mxu0 0.0
      %753 = vmatpush1.xpose.msra.mxu0 0.0
      %754 = vmatprep.subr.mxu0 0.0
      %755 = vmatpush1.xpose.msra.mxu0 0.0
      %756 = vmatprep.subr.mxu0 0.0
      %757 = vmatpush1.xpose.msra.mxu0 0.0
      %758 = vmatprep.subr.mxu0 0.0
      %759 = vmatpush1.xpose.msra.mxu0 0.0
      %760 = vmatprep.subr.mxu0 0.0
      %761 = vmatpush1.xpose.msra.mxu0 0.0
      %762 = vmatprep.subr.mxu0 0.0
      %763 = vmatpush1.xpose.msra.mxu0 0.0
      %764 = vmatprep.subr.mxu0 0.0
      %765 = vmatpush1.xpose.msra.mxu0 0.0
      %766 = vmatprep.subr.mxu0 0.0
      %767 = vmatpush1.xpose.msra.mxu0 0.0
      %768 = vmatprep.subr.mxu0 0.0
      %769 = vmatpush1.xpose.msra.mxu0 0.0
      %770 = vmatprep.subr.mxu0 0.0
      %771 = vmatpush1.xpose.msra.mxu0 0.0
      %772 = vmatprep.subr.mxu0 0.0
      %773 = vmatpush1.xpose.msra.mxu0 0.0
      %774 = vmatprep.subr.mxu0 0.0
      %775 = vmatpush1.xpose.msra.mxu0 0.0
      %776 = vmatprep.subr.mxu0 0.0
      %777 = vmatpush1.xpose.msra.mxu0 0.0
      %778 = vmatprep.subr.mxu0 0.0
      %779 = vmatpush1.xpose.msra.mxu0 0.0
      %780 = vmatprep.subr.mxu0 0.0
      %781 = vmatpush1.xpose.msra.mxu0 0.0
      %782 = vmatprep.subr.mxu0 0.0
      %783 = vmatpush1.xpose.msra.mxu0 0.0
      %784 = vmatprep.subr.mxu0 0.0
      %785 = vmatpush1.xpose.msra.mxu0 0.0
      %786 = vmatprep.subr.mxu0 0.0
      %787 = vmatpush1.xpose.msra.mxu0 0.0
      %788 = vmatprep.subr.mxu0 0.0
      %789 = vmatpush1.xpose.msra.mxu0 0.0
      %790 = vmatprep.subr.mxu0 0.0
      %791 = vmatpush1.xpose.msra.mxu0 0.0
      %792 = vmatprep.subr.mxu0 0.0
      %793 = vmatpush1.xpose.msra.mxu0 0.0
      %794 = vmatprep.subr.mxu0 0.0
      %795 = vmatpush1.xpose.msra.mxu0 0.0
      %796 = vmatprep.mubr.f32.mxu0 0.0
      %797 = vmatmul.mubr.f32.gmra.mrb[0].mxu0 %v728
      %v798 = vpop.f32.mrb[0].mxu0
      %v799 = vadd.f32 0.0, %v798
      %v800 = vpop.f32.mrb[0].mxu0
      %801 = vdwg.mxu0
      %v802 = vsel %vm399, %v799, -inf
      %803 = vmax.xlane.f32.xlu0 %v802
      %v804 = vpop.xlane.xlu0 %803
      %v805 = vsub.f32 %v799, %v804
      %v806 = vmul.f32 %v805, 1.442695
      %v807 = vpow.pop %v806
      %v808 = vsel %vm399, %v807, 0.0
      %809 = vadd.xlane.f32.xlu0 %v808
      %v810 = vpop.xlane.xlu0 %809
      %v811 = vrcp.pop %v810
      %v812 = vmul.f32 %v807, %v811
      %813 = vrot.lane.b32.xlu0 %v393, 112
      %v814 = vpop.permute.xlu0 %813
      %v817 = vsel %vm399, %v812, 0
      %819 = vmatprep.subr.mxu0 0.0
      %820 = vmatpush1.msra.mxu0 %v814
      %821 = vmatprep.subr.mxu0 0.0
      %822 = vmatpush1.msra.mxu0 0.0
      %823 = vmatprep.subr.mxu0 0.0
      %824 = vmatpush1.msra.mxu0 0.0
      %825 = vmatprep.subr.mxu0 0.0
      %826 = vmatpush1.msra.mxu0 0.0
      %827 = vmatprep.subr.mxu0 0.0
      %828 = vmatpush1.msra.mxu0 0.0
      %829 = vmatprep.subr.mxu0 0.0
      %830 = vmatpush1.msra.mxu0 0.0
      %831 = vmatprep.subr.mxu0 0.0
      %832 = vmatpush1.msra.mxu0 0.0
      %833 = vmatprep.subr.mxu0 0.0
      %834 = vmatpush1.msra.mxu0 0.0
      %835 = vmatprep.subr.mxu0 0.0
      %836 = vmatpush1.msra.mxu0 0.0
      %837 = vmatprep.subr.mxu0 0.0
      %838 = vmatpush1.msra.mxu0 0.0
      %839 = vmatprep.subr.mxu0 0.0
      %840 = vmatpush1.msra.mxu0 0.0
      %841 = vmatprep.subr.mxu0 0.0
      %842 = vmatpush1.msra.mxu0 0.0
      %843 = vmatprep.subr.mxu0 0.0
      %844 = vmatpush1.msra.mxu0 0.0
      %845 = vmatprep.subr.mxu0 0.0
      %846 = vmatpush1.msra.mxu0 0.0
      %847 = vmatprep.subr.mxu0 0.0
      %848 = vmatpush1.msra.mxu0 0.0
      %849 = vmatprep.subr.mxu0 0.0
      %850 = vmatpush1.msra.mxu0 0.0
      %851 = vmatprep.subr.mxu0 0.0
      %852 = vmatpush1.msra.mxu0 0.0
      %853 = vmatprep.subr.mxu0 0.0
      %854 = vmatpush1.msra.mxu0 0.0
      %855 = vmatprep.subr.mxu0 0.0
      %856 = vmatpush1.msra.mxu0 0.0
      %857 = vmatprep.subr.mxu0 0.0
      %858 = vmatpush1.msra.mxu0 0.0
      %859 = vmatprep.subr.mxu0 0.0
      %860 = vmatpush1.msra.mxu0 0.0
      %861 = vmatprep.subr.mxu0 0.0
      %862 = vmatpush1.msra.mxu0 0.0
      %863 = vmatprep.subr.mxu0 0.0
      %864 = vmatpush1.msra.mxu0 0.0
      %865 = vmatprep.subr.mxu0 0.0
      %866 = vmatpush1.msra.mxu0 0.0
      %867 = vmatprep.subr.mxu0 0.0
      %868 = vmatpush1.msra.mxu0 0.0
      %869 = vmatprep.subr.mxu0 0.0
      %870 = vmatpush1.msra.mxu0 0.0
      %871 = vmatprep.subr.mxu0 0.0
      %872 = vmatpush1.msra.mxu0 0.0
      %873 = vmatprep.subr.mxu0 0.0
      %874 = vmatpush1.msra.mxu0 0.0
      %875 = vmatprep.subr.mxu0 0.0
      %876 = vmatpush1.msra.mxu0 0.0
      %877 = vmatprep.subr.mxu0 0.0
      %878 = vmatpush1.msra.mxu0 0.0
      %879 = vmatprep.subr.mxu0 0.0
      %880 = vmatpush1.msra.mxu0 0.0
      %881 = vmatprep.subr.mxu0 0.0
      %882 = vmatpush1.msra.mxu0 0.0
      %883 = vmatprep.mubr.f32.mxu0 0.0
      %884 = vmatmul.mubr.f32.gmra.mrb[0].mxu0 %v817
      %v885 = vpop.f32.mrb[0].mxu0
      %v886 = vadd.f32 0.0, %v885
      %v887 = vpop.f32.mrb[0].mxu0
      %888 = vdwg.mxu0
      %889 = vrot.lane.b32.xlu0 %v301, 104
      %v890 = vpop.permute.xlu0 %889
      %891 = vrot.lane.b32.xlu0 %v301, 72
      %v892 = vpop.permute.xlu0 %891
      %v893 = vsel %vm399, %v890, 0
      %v895 = vsel %vm399, %v892, 0
      %897 = vmatprep.subr.mxu0 0.0
      %898 = vmatpush1.xpose.msra.mxu0 %v895
      %899 = vmatprep.subr.mxu0 0.0
      %900 = vmatpush1.xpose.msra.mxu0 0.0
      %901 = vmatprep.subr.mxu0 0.0
      %902 = vmatpush1.xpose.msra.mxu0 0.0
      %903 = vmatprep.subr.mxu0 0.0
      %904 = vmatpush1.xpose.msra.mxu0 0.0
      %905 = vmatprep.subr.mxu0 0.0
      %906 = vmatpush1.xpose.msra.mxu0 0.0
      %907 = vmatprep.subr.mxu0 0.0
      %908 = vmatpush1.xpose.msra.mxu0 0.0
      %909 = vmatprep.subr.mxu0 0.0
      %910 = vmatpush1.xpose.msra.mxu0 0.0
      %911 = vmatprep.subr.mxu0 0.0
      %912 = vmatpush1.xpose.msra.mxu0 0.0
      %913 = vmatprep.subr.mxu0 0.0
      %914 = vmatpush1.xpose.msra.mxu0 0.0
      %915 = vmatprep.subr.mxu0 0.0
      %916 = vmatpush1.xpose.msra.mxu0 0.0
      %917 = vmatprep.subr.mxu0 0.0
      %918 = vmatpush1.xpose.msra.mxu0 0.0
      %919 = vmatprep.subr.mxu0 0.0
      %920 = vmatpush1.xpose.msra.mxu0 0.0
      %921 = vmatprep.subr.mxu0 0.0
      %922 = vmatpush1.xpose.msra.mxu0 0.0
      %923 = vmatprep.subr.mxu0 0.0
      %924 = vmatpush1.xpose.msra.mxu0 0.0
      %925 = vmatprep.subr.mxu0 0.0
      %926 = vmatpush1.xpose.msra.mxu0 0.0
      %927 = vmatprep.subr.mxu0 0.0
      %928 = vmatpush1.xpose.msra.mxu0 0.0
      %929 = vmatprep.subr.mxu0 0.0
      %930 = vmatpush1.xpose.msra.mxu0 0.0
      %931 = vmatprep.subr.mxu0 0.0
      %932 = vmatpush1.xpose.msra.mxu0 0.0
      %933 = vmatprep.subr.mxu0 0.0
      %934 = vmatpush1.xpose.msra.mxu0 0.0
      %935 = vmatprep.subr.mxu0 0.0
      %936 = vmatpush1.xpose.msra.mxu0 0.0
      %937 = vmatprep.subr.mxu0 0.0
      %938 = vmatpush1.xpose.msra.mxu0 0.0
      %939 = vmatprep.subr.mxu0 0.0
      %940 = vmatpush1.xpose.msra.mxu0 0.0
      %941 = vmatprep.subr.mxu0 0.0
      %942 = vmatpush1.xpose.msra.mxu0 0.0
      %943 = vmatprep.subr.mxu0 0.0
      %944 = vmatpush1.xpose.msra.mxu0 0.0
      %945 = vmatprep.subr.mxu0 0.0
      %946 = vmatpush1.xpose.msra.mxu0 0.0
      %947 = vmatprep.subr.mxu0 0.0
      %948 = vmatpush1.xpose.msra.mxu0 0.0
      %949 = vmatprep.subr.mxu0 0.0
      %950 = vmatpush1.xpose.msra.mxu0 0.0
      %951 = vmatprep.subr.mxu0 0.0
      %952 = vmatpush1.xpose.msra.mxu0 0.0
      %953 = vmatprep.subr.mxu0 0.0
      %954 = vmatpush1.xpose.msra.mxu0 0.0
      %955 = vmatprep.subr.mxu0 0.0
      %956 = vmatpush1.xpose.msra.mxu0 0.0
      %957 = vmatprep.subr.mxu0 0.0
      %958 = vmatpush1.xpose.msra.mxu0 0.0
      %959 = vmatprep.subr.mxu0 0.0
      %960 = vmatpush1.xpose.msra.mxu0 0.0
      %961 = vmatprep.mubr.f32.mxu0 0.0
      %962 = vmatmul.mubr.f32.gmra.mrb[0].mxu0 %v893
      %v963 = vpop.f32.mrb[0].mxu0
      %v964 = vadd.f32 0.0, %v963
      %v965 = vpop.f32.mrb[0].mxu0
      %966 = vdwg.mxu0
      %v967 = vsel %vm399, %v964, -inf
      %968 = vmax.xlane.f32.xlu0 %v967
      %v969 = vpop.xlane.xlu0 %968
      %v970 = vsub.f32 %v964, %v969
      %v971 = vmul.f32 %v970, 1.442695
      %v972 = vpow.pop %v971
      %v973 = vsel %vm399, %v972, 0.0
      %974 = vadd.xlane.f32.xlu0 %v973
      %v975 = vpop.xlane.xlu0 %974
      %v976 = vrcp.pop %v975
      %v977 = vmul.f32 %v972, %v976
      %978 = vrot.lane.b32.xlu0 %v393, 104
      %v979 = vpop.permute.xlu0 %978
      %v982 = vsel %vm399, %v977, 0
      %984 = vmatprep.subr.mxu0 0.0
      %985 = vmatpush1.msra.mxu0 %v979
      %986 = vmatprep.subr.mxu0 0.0
      %987 = vmatpush1.msra.mxu0 0.0
      %988 = vmatprep.subr.mxu0 0.0
      %989 = vmatpush1.msra.mxu0 0.0
      %990 = vmatprep.subr.mxu0 0.0
      %991 = vmatpush1.msra.mxu0 0.0
      %992 = vmatprep.subr.mxu0 0.0
      %993 = vmatpush1.msra.mxu0 0.0
      %994 = vmatprep.subr.mxu0 0.0
      %995 = vmatpush1.msra.mxu0 0.0
      %996 = vmatprep.subr.mxu0 0.0
      %997 = vmatpush1.msra.mxu0 0.0
      %998 = vmatprep.subr.mxu0 0.0
      %999 = vmatpush1.msra.mxu0 0.0
      %1000 = vmatprep.subr.mxu0 0.0
      %1001 = vmatpush1.msra.mxu0 0.0
      %1002 = vmatprep.subr.mxu0 0.0
      %1003 = vmatpush1.msra.mxu0 0.0
      %1004 = vmatprep.subr.mxu0 0.0
      %1005 = vmatpush1.msra.mxu0 0.0
      %1006 = vmatprep.subr.mxu0 0.0
      %1007 = vmatpush1.msra.mxu0 0.0
      %1008 = vmatprep.subr.mxu0 0.0
      %1009 = vmatpush1.msra.mxu0 0.0
      %1010 = vmatprep.subr.mxu0 0.0
      %1011 = vmatpush1.msra.mxu0 0.0
      %1012 = vmatprep.subr.mxu0 0.0
      %1013 = vmatpush1.msra.mxu0 0.0
      %1014 = vmatprep.subr.mxu0 0.0
      %1015 = vmatpush1.msra.mxu0 0.0
      %1016 = vmatprep.subr.mxu0 0.0
      %1017 = vmatpush1.msra.mxu0 0.0
      %1018 = vmatprep.subr.mxu0 0.0
      %1019 = vmatpush1.msra.mxu0 0.0
      %1020 = vmatprep.subr.mxu0 0.0
      %1021 = vmatpush1.msra.mxu0 0.0
      %1022 = vmatprep.subr.mxu0 0.0
      %1023 = vmatpush1.msra.mxu0 0.0
      %1024 = vmatprep.subr.mxu0 0.0
      %1025 = vmatpush1.msra.mxu0 0.0
      %1026 = vmatprep.subr.mxu0 0.0
      %1027 = vmatpush1.msra.mxu0 0.0
      %1028 = vmatprep.subr.mxu0 0.0
      %1029 = vmatpush1.msra.mxu0 0.0
      %1030 = vmatprep.subr.mxu0 0.0
      %1031 = vmatpush1.msra.mxu0 0.0
      %1032 = vmatprep.subr.mxu0 0.0
      %1033 = vmatpush1.msra.mxu0 0.0
      %1034 = vmatprep.subr.mxu0 0.0
      %1035 = vmatpush1.msra.mxu0 0.0
      %1036 = vmatprep.subr.mxu0 0.0
      %1037 = vmatpush1.msra.mxu0 0.0
      %1038 = vmatprep.subr.mxu0 0.0
      %1039 = vmatpush1.msra.mxu0 0.0
      %1040 = vmatprep.subr.mxu0 0.0
      %1041 = vmatpush1.msra.mxu0 0.0
      %1042 = vmatprep.subr.mxu0 0.0
      %1043 = vmatpush1.msra.mxu0 0.0
      %1044 = vmatprep.subr.mxu0 0.0
      %1045 = vmatpush1.msra.mxu0 0.0
      %1046 = vmatprep.subr.mxu0 0.0
      %1047 = vmatpush1.msra.mxu0 0.0
      %1048 = vmatprep.mubr.f32.mxu0 0.0
      %1049 = vmatmul.mubr.f32.gmra.mrb[0].mxu0 %v982
      %v1050 = vpop.f32.mrb[0].mxu0
      %v1051 = vadd.f32 0.0, %v1050
      %v1052 = vpop.f32.mrb[0].mxu0
      %1053 = vdwg.mxu0
      %1055 = vrot.lane.b32.xlu0 %v721, 8
      %v1056 = vpop.permute.xlu0 %1055
      %1059 = vrot.lane.b32.xlu0 %v886, 16
      %v1060 = vpop.permute.xlu0 %1059
      %1063 = vrot.lane.b32.xlu0 %v1051, 24
      %v1064 = vpop.permute.xlu0 %1063
      %v1066 = vsel %vm399, %v555, %v1056
      %vm1067 = vcmask 130048
      %v1068 = vsel %vm1067, %v1066, %v1060
      %vm1069 = vcmask 195584
      %v1070 = vsel %vm1069, %v1068, %v1064
      %1071 = vrot.lane.b32.xlu0 %v217, 32
      %v1072 = vpop.permute.xlu0 %1071
      %1073 = vrot.lane.b32.xlu0 %v218, 32
      %v1074 = vpop.permute.xlu0 %1073
      %1075 = vrot.lane.b32.xlu0 %v219, 32
      %v1076 = vpop.permute.xlu0 %1075
      %1077 = vrot.lane.b32.xlu0 %v220, 32
      %v1078 = vpop.permute.xlu0 %1077
      %1083 = vrot.lane.b32.xlu0 %v229, 32
      %v1084 = vpop.permute.xlu0 %1083
      %v1087 = vsel %vm230, %v1070, 0
      %1089 = vmatprep.subr.mxu0 0.0
      %1090 = vmatpush1.msra.mxu0 %v1072
      %1091 = vmatprep.subr.mxu0 0.0
      %1092 = vmatpush1.msra.mxu0 %v1074
      %1093 = vmatprep.subr.mxu0 0.0
      %1094 = vmatpush1.msra.mxu0 %v1076
      %1095 = vmatprep.subr.mxu0 0.0
      %1096 = vmatpush1.msra.mxu0 %v1078
      %1097 = vmatprep.subr.mxu0 0.0
      %1098 = vmatpush1.msra.mxu0 0.0
      %1099 = vmatprep.subr.mxu0 0.0
      %1100 = vmatpush1.msra.mxu0 0.0
      %1101 = vmatprep.subr.mxu0 0.0
      %1102 = vmatpush1.msra.mxu0 0.0
      %1103 = vmatprep.subr.mxu0 0.0
      %1104 = vmatpush1.msra.mxu0 0.0
      %1105 = vmatprep.subr.mxu0 0.0
      %1106 = vmatpush1.msra.mxu0 0.0
      %1107 = vmatprep.subr.mxu0 0.0
      %1108 = vmatpush1.msra.mxu0 0.0
      %1109 = vmatprep.subr.mxu0 0.0
      %1110 = vmatpush1.msra.mxu0 0.0
      %1111 = vmatprep.subr.mxu0 0.0
      %1112 = vmatpush1.msra.mxu0 0.0
      %1113 = vmatprep.subr.mxu0 0.0
      %1114 = vmatpush1.msra.mxu0 0.0
      %1115 = vmatprep.subr.mxu0 0.0
      %1116 = vmatpush1.msra.mxu0 0.0
      %1117 = vmatprep.subr.mxu0 0.0
      %1118 = vmatpush1.msra.mxu0 0.0
      %1119 = vmatprep.subr.mxu0 0.0
      %1120 = vmatpush1.msra.mxu0 0.0
      %1121 = vmatprep.subr.mxu0 0.0
      %1122 = vmatpush1.msra.mxu0 0.0
      %1123 = vmatprep.subr.mxu0 0.0
      %1124 = vmatpush1.msra.mxu0 0.0
      %1125 = vmatprep.subr.mxu0 0.0
      %1126 = vmatpush1.msra.mxu0 0.0
      %1127 = vmatprep.subr.mxu0 0.0
      %1128 = vmatpush1.msra.mxu0 0.0
      %1129 = vmatprep.subr.mxu0 0.0
      %1130 = vmatpush1.msra.mxu0 0.0
      %1131 = vmatprep.subr.mxu0 0.0
      %1132 = vmatpush1.msra.mxu0 0.0
      %1133 = vmatprep.subr.mxu0 0.0
      %1134 = vmatpush1.msra.mxu0 0.0
      %1135 = vmatprep.subr.mxu0 0.0
      %1136 = vmatpush1.msra.mxu0 0.0
      %1137 = vmatprep.subr.mxu0 0.0
      %1138 = vmatpush1.msra.mxu0 0.0
      %1139 = vmatprep.subr.mxu0 0.0
      %1140 = vmatpush1.msra.mxu0 0.0
      %1141 = vmatprep.subr.mxu0 0.0
      %1142 = vmatpush1.msra.mxu0 0.0
      %1143 = vmatprep.subr.mxu0 0.0
      %1144 = vmatpush1.msra.mxu0 0.0
      %1145 = vmatprep.subr.mxu0 0.0
      %1146 = vmatpush1.msra.mxu0 0.0
      %1147 = vmatprep.subr.mxu0 0.0
      %1148 = vmatpush1.msra.mxu0 0.0
      %1149 = vmatprep.subr.mxu0 0.0
      %1150 = vmatpush1.msra.mxu0 0.0
      %1151 = vmatprep.subr.mxu0 0.0
      %1152 = vmatpush1.msra.mxu0 0.0
      %1153 = vmatprep.mubr.f32.mxu0 0.0
      %1154 = vmatmul.mubr.f32.gmra.mrb[0].mxu0 %v1087
      %v1155 = vpop.f32.mrb[0].mxu0
      %v1156 = vadd.f32 %v1084, %v1155
      %v1157 = vpop.f32.mrb[0].mxu0
      %1158 = vdwg.mxu0
      %v1159 = vadd.f32 %v213, %v1156
      %v1160 = vsel %vm230, %v1159, 0.0
      %1161 = vadd.xlane.f32.xlu0 %v1160
      %v1162 = vpop.xlane.xlu0 %1161
      %v1163 = vrcp.pop 32.0
      %v1164 = vmul.f32 %v1162, %v1163
      %v1165 = vsub.f32 %v1159, %v1164
      %v1166 = vmul.f32 %v1165, %v1165
      %v1167 = vsel %vm230, %v1166, 0.0
      %1168 = vadd.xlane.f32.xlu0 %v1167
      %v1169 = vpop.xlane.xlu0 %1168
      %v1170 = vmul.f32 %v1169, %v1163
      %v1171 = vadd.f32 %v1170, 1e-05
      %v1172 = vrsqrt.pop %v1171
      %v1173 = vmul.f32 %v1165, %v1172
      %v1174 = vlaneseq
      %v1175 = vshrl.u32 %v1174, 7
      %v1176 = vsub.s32 2, %v1175
      %v1177 = vrot.slane %v216, %v1176
      %v1178 = vmul.f32 %v1173, %v1177
      %1180 = vrot.lane.b32.xlu0 %v1177, 96
      %v1181 = vpop.permute.xlu0 %1180
      %v1183 = vadd.f32 %v1178, %v1181
      %v1184 = vld [vmem:[%s2 + $0x20] sm:$0xff]
      %v1185 = vld [vmem:[%s2 + $0x28] sm:$0xff]
      %v1186 = vld [vmem:[%s2 + $0x30] sm:$0xff]
      %v1187 = vld [vmem:[%s2 + $0x38] sm:$0xff]
      %v1188 = vadd.f32 %v1183, %v223
      %v1189 = vlaneseq
      %v1190 = vshrl.u32 %v1189, 7
      %v1191 = vsub.s32 1, %v1190
      %v1192 = vrot.slane %v216, %v1191
      %v1194 = vsel %vm230, %v1188, 0
      %1196 = vmatprep.subr.mxu0 0.0
      %1197 = vmatpush1.msra.mxu0 %v1184
      %1198 = vmatprep.subr.mxu0 0.0
      %1199 = vmatpush1.msra.mxu0 %v1185
      %1200 = vmatprep.subr.mxu0 0.0
      %1201 = vmatpush1.msra.mxu0 %v1186
      %1202 = vmatprep.subr.mxu0 0.0
      %1203 = vmatpush1.msra.mxu0 %v1187
      %1204 = vmatprep.subr.mxu0 0.0
      %1205 = vmatpush1.msra.mxu0 0.0
      %1206 = vmatprep.subr.mxu0 0.0
      %1207 = vmatpush1.msra.mxu0 0.0
      %1208 = vmatprep.subr.mxu0 0.0
      %1209 = vmatpush1.msra.mxu0 0.0
      %1210 = vmatprep.subr.mxu0 0.0
      %1211 = vmatpush1.msra.mxu0 0.0
      %1212 = vmatprep.subr.mxu0 0.0
      %1213 = vmatpush1.msra.mxu0 0.0
      %1214 = vmatprep.subr.mxu0 0.0
      %1215 = vmatpush1.msra.mxu0 0.0
      %1216 = vmatprep.subr.mxu0 0.0
      %1217 = vmatpush1.msra.mxu0 0.0
      %1218 = vmatprep.subr.mxu0 0.0
      %1219 = vmatpush1.msra.mxu0 0.0
      %1220 = vmatprep.subr.mxu0 0.0
      %1221 = vmatpush1.msra.mxu0 0.0
      %1222 = vmatprep.subr.mxu0 0.0
      %1223 = vmatpush1.msra.mxu0 0.0
      %1224 = vmatprep.subr.mxu0 0.0
      %1225 = vmatpush1.msra.mxu0 0.0
      %1226 = vmatprep.subr.mxu0 0.0
      %1227 = vmatpush1.msra.mxu0 0.0
      %1228 = vmatprep.subr.mxu0 0.0
      %1229 = vmatpush1.msra.mxu0 0.0
      %1230 = vmatprep.subr.mxu0 0.0
      %1231 = vmatpush1.msra.mxu0 0.0
      %1232 = vmatprep.subr.mxu0 0.0
      %1233 = vmatpush1.msra.mxu0 0.0
      %1234 = vmatprep.subr.mxu0 0.0
      %1235 = vmatpush1.msra.mxu0 0.0
      %1236 = vmatprep.subr.mxu0 0.0
      %1237 = vmatpush1.msra.mxu0 0.0
      %1238 = vmatprep.subr.mxu0 0.0
      %1239 = vmatpush1.msra.mxu0 0.0
      %1240 = vmatprep.subr.mxu0 0.0
      %1241 = vmatpush1.msra.mxu0 0.0
      %1242 = vmatprep.subr.mxu0 0.0
      %1243 = vmatpush1.msra.mxu0 0.0
      %1244 = vmatprep.subr.mxu0 0.0
      %1245 = vmatpush1.msra.mxu0 0.0
      %1246 = vmatprep.subr.mxu0 0.0
      %1247 = vmatpush1.msra.mxu0 0.0
      %1248 = vmatprep.subr.mxu0 0.0
      %1249 = vmatpush1.msra.mxu0 0.0
      %1250 = vmatprep.subr.mxu0 0.0
      %1251 = vmatpush1.msra.mxu0 0.0
      %1252 = vmatprep.subr.mxu0 0.0
      %1253 = vmatpush1.msra.mxu0 0.0
      %1254 = vmatprep.subr.mxu0 0.0
      %1255 = vmatpush1.msra.mxu0 0.0
      %1256 = vmatprep.subr.mxu0 0.0
      %1257 = vmatpush1.msra.mxu0 0.0
      %1258 = vmatprep.subr.mxu0 0.0
      %1259 = vmatpush1.msra.mxu0 0.0
      %1260 = vmatprep.mubr.f32.mxu0 0.0
      %1261 = vmatmul.mubr.f32.gmra.mrb[0].mxu0 %v1194
      %v1262 = vpop.f32.mrb[0].mxu0
      %v1263 = vadd.f32 %v1192, %v1262
      %v1264 = vpop.f32.mrb[0].mxu0
      %1265 = vdwg.mxu0
      %1268 = vrot.lane.b32.xlu0 %v214, 96
      %v1269 = vpop.permute.xlu0 %1268
      %1270 = vrot.lane.b32.xlu0 %v215, 96
      %v1271 = vpop.permute.xlu0 %1270
      %v1274 = vadd.f32 %v214, %v1269
      %v1275 = vadd.f32 %v215, %v1271
      %1280 = vrot.lane.b32.xlu0 %v1184, 96
      %v1281 = vpop.permute.xlu0 %1280
      %1282 = vrot.lane.b32.xlu0 %v1185, 96
      %v1283 = vpop.permute.xlu0 %1282
      %1284 = vrot.lane.b32.xlu0 %v1186, 96
      %v1285 = vpop.permute.xlu0 %1284
      %1286 = vrot.lane.b32.xlu0 %v1187, 96
      %v1287 = vpop.permute.xlu0 %1286
      %1293 = vrot.lane.b32.xlu0 %v1192, 96
      %v1294 = vpop.permute.xlu0 %1293
      %v1297 = vsel %vm230, %v1274, 0
      %v1300 = vsel %vm230, %v1275, 0
      %1302 = vmatprep.subr.mxu0 0.0
      %1303 = vmatpush1.msra.mxu0 %v1281
      %1304 = vmatprep.subr.mxu0 0.0
      %1305 = vmatpush1.msra.mxu0 %v1283
      %1306 = vmatprep.subr.mxu0 0.0
      %1307 = vmatpush1.msra.mxu0 %v1285
      %1308 = vmatprep.subr.mxu0 0.0
      %1309 = vmatpush1.msra.mxu0 %v1287
      %1310 = vmatprep.subr.mxu0 0.0
      %1311 = vmatpush1.msra.mxu0 0.0
      %1312 = vmatprep.subr.mxu0 0.0
      %1313 = vmatpush1.msra.mxu0 0.0
      %1314 = vmatprep.subr.mxu0 0.0
      %1315 = vmatpush1.msra.mxu0 0.0
      %1316 = vmatprep.subr.mxu0 0.0
      %1317 = vmatpush1.msra.mxu0 0.0
      %1318 = vmatprep.subr.mxu0 0.0
      %1319 = vmatpush1.msra.mxu0 0.0
      %1320 = vmatprep.subr.mxu0 0.0
      %1321 = vmatpush1.msra.mxu0 0.0
      %1322 = vmatprep.subr.mxu0 0.0
      %1323 = vmatpush1.msra.mxu0 0.0
      %1324 = vmatprep.subr.mxu0 0.0
      %1325 = vmatpush1.msra.mxu0 0.0
      %1326 = vmatprep.subr.mxu0 0.0
      %1327 = vmatpush1.msra.mxu0 0.0
      %1328 = vmatprep.subr.mxu0 0.0
      %1329 = vmatpush1.msra.mxu0 0.0
      %1330 = vmatprep.subr.mxu0 0.0
      %1331 = vmatpush1.msra.mxu0 0.0
      %1332 = vmatprep.subr.mxu0 0.0
      %1333 = vmatpush1.msra.mxu0 0.0
      %1334 = vmatprep.subr.mxu0 0.0
      %1335 = vmatpush1.msra.mxu0 0.0
      %1336 = vmatprep.subr.mxu0 0.0
      %1337 = vmatpush1.msra.mxu0 0.0
      %1338 = vmatprep.subr.mxu0 0.0
      %1339 = vmatpush1.msra.mxu0 0.0
      %1340 = vmatprep.subr.mxu0 0.0
      %1341 = vmatpush1.msra.mxu0 0.0
      %1342 = vmatprep.subr.mxu0 0.0
      %1343 = vmatpush1.msra.mxu0 0.0
      %1344 = vmatprep.subr.mxu0 0.0
      %1345 = vmatpush1.msra.mxu0 0.0
      %1346 = vmatprep.subr.mxu0 0.0
      %1347 = vmatpush1.msra.mxu0 0.0
      %1348 = vmatprep.subr.mxu0 0.0
      %1349 = vmatpush1.msra.mxu0 0.0
      %1350 = vmatprep.subr.mxu0 0.0
      %1351 = vmatpush1.msra.mxu0 0.0
      %1352 = vmatprep.subr.mxu0 0.0
      %1353 = vmatpush1.msra.mxu0 0.0
      %1354 = vmatprep.subr.mxu0 0.0
      %1355 = vmatpush1.msra.mxu0 0.0
      %1356 = vmatprep.subr.mxu0 0.0
      %1357 = vmatpush1.msra.mxu0 0.0
      %1358 = vmatprep.subr.mxu0 0.0
      %1359 = vmatpush1.msra.mxu0 0.0
      %1360 = vmatprep.subr.mxu0 0.0
      %1361 = vmatpush1.msra.mxu0 0.0
      %1362 = vmatprep.subr.mxu0 0.0
      %1363 = vmatpush1.msra.mxu0 0.0
      %1364 = vmatprep.subr.mxu0 0.0
      %1365 = vmatpush1.msra.mxu0 0.0
      %1366 = vmatprep.mubr.f32.mxu0 0.0
      %1367 = vmatmul.mubr.f32.gmra.mrb[0].mxu0 %v1297
      %v1368 = vpop.f32.mrb[0].mxu0
      %v1369 = vadd.f32 %v1294, %v1368
      %v1370 = vpop.f32.mrb[0].mxu0
      %1371 = vmatprep.mubr.f32.mxu0 0.0
      %1372 = vmatmul.mubr.f32.gmra.mrb[0].mxu0 %v1300
      %v1373 = vpop.f32.mrb[0].mxu0
      %v1374 = vadd.f32 %v1294, %v1373
      %v1375 = vpop.f32.mrb[0].mxu0
      %1376 = vdwg.mxu0
      %1377 = vrot.lane.b32.xlu0 %v1184, 64
      %v1378 = vpop.permute.xlu0 %1377
      %1379 = vrot.lane.b32.xlu0 %v1185, 64
      %v1380 = vpop.permute.xlu0 %1379
      %1381 = vrot.lane.b32.xlu0 %v1186, 64
      %v1382 = vpop.permute.xlu0 %1381
      %1383 = vrot.lane.b32.xlu0 %v1187, 64
      %v1384 = vpop.permute.xlu0 %1383
      %1389 = vrot.lane.b32.xlu0 %v1192, 64
      %v1390 = vpop.permute.xlu0 %1389
      %v1392 = vsel %vm230, %v214, 0
      %v1394 = vsel %vm230, %v215, 0
      %1396 = vmatprep.subr.mxu0 0.0
      %1397 = vmatpush1.msra.mxu0 %v1378
      %1398 = vmatprep.subr.mxu0 0.0
      %1399 = vmatpush1.msra.mxu0 %v1380
      %1400 = vmatprep.subr.mxu0 0.0
      %1401 = vmatpush1.msra.mxu0 %v1382
      %1402 = vmatprep.subr.mxu0 0.0
      %1403 = vmatpush1.msra.mxu0 %v1384
      %1404 = vmatprep.subr.mxu0 0.0
      %1405 = vmatpush1.msra.mxu0 0.0
      %1406 = vmatprep.subr.mxu0 0.0
      %1407 = vmatpush1.msra.mxu0 0.0
      %1408 = vmatprep.subr.mxu0 0.0
      %1409 = vmatpush1.msra.mxu0 0.0
      %1410 = vmatprep.subr.mxu0 0.0
      %1411 = vmatpush1.msra.mxu0 0.0
      %1412 = vmatprep.subr.mxu0 0.0
      %1413 = vmatpush1.msra.mxu0 0.0
      %1414 = vmatprep.subr.mxu0 0.0
      %1415 = vmatpush1.msra.mxu0 0.0
      %1416 = vmatprep.subr.mxu0 0.0
      %1417 = vmatpush1.msra.mxu0 0.0
      %1418 = vmatprep.subr.mxu0 0.0
      %1419 = vmatpush1.msra.mxu0 0.0
      %1420 = vmatprep.subr.mxu0 0.0
      %1421 = vmatpush1.msra.mxu0 0.0
      %1422 = vmatprep.subr.mxu0 0.0
      %1423 = vmatpush1.msra.mxu0 0.0
      %1424 = vmatprep.subr.mxu0 0.0
      %1425 = vmatpush1.msra.mxu0 0.0
      %1426 = vmatprep.subr.mxu0 0.0
      %1427 = vmatpush1.msra.mxu0 0.0
      %1428 = vmatprep.subr.mxu0 0.0
      %1429 = vmatpush1.msra.mxu0 0.0
      %1430 = vmatprep.subr.mxu0 0.0
      %1431 = vmatpush1.msra.mxu0 0.0
      %1432 = vmatprep.subr.mxu0 0.0
      %1433 = vmatpush1.msra.mxu0 0.0
      %1434 = vmatprep.subr.mxu0 0.0
      %1435 = vmatpush1.msra.mxu0 0.0
      %1436 = vmatprep.subr.mxu0 0.0
      %1437 = vmatpush1.msra.mxu0 0.0
      %1438 = vmatprep.subr.mxu0 0.0
      %1439 = vmatpush1.msra.mxu0 0.0
      %1440 = vmatprep.subr.mxu0 0.0
      %1441 = vmatpush1.msra.mxu0 0.0
      %1442 = vmatprep.subr.mxu0 0.0
      %1443 = vmatpush1.msra.mxu0 0.0
      %1444 = vmatprep.subr.mxu0 0.0
      %1445 = vmatpush1.msra.mxu0 0.0
      %1446 = vmatprep.subr.mxu0 0.0
      %1447 = vmatpush1.msra.mxu0 0.0
      %1448 = vmatprep.subr.mxu0 0.0
      %1449 = vmatpush1.msra.mxu0 0.0
      %1450 = vmatprep.subr.mxu0 0.0
      %1451 = vmatpush1.msra.mxu0 0.0
      %1452 = vmatprep.subr.mxu0 0.0
      %1453 = vmatpush1.msra.mxu0 0.0
      %1454 = vmatprep.subr.mxu0 0.0
      %1455 = vmatpush1.msra.mxu0 0.0
      %1456 = vmatprep.subr.mxu0 0.0
      %1457 = vmatpush1.msra.mxu0 0.0
      %1458 = vmatprep.subr.mxu0 0.0
      %1459 = vmatpush1.msra.mxu0 0.0
      %1460 = vmatprep.mubr.f32.mxu0 0.0
      %1461 = vmatmul.mubr.f32.gmra.mrb[0].mxu0 %v1392
      %v1462 = vpop.f32.mrb[0].mxu0
      %v1463 = vadd.f32 %v1390, %v1462
      %v1464 = vpop.f32.mrb[0].mxu0
      %1465 = vmatprep.mubr.f32.mxu0 0.0
      %1466 = vmatmul.mubr.f32.gmra.mrb[0].mxu0 %v1394
      %v1467 = vpop.f32.mrb[0].mxu0
      %v1468 = vadd.f32 %v1390, %v1467
      %v1469 = vpop.f32.mrb[0].mxu0
      %1470 = vdwg.mxu0
      %v1472 = vsel %vm399, %v1263, 0
      %v1475 = vsel %vm399, %v1369, 0
      %v1478 = vsel %vm399, %v1374, 0
      %1480 = vmatprep.subr.mxu0 0.0
      %1481 = vmatpush1.xpose.msra.mxu0 %v1475
      %1482 = vmatprep.subr.mxu0 0.0
      %1483 = vmatpush1.xpose.msra.mxu0 %v1478
      %1484 = vmatprep.subr.mxu0 0.0
      %1485 = vmatpush1.xpose.msra.mxu0 0.0
      %1486 = vmatprep.subr.mxu0 0.0
      %1487 = vmatpush1.xpose.msra.mxu0 0.0
      %1488 = vmatprep.subr.mxu0 0.0
      %1489 = vmatpush1.xpose.msra.mxu0 0.0
      %1490 = vmatprep.subr.mxu0 0.0
      %1491 = vmatpush1.xpose.msra.mxu0 0.0
      %1492 = vmatprep.subr.mxu0 0.0
      %1493 = vmatpush1.xpose.msra.mxu0 0.0
      %1494 = vmatprep.subr.mxu0 0.0
      %1495 = vmatpush1.xpose.msra.mxu0 0.0
      %1496 = vmatprep.subr.mxu0 0.0
      %1497 = vmatpush1.xpose.msra.mxu0 0.0
      %1498 = vmatprep.subr.mxu0 0.0
      %1499 = vmatpush1.xpose.msra.mxu0 0.0
      %1500 = vmatprep.subr.mxu0 0.0
      %1501 = vmatpush1.xpose.msra.mxu0 0.0
      %1502 = vmatprep.subr.mxu0 0.0
      %1503 = vmatpush1.xpose.msra.mxu0 0.0
      %1504 = vmatprep.subr.mxu0 0.0
      %1505 = vmatpush1.xpose.msra.mxu0 0.0
      %1506 = vmatprep.subr.mxu0 0.0
      %1507 = vmatpush1.xpose.msra.mxu0 0.0
      %1508 = vmatprep.subr.mxu0 0.0
      %1509 = vmatpush1.xpose.msra.mxu0 0.0
      %1510 = vmatprep.subr.mxu0 0.0
      %1511 = vmatpush1.xpose.msra.mxu0 0.0
      %1512 = vmatprep.subr.mxu0 0.0
      %1513 = vmatpush1.xpose.msra.mxu0 0.0
      %1514 = vmatprep.subr.mxu0 0.0
      %1515 = vmatpush1.xpose.msra.mxu0 0.0
      %1516 = vmatprep.subr.mxu0 0.0
      %1517 = vmatpush1.xpose.msra.mxu0 0.0
      %1518 = vmatprep.subr.mxu0 0.0
      %1519 = vmatpush1.xpose.msra.mxu0 0.0
      %1520 = vmatprep.subr.mxu0 0.0
      %1521 = vmatpush1.xpose.msra.mxu0 0.0
      %1522 = vmatprep.subr.mxu0 0.0
      %1523 = vmatpush1.xpose.msra.mxu0 0.0
      %1524 = vmatprep.subr.mxu0 0.0
      %1525 = vmatpush1.xpose.msra.mxu0 0.0
      %1526 = vmatprep.subr.mxu0 0.0
      %1527 = vmatpush1.xpose.msra.mxu0 0.0
      %1528 = vmatprep.subr.mxu0 0.0
      %1529 = vmatpush1.xpose.msra.mxu0 0.0
      %1530 = vmatprep.subr.mxu0 0.0
      %1531 = vmatpush1.xpose.msra.mxu0 0.0
      %1532 = vmatprep.subr.mxu0 0.0
      %1533 = vmatpush1.xpose.msra.mxu0 0.0
      %1534 = vmatprep.subr.mxu0 0.0
      %1535 = vmatpush1.xpose.msra.mxu0 0.0
      %1536 = vmatprep.subr.mxu0 0.0
      %1537 = vmatpush1.xpose.msra.mxu0 0.0
      %1538 = vmatprep.subr.mxu0 0.0
      %1539 = vmatpush1.xpose.msra.mxu0 0.0
      %1540 = vmatprep.subr.mxu0 0.0
      %1541 = vmatpush1.xpose.msra.mxu0 0.0
      %1542 = vmatprep.subr.mxu0 0.0
      %1543 = vmatpush1.xpose.msra.mxu0 0.0
      %1544 = vmatprep.mubr.f32.mxu0 0.0
      %1545 = vmatmul.mubr.f32.gmra.mrb[0].mxu0 %v1472
      %v1546 = vpop.f32.mrb[0].mxu0
      %v1547 = vadd.f32 0.0, %v1546
      %v1548 = vpop.f32.mrb[0].mxu0
      %1549 = vdwg.mxu0
      %v1550 = vsel %vm1067, %v1547, -inf
      %1551 = vmax.xlane.f32.xlu0 %v1550
      %v1552 = vpop.xlane.xlu0 %1551
      %v1553 = vsub.f32 %v1547, %v1552
      %v1554 = vmul.f32 %v1553, 1.442695
      %v1555 = vpow.pop %v1554
      %v1556 = vsel %vm1067, %v1555, 0.0
      %1557 = vadd.xlane.f32.xlu0 %v1556
      %v1558 = vpop.xlane.xlu0 %1557
      %v1559 = vrcp.pop %v1558
      %v1560 = vmul.f32 %v1555, %v1559
      %v1562 = vsel %vm1067, %v1560, 0
      %1564 = vmatprep.subr.mxu0 0.0
      %1565 = vmatpush1.msra.mxu0 %v1463
      %1566 = vmatprep.subr.mxu0 0.0
      %1567 = vmatpush1.msra.mxu0 %v1468
      %1568 = vmatprep.subr.mxu0 0.0
      %1569 = vmatpush1.msra.mxu0 0.0
      %1570 = vmatprep.subr.mxu0 0.0
      %1571 = vmatpush1.msra.mxu0 0.0
      %1572 = vmatprep.subr.mxu0 0.0
      %1573 = vmatpush1.msra.mxu0 0.0
      %1574 = vmatprep.subr.mxu0 0.0
      %1575 = vmatpush1.msra.mxu0 0.0
      %1576 = vmatprep.subr.mxu0 0.0
      %1577 = vmatpush1.msra.mxu0 0.0
      %1578 = vmatprep.subr.mxu0 0.0
      %1579 = vmatpush1.msra.mxu0 0.0
      %1580 = vmatprep.subr.mxu0 0.0
      %1581 = vmatpush1.msra.mxu0 0.0
      %1582 = vmatprep.subr.mxu0 0.0
      %1583 = vmatpush1.msra.mxu0 0.0
      %1584 = vmatprep.subr.mxu0 0.0
      %1585 = vmatpush1.msra.mxu0 0.0
      %1586 = vmatprep.subr.mxu0 0.0
      %1587 = vmatpush1.msra.mxu0 0.0
      %1588 = vmatprep.subr.mxu0 0.0
      %1589 = vmatpush1.msra.mxu0 0.0
      %1590 = vmatprep.subr.mxu0 0.0
      %1591 = vmatpush1.msra.mxu0 0.0
      %1592 = vmatprep.subr.mxu0 0.0
      %1593 = vmatpush1.msra.mxu0 0.0
      %1594 = vmatprep.subr.mxu0 0.0
      %1595 = vmatpush1.msra.mxu0 0.0
      %1596 = vmatprep.subr.mxu0 0.0
      %1597 = vmatpush1.msra.mxu0 0.0
      %1598 = vmatprep.subr.mxu0 0.0
      %1599 = vmatpush1.msra.mxu0 0.0
      %1600 = vmatprep.subr.mxu0 0.0
      %1601 = vmatpush1.msra.mxu0 0.0
      %1602 = vmatprep.subr.mxu0 0.0
      %1603 = vmatpush1.msra.mxu0 0.0
      %1604 = vmatprep.subr.mxu0 0.0
      %1605 = vmatpush1.msra.mxu0 0.0
      %1606 = vmatprep.subr.mxu0 0.0
      %1607 = vmatpush1.msra.mxu0 0.0
      %1608 = vmatprep.subr.mxu0 0.0
      %1609 = vmatpush1.msra.mxu0 0.0
      %1610 = vmatprep.subr.mxu0 0.0
      %1611 = vmatpush1.msra.mxu0 0.0
      %1612 = vmatprep.subr.mxu0 0.0
      %1613 = vmatpush1.msra.mxu0 0.0
      %1614 = vmatprep.subr.mxu0 0.0
      %1615 = vmatpush1.msra.mxu0 0.0
      %1616 = vmatprep.subr.mxu0 0.0
      %1617 = vmatpush1.msra.mxu0 0.0
      %1618 = vmatprep.subr.mxu0 0.0
      %1619 = vmatpush1.msra.mxu0 0.0
      %1620 = vmatprep.subr.mxu0 0.0
      %1621 = vmatpush1.msra.mxu0 0.0
      %1622 = vmatprep.subr.mxu0 0.0
      %1623 = vmatpush1.msra.mxu0 0.0
      %1624 = vmatprep.subr.mxu0 0.0
      %1625 = vmatpush1.msra.mxu0 0.0
      %1626 = vmatprep.subr.mxu0 0.0
      %1627 = vmatpush1.msra.mxu0 0.0
      %1628 = vmatprep.mubr.f32.mxu0 0.0
      %1629 = vmatmul.mubr.f32.gmra.mrb[0].mxu0 %v1562
      %v1630 = vpop.f32.mrb[0].mxu0
      %v1631 = vadd.f32 0.0, %v1630
      %v1632 = vpop.f32.mrb[0].mxu0
      %1633 = vdwg.mxu0
      %1634 = vrot.lane.b32.xlu0 %v1263, 120
      %v1635 = vpop.permute.xlu0 %1634
      %1636 = vrot.lane.b32.xlu0 %v1369, 120
      %v1637 = vpop.permute.xlu0 %1636
      %1638 = vrot.lane.b32.xlu0 %v1374, 120
      %v1639 = vpop.permute.xlu0 %1638
      %v1640 = vsel %vm399, %v1635, 0
      %v1642 = vsel %vm399, %v1637, 0
      %v1644 = vsel %vm399, %v1639, 0
      %1646 = vmatprep.subr.mxu0 0.0
      %1647 = vmatpush1.xpose.msra.mxu0 %v1642
      %1648 = vmatprep.subr.mxu0 0.0
      %1649 = vmatpush1.xpose.msra.mxu0 %v1644
      %1650 = vmatprep.subr.mxu0 0.0
      %1651 = vmatpush1.xpose.msra.mxu0 0.0
      %1652 = vmatprep.subr.mxu0 0.0
      %1653 = vmatpush1.xpose.msra.mxu0 0.0
      %1654 = vmatprep.subr.mxu0 0.0
      %1655 = vmatpush1.xpose.msra.mxu0 0.0
      %1656 = vmatprep.subr.mxu0 0.0
      %1657 = vmatpush1.xpose.msra.mxu0 0.0
      %1658 = vmatprep.subr.mxu0 0.0
      %1659 = vmatpush1.xpose.msra.mxu0 0.0
      %1660 = vmatprep.subr.mxu0 0.0
      %1661 = vmatpush1.xpose.msra.mxu0 0.0
      %1662 = vmatprep.subr.mxu0 0.0
      %1663 = vmatpush1.xpose.msra.mxu0 0.0
      %1664 = vmatprep.subr.mxu0 0.0
      %1665 = vmatpush1.xpose.msra.mxu0 0.0
      %1666 = vmatprep.subr.mxu0 0.0
      %1667 = vmatpush1.xpose.msra.mxu0 0.0
      %1668 = vmatprep.subr.mxu0 0.0
      %1669 = vmatpush1.xpose.msra.mxu0 0.0
      %1670 = vmatprep.subr.mxu0 0.0
      %1671 = vmatpush1.xpose.msra.mxu0 0.0
      %1672 = vmatprep.subr.mxu0 0.0
      %1673 = vmatpush1.xpose.msra.mxu0 0.0
      %1674 = vmatprep.subr.mxu0 0.0
      %1675 = vmatpush1.xpose.msra.mxu0 0.0
      %1676 = vmatprep.subr.mxu0 0.0
      %1677 = vmatpush1.xpose.msra.mxu0 0.0
      %1678 = vmatprep.subr.mxu0 0.0
      %1679 = vmatpush1.xpose.msra.mxu0 0.0
      %1680 = vmatprep.subr.mxu0 0.0
      %1681 = vmatpush1.xpose.msra.mxu0 0.0
      %1682 = vmatprep.subr.mxu0 0.0
      %1683 = vmatpush1.xpose.msra.mxu0 0.0
      %1684 = vmatprep.subr.mxu0 0.0
      %1685 = vmatpush1.xpose.msra.mxu0 0.0
      %1686 = vmatprep.subr.mxu0 0.0
      %1687 = vmatpush1.xpose.msra.mxu0 0.0
      %1688 = vmatprep.subr.mxu0 0.0
      %1689 = vmatpush1.xpose.msra.mxu0 0.0
      %1690 = vmatprep.subr.mxu0 0.0
      %1691 = vmatpush1.xpose.msra.mxu0 0.0
      %1692 = vmatprep.subr.mxu0 0.0
      %1693 = vmatpush1.xpose.msra.mxu0 0.0
      %1694 = vmatprep.subr.mxu0 0.0
      %1695 = vmatpush1.xpose.msra.mxu0 0.0
      %1696 = vmatprep.subr.mxu0 0.0
      %1697 = vmatpush1.xpose.msra.mxu0 0.0
      %1698 = vmatprep.subr.mxu0 0.0
      %1699 = vmatpush1.xpose.msra.mxu0 0.0
      %1700 = vmatprep.subr.mxu0 0.0
      %1701 = vmatpush1.xpose.msra.mxu0 0.0
      %1702 = vmatprep.subr.mxu0 0.0
      %1703 = vmatpush1.xpose.msra.mxu0 0.0
      %1704 = vmatprep.subr.mxu0 0.0
      %1705 = vmatpush1.xpose.msra.mxu0 0.0
      %1706 = vmatprep.subr.mxu0 0.0
      %1707 = vmatpush1.xpose.msra.mxu0 0.0
      %1708 = vmatprep.subr.mxu0 0.0
      %1709 = vmatpush1.xpose.msra.mxu0 0.0
      %1710 = vmatprep.mubr.f32.mxu0 0.0
      %1711 = vmatmul.mubr.f32.gmra.mrb[0].mxu0 %v1640
      %v1712 = vpop.f32.mrb[0].mxu0
      %v1713 = vadd.f32 0.0, %v1712
      %v1714 = vpop.f32.mrb[0].mxu0
      %1715 = vdwg.mxu0
      %v1716 = vsel %vm1067, %v1713, -inf
      %1717 = vmax.xlane.f32.xlu0 %v1716
      %v1718 = vpop.xlane.xlu0 %1717
      %v1719 = vsub.f32 %v1713, %v1718
      %v1720 = vmul.f32 %v1719, 1.442695
      %v1721 = vpow.pop %v1720
      %v1722 = vsel %vm1067, %v1721, 0.0
      %1723 = vadd.xlane.f32.xlu0 %v1722
      %v1724 = vpop.xlane.xlu0 %1723
      %v1725 = vrcp.pop %v1724
      %v1726 = vmul.f32 %v1721, %v1725
      %1729 = vrot.lane.b32.xlu0 %v1463, 120
      %v1730 = vpop.permute.xlu0 %1729
      %1731 = vrot.lane.b32.xlu0 %v1468, 120
      %v1732 = vpop.permute.xlu0 %1731
      %v1736 = vsel %vm1067, %v1726, 0
      %1738 = vmatprep.subr.mxu0 0.0
      %1739 = vmatpush1.msra.mxu0 %v1730
      %1740 = vmatprep.subr.mxu0 0.0
      %1741 = vmatpush1.msra.mxu0 %v1732
      %1742 = vmatprep.subr.mxu0 0.0
      %1743 = vmatpush1.msra.mxu0 0.0
      %1744 = vmatprep.subr.mxu0 0.0
      %1745 = vmatpush1.msra.mxu0 0.0
      %1746 = vmatprep.subr.mxu0 0.0
      %1747 = vmatpush1.msra.mxu0 0.0
      %1748 = vmatprep.subr.mxu0 0.0
      %1749 = vmatpush1.msra.mxu0 0.0
      %1750 = vmatprep.subr.mxu0 0.0
      %1751 = vmatpush1.msra.mxu0 0.0
      %1752 = vmatprep.subr.mxu0 0.0
      %1753 = vmatpush1.msra.mxu0 0.0
      %1754 = vmatprep.subr.mxu0 0.0
      %1755 = vmatpush1.msra.mxu0 0.0
      %1756 = vmatprep.subr.mxu0 0.0
      %1757 = vmatpush1.msra.mxu0 0.0
      %1758 = vmatprep.subr.mxu0 0.0
      %1759 = vmatpush1.msra.mxu0 0.0
      %1760 = vmatprep.subr.mxu0 0.0
      %1761 = vmatpush1.msra.mxu0 0.0
      %1762 = vmatprep.subr.mxu0 0.0
      %1763 = vmatpush1.msra.mxu0 0.0
      %1764 = vmatprep.subr.mxu0 0.0
      %1765 = vmatpush1.msra.mxu0 0.0
      %1766 = vmatprep.subr.mxu0 0.0
      %1767 = vmatpush1.msra.mxu0 0.0
      %1768 = vmatprep.subr.mxu0 0.0
      %1769 = vmatpush1.msra.mxu0 0.0
      %1770 = vmatprep.subr.mxu0 0.0
      %1771 = vmatpush1.msra.mxu0 0.0
      %1772 = vmatprep.subr.mxu0 0.0
      %1773 = vmatpush1.msra.mxu0 0.0
      %1774 = vmatprep.subr.mxu0 0.0
      %1775 = vmatpush1.msra.mxu0 0.0
      %1776 = vmatprep.subr.mxu0 0.0
      %1777 = vmatpush1.msra.mxu0 0.0
      %1778 = vmatprep.subr.mxu0 0.0
      %1779 = vmatpush1.msra.mxu0 0.0
      %1780 = vmatprep.subr.mxu0 0.0
      %1781 = vmatpush1.msra.mxu0 0.0
      %1782 = vmatprep.subr.mxu0 0.0
      %1783 = vmatpush1.msra.mxu0 0.0
      %1784 = vmatprep.subr.mxu0 0.0
      %1785 = vmatpush1.msra.mxu0 0.0
      %1786 = vmatprep.subr.mxu0 0.0
      %1787 = vmatpush1.msra.mxu0 0.0
      %1788 = vmatprep.subr.mxu0 0.0
      %1789 = vmatpush1.msra.mxu0 0.0
      %1790 = vmatprep.subr.mxu0 0.0
      %1791 = vmatpush1.msra.mxu0 0.0
      %1792 = vmatprep.subr.mxu0 0.0
      %1793 = vmatpush1.msra.mxu0 0.0
      %1794 = vmatprep.subr.mxu0 0.0
      %1795 = vmatpush1.msra.mxu0 0.0
      %1796 = vmatprep.subr.mxu0 0.0
      %1797 = vmatpush1.msra.mxu0 0.0
      %1798 = vmatprep.subr.mxu0 0.0
      %1799 = vmatpush1.msra.mxu0 0.0
      %1800 = vmatprep.subr.mxu0 0.0
      %1801 = vmatpush1.msra.mxu0 0.0
      %1802 = vmatprep.mubr.f32.mxu0 0.0
      %1803 = vmatmul.mubr.f32.gmra.mrb[0].mxu0 %v1736
      %v1804 = vpop.f32.mrb[0].mxu0
      %v1805 = vadd.f32 0.0, %v1804
      %v1806 = vpop.f32.mrb[0].mxu0
      %1807 = vdwg.mxu0
      %1808 = vrot.lane.b32.xlu0 %v1263, 112
      %v1809 = vpop.permute.xlu0 %1808
      %1810 = vrot.lane.b32.xlu0 %v1369, 112
      %v1811 = vpop.permute.xlu0 %1810
      %1812 = vrot.lane.b32.xlu0 %v1374, 112
      %v1813 = vpop.permute.xlu0 %1812
      %v1814 = vsel %vm399, %v1809, 0
      %v1816 = vsel %vm399, %v1811, 0
      %v1818 = vsel %vm399, %v1813, 0
      %1820 = vmatprep.subr.mxu0 0.0
      %1821 = vmatpush1.xpose.msra.mxu0 %v1816
      %1822 = vmatprep.subr.mxu0 0.0
      %1823 = vmatpush1.xpose.msra.mxu0 %v1818
      %1824 = vmatprep.subr.mxu0 0.0
      %1825 = vmatpush1.xpose.msra.mxu0 0.0
      %1826 = vmatprep.subr.mxu0 0.0
      %1827 = vmatpush1.xpose.msra.mxu0 0.0
      %1828 = vmatprep.subr.mxu0 0.0
      %1829 = vmatpush1.xpose.msra.mxu0 0.0
      %1830 = vmatprep.subr.mxu0 0.0
      %1831 = vmatpush1.xpose.msra.mxu0 0.0
      %1832 = vmatprep.subr.mxu0 0.0
      %1833 = vmatpush1.xpose.msra.mxu0 0.0
      %1834 = vmatprep.subr.mxu0 0.0
      %1835 = vmatpush1.xpose.msra.mxu0 0.0
      %1836 = vmatprep.subr.mxu0 0.0
      %1837 = vmatpush1.xpose.msra.mxu0 0.0
      %1838 = vmatprep.subr.mxu0 0.0
      %1839 = vmatpush1.xpose.msra.mxu0 0.0
      %1840 = vmatprep.subr.mxu0 0.0
      %1841 = vmatpush1.xpose.msra.mxu0 0.0
      %1842 = vmatprep.subr.mxu0 0.0
      %1843 = vmatpush1.xpose.msra.mxu0 0.0
      %1844 = vmatprep.subr.mxu0 0.0
      %1845 = vmatpush1.xpose.msra.mxu0 0.0
      %1846 = vmatprep.subr.mxu0 0.0
      %1847 = vmatpush1.xpose.msra.mxu0 0.0
      %1848 = vmatprep.subr.mxu0 0.0
      %1849 = vmatpush1.xpose.msra.mxu0 0.0
      %1850 = vmatprep.subr.mxu0 0.0
      %1851 = vmatpush1.xpose.msra.mxu0 0.0
      %1852 = vmatprep.subr.mxu0 0.0
      %1853 = vmatpush1.xpose.msra.mxu0 0.0
      %1854 = vmatprep.subr.mxu0 0.0
      %1855 = vmatpush1.xpose.msra.mxu0 0.0
      %1856 = vmatprep.subr.mxu0 0.0
      %1857 = vmatpush1.xpose.msra.mxu0 0.0
      %1858 = vmatprep.subr.mxu0 0.0
      %1859 = vmatpush1.xpose.msra.mxu0 0.0
      %1860 = vmatprep.subr.mxu0 0.0
      %1861 = vmatpush1.xpose.msra.mxu0 0.0
      %1862 = vmatprep.subr.mxu0 0.0
      %1863 = vmatpush1.xpose.msra.mxu0 0.0
      %1864 = vmatprep.subr.mxu0 0.0
      %1865 = vmatpush1.xpose.msra.mxu0 0.0
      %1866 = vmatprep.subr.mxu0 0.0
      %1867 = vmatpush1.xpose.msra.mxu0 0.0
      %1868 = vmatprep.subr.mxu0 0.0
      %1869 = vmatpush1.xpose.msra.mxu0 0.0
      %1870 = vmatprep.subr.mxu0 0.0
      %1871 = vmatpush1.xpose.msra.mxu0 0.0
      %1872 = vmatprep.subr.mxu0 0.0
      %1873 = vmatpush1.xpose.msra.mxu0 0.0
      %1874 = vmatprep.subr.mxu0 0.0
      %1875 = vmatpush1.xpose.msra.mxu0 0.0
      %1876 = vmatprep.subr.mxu0 0.0
      %1877 = vmatpush1.xpose.msra.mxu0 0.0
      %1878 = vmatprep.subr.mxu0 0.0
      %1879 = vmatpush1.xpose.msra.mxu0 0.0
      %1880 = vmatprep.subr.mxu0 0.0
      %1881 = vmatpush1.xpose.msra.mxu0 0.0
      %1882 = vmatprep.subr.mxu0 0.0
      %1883 = vmatpush1.xpose.msra.mxu0 0.0
      %1884 = vmatprep.mubr.f32.mxu0 0.0
      %1885 = vmatmul.mubr.f32.gmra.mrb[0].mxu0 %v1814
      %v1886 = vpop.f32.mrb[0].mxu0
      %v1887 = vadd.f32 0.0, %v1886
      %v1888 = vpop.f32.mrb[0].mxu0
      %1889 = vdwg.mxu0
      %v1890 = vsel %vm1067, %v1887, -inf
      %1891 = vmax.xlane.f32.xlu0 %v1890
      %v1892 = vpop.xlane.xlu0 %1891
      %v1893 = vsub.f32 %v1887, %v1892
      %v1894 = vmul.f32 %v1893, 1.442695
      %v1895 = vpow.pop %v1894
      %v1896 = vsel %vm1067, %v1895, 0.0
      %1897 = vadd.xlane.f32.xlu0 %v1896
      %v1898 = vpop.xlane.xlu0 %1897
      %v1899 = vrcp.pop %v1898
      %v1900 = vmul.f32 %v1895, %v1899
      %1901 = vrot.lane.b32.xlu0 %v1463, 112
      %v1902 = vpop.permute.xlu0 %1901
      %1903 = vrot.lane.b32.xlu0 %v1468, 112
      %v1904 = vpop.permute.xlu0 %1903
      %v1908 = vsel %vm1067, %v1900, 0
      %1910 = vmatprep.subr.mxu0 0.0
      %1911 = vmatpush1.msra.mxu0 %v1902
      %1912 = vmatprep.subr.mxu0 0.0
      %1913 = vmatpush1.msra.mxu0 %v1904
      %1914 = vmatprep.subr.mxu0 0.0
      %1915 = vmatpush1.msra.mxu0 0.0
      %1916 = vmatprep.subr.mxu0 0.0
      %1917 = vmatpush1.msra.mxu0 0.0
      %1918 = vmatprep.subr.mxu0 0.0
      %1919 = vmatpush1.msra.mxu0 0.0
      %1920 = vmatprep.subr.mxu0 0.0
      %1921 = vmatpush1.msra.mxu0 0.0
      %1922 = vmatprep.subr.mxu0 0.0
      %1923 = vmatpush1.msra.mxu0 0.0
      %1924 = vmatprep.subr.mxu0 0.0
      %1925 = vmatpush1.msra.mxu0 0.0
      %1926 = vmatprep.subr.mxu0 0.0
      %1927 = vmatpush1.msra.mxu0 0.0
      %1928 = vmatprep.subr.mxu0 0.0
      %1929 = vmatpush1.msra.mxu0 0.0
      %1930 = vmatprep.subr.mxu0 0.0
      %1931 = vmatpush1.msra.mxu0 0.0
      %1932 = vmatprep.subr.mxu0 0.0
      %1933 = vmatpush1.msra.mxu0 0.0
      %1934 = vmatprep.subr.mxu0 0.0
      %1935 = vmatpush1.msra.mxu0 0.0
      %1936 = vmatprep.subr.mxu0 0.0
      %1937 = vmatpush1.msra.mxu0 0.0
      %1938 = vmatprep.subr.mxu0 0.0
      %1939 = vmatpush1.msra.mxu0 0.0
      %1940 = vmatprep.subr.mxu0 0.0
      %1941 = vmatpush1.msra.mxu0 0.0
      %1942 = vmatprep.subr.mxu0 0.0
      %1943 = vmatpush1.msra.mxu0 0.0
      %1944 = vmatprep.subr.mxu0 0.0
      %1945 = vmatpush1.msra.mxu0 0.0
      %1946 = vmatprep.subr.mxu0 0.0
      %1947 = vmatpush1.msra.mxu0 0.0
      %1948 = vmatprep.subr.mxu0 0.0
      %1949 = vmatpush1.msra.mxu0 0.0
      %1950 = vmatprep.subr.mxu0 0.0
      %1951 = vmatpush1.msra.mxu0 0.0
      %1952 = vmatprep.subr.mxu0 0.0
      %1953 = vmatpush1.msra.mxu0 0.0
      %1954 = vmatprep.subr.mxu0 0.0
      %1955 = vmatpush1.msra.mxu0 0.0
      %1956 = vmatprep.subr.mxu0 0.0
      %1957 = vmatpush1.msra.mxu0 0.0
      %1958 = vmatprep.subr.mxu0 0.0
      %1959 = vmatpush1.msra.mxu0 0.0
      %1960 = vmatprep.subr.mxu0 0.0
      %1961 = vmatpush1.msra.mxu0 0.0
      %1962 = vmatprep.subr.mxu0 0.0
      %1963 = vmatpush1.msra.mxu0 0.0
      %1964 = vmatprep.subr.mxu0 0.0
      %1965 = vmatpush1.msra.mxu0 0.0
      %1966 = vmatprep.subr.mxu0 0.0
      %1967 = vmatpush1.msra.mxu0 0.0
      %1968 = vmatprep.subr.mxu0 0.0
      %1969 = vmatpush1.msra.mxu0 0.0
      %1970 = vmatprep.subr.mxu0 0.0
      %1971 = vmatpush1.msra.mxu0 0.0
      %1972 = vmatprep.subr.mxu0 0.0
      %1973 = vmatpush1.msra.mxu0 0.0
      %1974 = vmatprep.mubr.f32.mxu0 0.0
      %1975 = vmatmul.mubr.f32.gmra.mrb[0].mxu0 %v1908
      %v1976 = vpop.f32.mrb[0].mxu0
      %v1977 = vadd.f32 0.0, %v1976
      %v1978 = vpop.f32.mrb[0].mxu0
      %1979 = vdwg.mxu0
      %1980 = vrot.lane.b32.xlu0 %v1263, 104
      %v1981 = vpop.permute.xlu0 %1980
      %1982 = vrot.lane.b32.xlu0 %v1369, 104
      %v1983 = vpop.permute.xlu0 %1982
      %1984 = vrot.lane.b32.xlu0 %v1374, 104
      %v1985 = vpop.permute.xlu0 %1984
      %v1986 = vsel %vm399, %v1981, 0
      %v1988 = vsel %vm399, %v1983, 0
      %v1990 = vsel %vm399, %v1985, 0
      %1992 = vmatprep.subr.mxu0 0.0
      %1993 = vmatpush1.xpose.msra.mxu0 %v1988
      %1994 = vmatprep.subr.mxu0 0.0
      %1995 = vmatpush1.xpose.msra.mxu0 %v1990
      %1996 = vmatprep.subr.mxu0 0.0
      %1997 = vmatpush1.xpose.msra.mxu0 0.0
      %1998 = vmatprep.subr.mxu0 0.0
      %1999 = vmatpush1.xpose.msra.mxu0 0.0
      %2000 = vmatprep.subr.mxu0 0.0
      %2001 = vmatpush1.xpose.msra.mxu0 0.0
      %2002 = vmatprep.subr.mxu0 0.0
      %2003 = vmatpush1.xpose.msra.mxu0 0.0
      %2004 = vmatprep.subr.mxu0 0.0
      %2005 = vmatpush1.xpose.msra.mxu0 0.0
      %2006 = vmatprep.subr.mxu0 0.0
      %2007 = vmatpush1.xpose.msra.mxu0 0.0
      %2008 = vmatprep.subr.mxu0 0.0
      %2009 = vmatpush1.xpose.msra.mxu0 0.0
      %2010 = vmatprep.subr.mxu0 0.0
      %2011 = vmatpush1.xpose.msra.mxu0 0.0
      %2012 = vmatprep.subr.mxu0 0.0
      %2013 = vmatpush1.xpose.msra.mxu0 0.0
      %2014 = vmatprep.subr.mxu0 0.0
      %2015 = vmatpush1.xpose.msra.mxu0 0.0
      %2016 = vmatprep.subr.mxu0 0.0
      %2017 = vmatpush1.xpose.msra.mxu0 0.0
      %2018 = vmatprep.subr.mxu0 0.0
      %2019 = vmatpush1.xpose.msra.mxu0 0.0
      %2020 = vmatprep.subr.mxu0 0.0
      %2021 = vmatpush1.xpose.msra.mxu0 0.0
      %2022 = vmatprep.subr.mxu0 0.0
      %2023 = vmatpush1.xpose.msra.mxu0 0.0
      %2024 = vmatprep.subr.mxu0 0.0
      %2025 = vmatpush1.xpose.msra.mxu0 0.0
      %2026 = vmatprep.subr.mxu0 0.0
      %2027 = vmatpush1.xpose.msra.mxu0 0.0
      %2028 = vmatprep.subr.mxu0 0.0
      %2029 = vmatpush1.xpose.msra.mxu0 0.0
      %2030 = vmatprep.subr.mxu0 0.0
      %2031 = vmatpush1.xpose.msra.mxu0 0.0
      %2032 = vmatprep.subr.mxu0 0.0
      %2033 = vmatpush1.xpose.msra.mxu0 0.0
      %2034 = vmatprep.subr.mxu0 0.0
      %2035 = vmatpush1.xpose.msra.mxu0 0.0
      %2036 = vmatprep.subr.mxu0 0.0
      %2037 = vmatpush1.xpose.msra.mxu0 0.0
      %2038 = vmatprep.subr.mxu0 0.0
      %2039 = vmatpush1.xpose.msra.mxu0 0.0
      %2040 = vmatprep.subr.mxu0 0.0
      %2041 = vmatpush1.xpose.msra.mxu0 0.0
      %2042 = vmatprep.subr.mxu0 0.0
      %2043 = vmatpush1.xpose.msra.mxu0 0.0
      %2044 = vmatprep.subr.mxu0 0.0
      %2045 = vmatpush1.xpose.msra.mxu0 0.0
      %2046 = vmatprep.subr.mxu0 0.0
      %2047 = vmatpush1.xpose.msra.mxu0 0.0
      %2048 = vmatprep.subr.mxu0 0.0
      %2049 = vmatpush1.xpose.msra.mxu0 0.0
      %2050 = vmatprep.subr.mxu0 0.0
      %2051 = vmatpush1.xpose.msra.mxu0 0.0
      %2052 = vmatprep.subr.mxu0 0.0
      %2053 = vmatpush1.xpose.msra.mxu0 0.0
      %2054 = vmatprep.subr.mxu0 0.0
      %2055 = vmatpush1.xpose.msra.mxu0 0.0
      %2056 = vmatprep.mubr.f32.mxu0 0.0
      %2057 = vmatmul.mubr.f32.gmra.mrb[0].mxu0 %v1986
      %v2058 = vpop.f32.mrb[0].mxu0
      %v2059 = vadd.f32 0.0, %v2058
      %v2060 = vpop.f32.mrb[0].mxu0
      %2061 = vdwg.mxu0
      %v2062 = vsel %vm1067, %v2059, -inf
      %2063 = vmax.xlane.f32.xlu0 %v2062
      %v2064 = vpop.xlane.xlu0 %2063
      %v2065 = vsub.f32 %v2059, %v2064
      %v2066 = vmul.f32 %v2065, 1.442695
      %v2067 = vpow.pop %v2066
      %v2068 = vsel %vm1067, %v2067, 0.0
      %2069 = vadd.xlane.f32.xlu0 %v2068
      %v2070 = vpop.xlane.xlu0 %2069
      %v2071 = vrcp.pop %v2070
      %v2072 = vmul.f32 %v2067, %v2071
      %2073 = vrot.lane.b32.xlu0 %v1463, 104
      %v2074 = vpop.permute.xlu0 %2073
      %2075 = vrot.lane.b32.xlu0 %v1468, 104
      %v2076 = vpop.permute.xlu0 %2075
      %v2080 = vsel %vm1067, %v2072, 0
      %2082 = vmatprep.subr.mxu0 0.0
      %2083 = vmatpush1.msra.mxu0 %v2074
      %2084 = vmatprep.subr.mxu0 0.0
      %2085 = vmatpush1.msra.mxu0 %v2076
      %2086 = vmatprep.subr.mxu0 0.0
      %2087 = vmatpush1.msra.mxu0 0.0
      %2088 = vmatprep.subr.mxu0 0.0
      %2089 = vmatpush1.msra.mxu0 0.0
      %2090 = vmatprep.subr.mxu0 0.0
      %2091 = vmatpush1.msra.mxu0 0.0
      %2092 = vmatprep.subr.mxu0 0.0
      %2093 = vmatpush1.msra.mxu0 0.0
      %2094 = vmatprep.subr.mxu0 0.0
      %2095 = vmatpush1.msra.mxu0 0.0
      %2096 = vmatprep.subr.mxu0 0.0
      %2097 = vmatpush1.msra.mxu0 0.0
      %2098 = vmatprep.subr.mxu0 0.0
      %2099 = vmatpush1.msra.mxu0 0.0
      %2100 = vmatprep.subr.mxu0 0.0
      %2101 = vmatpush1.msra.mxu0 0.0
      %2102 = vmatprep.subr.mxu0 0.0
      %2103 = vmatpush1.msra.mxu0 0.0
      %2104 = vmatprep.subr.mxu0 0.0
      %2105 = vmatpush1.msra.mxu0 0.0
      %2106 = vmatprep.subr.mxu0 0.0
      %2107 = vmatpush1.msra.mxu0 0.0
      %2108 = vmatprep.subr.mxu0 0.0
      %2109 = vmatpush1.msra.mxu0 0.0
      %2110 = vmatprep.subr.mxu0 0.0
      %2111 = vmatpush1.msra.mxu0 0.0
      %2112 = vmatprep.subr.mxu0 0.0
      %2113 = vmatpush1.msra.mxu0 0.0
      %2114 = vmatprep.subr.mxu0 0.0
      %2115 = vmatpush1.msra.mxu0 0.0
      %2116 = vmatprep.subr.mxu0 0.0
      %2117 = vmatpush1.msra.mxu0 0.0
      %2118 = vmatprep.subr.mxu0 0.0
      %2119 = vmatpush1.msra.mxu0 0.0
      %2120 = vmatprep.subr.mxu0 0.0
      %2121 = vmatpush1.msra.mxu0 0.0
      %2122 = vmatprep.subr.mxu0 0.0
      %2123 = vmatpush1.msra.mxu0 0.0
      %2124 = vmatprep.subr.mxu0 0.0
      %2125 = vmatpush1.msra.mxu0 0.0
      %2126 = vmatprep.subr.mxu0 0.0
      %2127 = vmatpush1.msra.mxu0 0.0
      %2128 = vmatprep.subr.mxu0 0.0
      %2129 = vmatpush1.msra.mxu0 0.0
      %2130 = vmatprep.subr.mxu0 0.0
      %2131 = vmatpush1.msra.mxu0 0.0
      %2132 = vmatprep.subr.mxu0 0.0
      %2133 = vmatpush1.msra.mxu0 0.0
      %2134 = vmatprep.subr.mxu0 0.0
      %2135 = vmatpush1.msra.mxu0 0.0
      %2136 = vmatprep.subr.mxu0 0.0
      %2137 = vmatpush1.msra.mxu0 0.0
      %2138 = vmatprep.subr.mxu0 0.0
      %2139 = vmatpush1.msra.mxu0 0.0
      %2140 = vmatprep.subr.mxu0 0.0
      %2141 = vmatpush1.msra.mxu0 0.0
      %2142 = vmatprep.subr.mxu0 0.0
      %2143 = vmatpush1.msra.mxu0 0.0
      %2144 = vmatprep.subr.mxu0 0.0
      %2145 = vmatpush1.msra.mxu0 0.0
      %2146 = vmatprep.mubr.f32.mxu0 0.0
      %2147 = vmatmul.mubr.f32.gmra.mrb[0].mxu0 %v2080
      %v2148 = vpop.f32.mrb[0].mxu0
      %v2149 = vadd.f32 0.0, %v2148
      %v2150 = vpop.f32.mrb[0].mxu0
      %2151 = vdwg.mxu0
      %2153 = vrot.lane.b32.xlu0 %v1805, 8
      %v2154 = vpop.permute.xlu0 %2153
      %2157 = vrot.lane.b32.xlu0 %v1977, 16
      %v2158 = vpop.permute.xlu0 %2157
      %2161 = vrot.lane.b32.xlu0 %v2149, 24
      %v2162 = vpop.permute.xlu0 %2161
      %v2164 = vsel %vm399, %v1631, %v2154
      %v2165 = vsel %vm1067, %v2164, %v2158
      %v2166 = vsel %vm1069, %v2165, %v2162
      %2167 = vrot.lane.b32.xlu0 %v1184, 32
      %v2168 = vpop.permute.xlu0 %2167
      %2169 = vrot.lane.b32.xlu0 %v1185, 32
      %v2170 = vpop.permute.xlu0 %2169
      %2171 = vrot.lane.b32.xlu0 %v1186, 32
      %v2172 = vpop.permute.xlu0 %2171
      %2173 = vrot.lane.b32.xlu0 %v1187, 32
      %v2174 = vpop.permute.xlu0 %2173
      %2179 = vrot.lane.b32.xlu0 %v1192, 32
      %v2180 = vpop.permute.xlu0 %2179
      %v2183 = vsel %vm230, %v2166, 0
      %2185 = vmatprep.subr.mxu0 0.0
      %2186 = vmatpush1.msra.mxu0 %v2168
      %2187 = vmatprep.subr.mxu0 0.0
      %2188 = vmatpush1.msra.mxu0 %v2170
      %2189 = vmatprep.subr.mxu0 0.0
      %2190 = vmatpush1.msra.mxu0 %v2172
      %2191 = vmatprep.subr.mxu0 0.0
      %2192 = vmatpush1.msra.mxu0 %v2174
      %2193 = vmatprep.subr.mxu0 0.0
      %2194 = vmatpush1.msra.mxu0 0.0
      %2195 = vmatprep.subr.mxu0 0.0
      %2196 = vmatpush1.msra.mxu0 0.0
      %2197 = vmatprep.subr.mxu0 0.0
      %2198 = vmatpush1.msra.mxu0 0.0
      %2199 = vmatprep.subr.mxu0 0.0
      %2200 = vmatpush1.msra.mxu0 0.0
      %2201 = vmatprep.subr.mxu0 0.0
      %2202 = vmatpush1.msra.mxu0 0.0
      %2203 = vmatprep.subr.mxu0 0.0
      %2204 = vmatpush1.msra.mxu0 0.0
      %2205 = vmatprep.subr.mxu0 0.0
      %2206 = vmatpush1.msra.mxu0 0.0
      %2207 = vmatprep.subr.mxu0 0.0
      %2208 = vmatpush1.msra.mxu0 0.0
      %2209 = vmatprep.subr.mxu0 0.0
      %2210 = vmatpush1.msra.mxu0 0.0
      %2211 = vmatprep.subr.mxu0 0.0
      %2212 = vmatpush1.msra.mxu0 0.0
      %2213 = vmatprep.subr.mxu0 0.0
      %2214 = vmatpush1.msra.mxu0 0.0
      %2215 = vmatprep.subr.mxu0 0.0
      %2216 = vmatpush1.msra.mxu0 0.0
      %2217 = vmatprep.subr.mxu0 0.0
      %2218 = vmatpush1.msra.mxu0 0.0
      %2219 = vmatprep.subr.mxu0 0.0
      %2220 = vmatpush1.msra.mxu0 0.0
      %2221 = vmatprep.subr.mxu0 0.0
      %2222 = vmatpush1.msra.mxu0 0.0
      %2223 = vmatprep.subr.mxu0 0.0
      %2224 = vmatpush1.msra.mxu0 0.0
      %2225 = vmatprep.subr.mxu0 0.0
      %2226 = vmatpush1.msra.mxu0 0.0
      %2227 = vmatprep.subr.mxu0 0.0
      %2228 = vmatpush1.msra.mxu0 0.0
      %2229 = vmatprep.subr.mxu0 0.0
      %2230 = vmatpush1.msra.mxu0 0.0
      %2231 = vmatprep.subr.mxu0 0.0
      %2232 = vmatpush1.msra.mxu0 0.0
      %2233 = vmatprep.subr.mxu0 0.0
      %2234 = vmatpush1.msra.mxu0 0.0
      %2235 = vmatprep.subr.mxu0 0.0
      %2236 = vmatpush1.msra.mxu0 0.0
      %2237 = vmatprep.subr.mxu0 0.0
      %2238 = vmatpush1.msra.mxu0 0.0
      %2239 = vmatprep.subr.mxu0 0.0
      %2240 = vmatpush1.msra.mxu0 0.0
      %2241 = vmatprep.subr.mxu0 0.0
      %2242 = vmatpush1.msra.mxu0 0.0
      %2243 = vmatprep.subr.mxu0 0.0
      %2244 = vmatpush1.msra.mxu0 0.0
      %2245 = vmatprep.subr.mxu0 0.0
      %2246 = vmatpush1.msra.mxu0 0.0
      %2247 = vmatprep.subr.mxu0 0.0
      %2248 = vmatpush1.msra.mxu0 0.0
      %2249 = vmatprep.mubr.f32.mxu0 0.0
      %2250 = vmatmul.mubr.f32.gmra.mrb[0].mxu0 %v2183
      %v2251 = vpop.f32.mrb[0].mxu0
      %v2252 = vadd.f32 %v2180, %v2251
      %v2253 = vpop.f32.mrb[0].mxu0
      %2254 = vdwg.mxu0
      %v2255 = vadd.f32 %v1183, %v2252
      %v2256 = vsel %vm230, %v2255, 0.0
      %2257 = vadd.xlane.f32.xlu0 %v2256
      %v2258 = vpop.xlane.xlu0 %2257
      %v2259 = vmul.f32 %v2258, %v1163
      %v2260 = vsub.f32 %v2255, %v2259
      %v2261 = vmul.f32 %v2260, %v2260
      %v2262 = vsel %vm230, %v2261, 0.0
      %2263 = vadd.xlane.f32.xlu0 %v2262
      %v2264 = vpop.xlane.xlu0 %2263
      %v2265 = vmul.f32 %v2264, %v1163
      %v2266 = vadd.f32 %v2265, 1e-05
      %v2267 = vrsqrt.pop %v2266
      %v2268 = vmul.f32 %v2260, %v2267
      %2269 = vrot.lane.b32.xlu0 %v1177, 64
      %v2270 = vpop.permute.xlu0 %2269
      %v2272 = vmul.f32 %v2268, %v2270
      %2273 = vrot.lane.b32.xlu0 %v1177, 32
      %v2274 = vpop.permute.xlu0 %2273
      %v2276 = vadd.f32 %v2272, %v2274
      %v2277 = vld [vmem:[%s2 + $0x40] sm:$0xff]
      %v2278 = vld [vmem:[%s2 + $0x48] sm:$0xff]
      %v2279 = vld [vmem:[%s2 + $0x50] sm:$0xff]
      %v2280 = vld [vmem:[%s2 + $0x58] sm:$0xff]
      %v2281 = vld [vmem:[%s2 + $0x60] sm:$0xff]
      %v2282 = vld [vmem:[%s2 + $0x68] sm:$0xff]
      %v2283 = vld [vmem:[%s2 + $0x70] sm:$0xff]
      %v2284 = vld [vmem:[%s2 + $0x78] sm:$0xff]
      %v2285 = vlaneseq
      %v2286 = vshrl.u32 %v2285, 7
      %v2287 = vsub.s32 3, %v2286
      %v2288 = vrot.slane %v216, %v2287
      %v2290 = vsel %vm230, %v2276, 0
      %2292 = vmatprep.subr.mxu0 0.0
      %2293 = vmatpush1.msra.mxu0 %v2277
      %2294 = vmatprep.subr.mxu0 0.0
      %2295 = vmatpush1.msra.mxu0 %v2278
      %2296 = vmatprep.subr.mxu0 0.0
      %2297 = vmatpush1.msra.mxu0 %v2279
      %2298 = vmatprep.subr.mxu0 0.0
      %2299 = vmatpush1.msra.mxu0 %v2280
      %2300 = vmatprep.subr.mxu0 0.0
      %2301 = vmatpush1.msra.mxu0 0.0
      %2302 = vmatprep.subr.mxu0 0.0
      %2303 = vmatpush1.msra.mxu0 0.0
      %2304 = vmatprep.subr.mxu0 0.0
      %2305 = vmatpush1.msra.mxu0 0.0
      %2306 = vmatprep.subr.mxu0 0.0
      %2307 = vmatpush1.msra.mxu0 0.0
      %2308 = vmatprep.subr.mxu0 0.0
      %2309 = vmatpush1.msra.mxu0 0.0
      %2310 = vmatprep.subr.mxu0 0.0
      %2311 = vmatpush1.msra.mxu0 0.0
      %2312 = vmatprep.subr.mxu0 0.0
      %2313 = vmatpush1.msra.mxu0 0.0
      %2314 = vmatprep.subr.mxu0 0.0
      %2315 = vmatpush1.msra.mxu0 0.0
      %2316 = vmatprep.subr.mxu0 0.0
      %2317 = vmatpush1.msra.mxu0 0.0
      %2318 = vmatprep.subr.mxu0 0.0
      %2319 = vmatpush1.msra.mxu0 0.0
      %2320 = vmatprep.subr.mxu0 0.0
      %2321 = vmatpush1.msra.mxu0 0.0
      %2322 = vmatprep.subr.mxu0 0.0
      %2323 = vmatpush1.msra.mxu0 0.0
      %2324 = vmatprep.subr.mxu0 0.0
      %2325 = vmatpush1.msra.mxu0 0.0
      %2326 = vmatprep.subr.mxu0 0.0
      %2327 = vmatpush1.msra.mxu0 0.0
      %2328 = vmatprep.subr.mxu0 0.0
      %2329 = vmatpush1.msra.mxu0 0.0
      %2330 = vmatprep.subr.mxu0 0.0
      %2331 = vmatpush1.msra.mxu0 0.0
      %2332 = vmatprep.subr.mxu0 0.0
      %2333 = vmatpush1.msra.mxu0 0.0
      %2334 = vmatprep.subr.mxu0 0.0
      %2335 = vmatpush1.msra.mxu0 0.0
      %2336 = vmatprep.subr.mxu0 0.0
      %2337 = vmatpush1.msra.mxu0 0.0
      %2338 = vmatprep.subr.mxu0 0.0
      %2339 = vmatpush1.msra.mxu0 0.0
      %2340 = vmatprep.subr.mxu0 0.0
      %2341 = vmatpush1.msra.mxu0 0.0
      %2342 = vmatprep.subr.mxu0 0.0
      %2343 = vmatpush1.msra.mxu0 0.0
      %2344 = vmatprep.subr.mxu0 0.0
      %2345 = vmatpush1.msra.mxu0 0.0
      %2346 = vmatprep.subr.mxu0 0.0
      %2347 = vmatpush1.msra.mxu0 0.0
      %2348 = vmatprep.subr.mxu0 0.0
      %2349 = vmatpush1.msra.mxu0 0.0
      %2350 = vmatprep.subr.mxu0 0.0
      %2351 = vmatpush1.msra.mxu0 0.0
      %2352 = vmatprep.subr.mxu0 0.0
      %2353 = vmatpush1.msra.mxu0 0.0
      %2354 = vmatprep.subr.mxu0 0.0
      %2355 = vmatpush1.msra.mxu0 0.0
      %2356 = vmatprep.mubr.f32.mxu0 0.0
      %2357 = vmatmul.mubr.f32.gmra.mrb[0].mxu0 %v2290
      %v2358 = vpop.f32.mrb[0].mxu0
      %v2359 = vadd.f32 %v2288, %v2358
      %v2360 = vpop.f32.mrb[0].mxu0
      %2361 = vdwg.mxu0
      %v2362 = vmax.f32 %v2359, 0.0
      %2371 = vrot.lane.b32.xlu0 %v2277, 64
      %v2372 = vpop.permute.xlu0 %2371
      %2373 = vrot.lane.b32.xlu0 %v2278, 64
      %v2374 = vpop.permute.xlu0 %2373
      %2375 = vrot.lane.b32.xlu0 %v2279, 64
      %v2376 = vpop.permute.xlu0 %2375
      %2377 = vrot.lane.b32.xlu0 %v2280, 64
      %v2378 = vpop.permute.xlu0 %2377
      %2379 = vrot.lane.b32.xlu0 %v2281, 64
      %v2380 = vpop.permute.xlu0 %2379
      %2381 = vrot.lane.b32.xlu0 %v2282, 64
      %v2382 = vpop.permute.xlu0 %2381
      %2383 = vrot.lane.b32.xlu0 %v2283, 64
      %v2384 = vpop.permute.xlu0 %2383
      %2385 = vrot.lane.b32.xlu0 %v2284, 64
      %v2386 = vpop.permute.xlu0 %2385
      %2396 = vrot.lane.b32.xlu0 %v2288, 64
      %v2397 = vpop.permute.xlu0 %2396
      %vm2399 = vcmask 523264
      %v2401 = vsel %vm2399, %v2362, 0
      %2403 = vmatprep.subr.mxu0 0.0
      %2404 = vmatpush1.msra.mxu0 %v2372
      %2405 = vmatprep.subr.mxu0 0.0
      %2406 = vmatpush1.msra.mxu0 %v2374
      %2407 = vmatprep.subr.mxu0 0.0
      %2408 = vmatpush1.msra.mxu0 %v2376
      %2409 = vmatprep.subr.mxu0 0.0
      %2410 = vmatpush1.msra.mxu0 %v2378
      %2411 = vmatprep.subr.mxu0 0.0
      %2412 = vmatpush1.msra.mxu0 %v2380
      %2413 = vmatprep.subr.mxu0 0.0
      %2414 = vmatpush1.msra.mxu0 %v2382
      %2415 = vmatprep.subr.mxu0 0.0
      %2416 = vmatpush1.msra.mxu0 %v2384
      %2417 = vmatprep.subr.mxu0 0.0
      %2418 = vmatpush1.msra.mxu0 %v2386
      %2419 = vmatprep.subr.mxu0 0.0
      %2420 = vmatpush1.msra.mxu0 0.0
      %2421 = vmatprep.subr.mxu0 0.0
      %2422 = vmatpush1.msra.mxu0 0.0
      %2423 = vmatprep.subr.mxu0 0.0
      %2424 = vmatpush1.msra.mxu0 0.0
      %2425 = vmatprep.subr.mxu0 0.0
      %2426 = vmatpush1.msra.mxu0 0.0
      %2427 = vmatprep.subr.mxu0 0.0
      %2428 = vmatpush1.msra.mxu0 0.0
      %2429 = vmatprep.subr.mxu0 0.0
      %2430 = vmatpush1.msra.mxu0 0.0
      %2431 = vmatprep.subr.mxu0 0.0
      %2432 = vmatpush1.msra.mxu0 0.0
      %2433 = vmatprep.subr.mxu0 0.0
      %2434 = vmatpush1.msra.mxu0 0.0
      %2435 = vmatprep.subr.mxu0 0.0
      %2436 = vmatpush1.msra.mxu0 0.0
      %2437 = vmatprep.subr.mxu0 0.0
      %2438 = vmatpush1.msra.mxu0 0.0
      %2439 = vmatprep.subr.mxu0 0.0
      %2440 = vmatpush1.msra.mxu0 0.0
      %2441 = vmatprep.subr.mxu0 0.0
      %2442 = vmatpush1.msra.mxu0 0.0
      %2443 = vmatprep.subr.mxu0 0.0
      %2444 = vmatpush1.msra.mxu0 0.0
      %2445 = vmatprep.subr.mxu0 0.0
      %2446 = vmatpush1.msra.mxu0 0.0
      %2447 = vmatprep.subr.mxu0 0.0
      %2448 = vmatpush1.msra.mxu0 0.0
      %2449 = vmatprep.subr.mxu0 0.0
      %2450 = vmatpush1.msra.mxu0 0.0
      %2451 = vmatprep.subr.mxu0 0.0
      %2452 = vmatpush1.msra.mxu0 0.0
      %2453 = vmatprep.subr.mxu0 0.0
      %2454 = vmatpush1.msra.mxu0 0.0
      %2455 = vmatprep.subr.mxu0 0.0
      %2456 = vmatpush1.msra.mxu0 0.0
      %2457 = vmatprep.subr.mxu0 0.0
      %2458 = vmatpush1.msra.mxu0 0.0
      %2459 = vmatprep.subr.mxu0 0.0
      %2460 = vmatpush1.msra.mxu0 0.0
      %2461 = vmatprep.subr.mxu0 0.0
      %2462 = vmatpush1.msra.mxu0 0.0
      %2463 = vmatprep.subr.mxu0 0.0
      %2464 = vmatpush1.msra.mxu0 0.0
      %2465 = vmatprep.subr.mxu0 0.0
      %2466 = vmatpush1.msra.mxu0 0.0
      %2467 = vmatprep.mubr.f32.mxu0 0.0
      %2468 = vmatmul.mubr.f32.gmra.mrb[0].mxu0 %v2401
      %v2469 = vpop.f32.mrb[0].mxu0
      %v2470 = vadd.f32 %v2397, %v2469
      %v2471 = vpop.f32.mrb[0].mxu0
      %2472 = vdwg.mxu0
      %v2473 = vadd.f32 %v2276, %v2470
      %v2474 = vsel %vm230, %v2473, 0.0
      %2475 = vadd.xlane.f32.xlu0 %v2474
      %v2476 = vpop.xlane.xlu0 %2475
      %v2477 = vmul.f32 %v2476, %v1163
      %v2478 = vsub.f32 %v2473, %v2477
      %v2479 = vmul.f32 %v2478, %v2478
      %v2480 = vsel %vm230, %v2479, 0.0
      %2481 = vadd.xlane.f32.xlu0 %v2480
      %v2482 = vpop.xlane.xlu0 %2481
      %v2483 = vmul.f32 %v2482, %v1163
      %v2484 = vadd.f32 %v2483, 1e-05
      %v2485 = vrsqrt.pop %v2484
      %v2486 = vmul.f32 %v2478, %v2485
      %v2487 = vlaneseq
      %v2488 = vshrl.u32 %v2487, 7
      %v2489 = vsub.s32 4, %v2488
      %v2490 = vrot.slane %v216, %v2489
      %v2491 = vmul.f32 %v2486, %v2490
      %2493 = vrot.lane.b32.xlu0 %v2490, 96
      %v2494 = vpop.permute.xlu0 %2493
      %v2496 = vadd.f32 %v2491, %v2494
      %2497 = vst.msk [vmem:[%s212] sm:$0xff] %vm230, %v2496
      %p2498 = scmp.lt.s32.totalorder %s15, 1
      %s2499 = scalar_select %p2498, %s15, 1
      %s2500 = smul.addr %s2499, 8
      %s2501 = scalar_lea.vmem %s4, %s2500
      // Predicated region
      $region37: #{transformer_decoder_layer.1} parent=35 // pred_check
        %p2502 = pneg %p127
      $region38: #{transformer_decoder_layer.1} parent=35 // pred_check_branch
        %2504 = sbr.rel (%p2502) target = $region40
      $region39: #{transformer_decoder_layer.1} parent=35 // pred_region
        _
      $region40: #{transformer_decoder_layer.1} parent=35 // pred_fallthru
        _
    $region36: #{transformer_decoder_layer.1} parent=5 // pred_fallthru
      _
    %p2505 = scmp.le.s32.totalorder 2, %s10
    // Predicated region
    $region41: #{transformer_decoder_layer.1} parent=5 // pred_check
      %p2506 = pneg %p2505
    $region42: #{transformer_decoder_layer.1} parent=5 // pred_check_branch
      %2508 = sbr.rel (%p2506) target = $region44
    $region43: #{transformer_decoder_layer.1} parent=5 // pred_region
      %s2509 = ssub.s32 %s10, 2
      // Predicated region
      $region45: #{transformer_decoder_layer.1} parent=43 // pred_check
        %p2510 = pneg %p133
      $region46: #{transformer_decoder_layer.1} parent=43 // pred_check_branch
        %2512 = sbr.rel (%p2510) target = $region48
      $region47: #{transformer_decoder_layer.1} parent=43 // pred_region
        %p2513 = scmp.lt.s32.totalorder %s16, 1
        %s2514 = scalar_select %p2513, %s16, 1
        %s2515 = smul.addr %s2514, 8
        %s2516 = scalar_lea.vmem %s4, %s2515
      $region48: #{transformer_decoder_layer.1} parent=43 // pred_fallthru
        _
    $region44: #{transformer_decoder_layer.1} parent=5 // pred_fallthru
      _
  $region6: #{transformer_decoder_layer.1} parent=0 // loop_footer
    %s14 = sadd.s32 1, %s10
  $region7: #{transformer_decoder_layer.1} parent=0 // loop_footer_branch
    %9 = sbr.rel target = $region3
  $region8: #{transformer_decoder_layer.1} parent=0 // loop_exit
    _

</llo_original>
